<compile_context>
chip_gen: v6e
topology: v6e:2x2x1
jax: 0.10.0
libtpu: 0.0.40
codegen_flags: <defaults>
</compile_context>

<pallas_src>
import functools

import jax
import jax.numpy as jnp
from jax.experimental import pallas as pl
from jax.experimental.pallas import tpu as pltpu


# ----------------------------------------------------------------------------
# Fused kernel: cross-attention (+res+LN) -> position-wise FFN (+res+LN)
# grid = (stream, batch); heads are handled in-body with merged projections.
# ----------------------------------------------------------------------------
def _encoder_layer_kernel(xq_ref, xkv_ref,
                          wq_ref, bq_ref, wkv_ref, bkv_ref,
                          wo_ref, bo_ref, g1_ref, be1_ref,
                          w1_ref, fb1_ref, w2_ref, fb2_ref,
                          g2_ref, be2_ref,
                          out_ref, *, n_head, d_k, d_v):
    x_q = xq_ref[0, 0]       # [L, D] bf16  (query stream)
    x_kv = xkv_ref[0, 0]     # [L, D] bf16  (other stream)

    # ---- merged projections (N >= 256 keeps the 256-wide MXU full) --------
    # 1/sqrt(d_k) is pre-folded into wq / bq at init time.
    q_all = jnp.dot(x_q, wq_ref[0],
                    preferred_element_type=jnp.float32) + bq_ref[0]     # [L, H*d_k]
    kv_all = jnp.dot(x_kv, wkv_ref[0],
                     preferred_element_type=jnp.float32) + bkv_ref[0]   # [L, H*(d_k+d_v)]

    hk = n_head * d_k
    head_outs = []
    # Static unroll over heads; every slice start is a multiple of 128 lanes.
    for h in range(n_head):
        qh = q_all[:, h * d_k:(h + 1) * d_k].astype(jnp.bfloat16)
        kh = kv_all[:, h * d_k:(h + 1) * d_k].astype(jnp.bfloat16)
        vh = kv_all[:, hk + h * d_v: hk + (h + 1) * d_v].astype(jnp.bfloat16)

        s = jax.lax.dot_general(                           # q @ k^T  [L, L] f32
            qh, kh, (((1,), (1,)), ((), ())),
            preferred_element_type=jnp.float32)
        s = s - jnp.max(s, axis=-1, keepdims=True)
        p = jnp.exp(s)                                     # f32 exp (small L)
        p = p * pl.reciprocal(jnp.sum(p, axis=-1, keepdims=True), approx=True)
        oh = jnp.dot(p.astype(jnp.bfloat16), vh,
                     preferred_element_type=jnp.float32)   # [L, d_v] f32
        head_outs.append(oh.astype(jnp.bfloat16))

    # ---- single output projection over the concatenated heads (K = H*d_v) --
    o_cat = jnp.concatenate(head_outs, axis=-1)            # [L, H*d_v] bf16
    attn = jnp.dot(o_cat, wo_ref[0], preferred_element_type=jnp.float32)
    attn = attn + bo_ref[0] + x_q.astype(jnp.float32)      # residual

    mu = jnp.mean(attn, axis=-1, keepdims=True)
    xc = attn - mu
    var = jnp.mean(xc * xc, axis=-1, keepdims=True)
    y = xc * jax.lax.rsqrt(var + 1e-5) * g1_ref[0] + be1_ref[0]

    # ---- fused position-wise FFN (+ residual + LayerNorm) ------------------
    hid = jnp.dot(y.astype(jnp.bfloat16), w1_ref[0],
                  preferred_element_type=jnp.float32) + fb1_ref[0]
    hid = jnp.maximum(hid, 0.0)                            # ReLU (f32)
    z = jnp.dot(hid.astype(jnp.bfloat16), w2_ref[0],
                preferred_element_type=jnp.float32) + fb2_ref[0]
    z = z + y                                              # FFN residual
    mu2 = jnp.mean(z, axis=-1, keepdims=True)
    zc = z - mu2
    var2 = jnp.mean(zc * zc, axis=-1, keepdims=True)
    z = zc * jax.lax.rsqrt(var2 + 1e-5) * g2_ref[0] + be2_ref[0]

    out_ref[0, 0] = z.astype(out_ref.dtype)


# ----------------------------------------------------------------------------
# Wrapper
# ----------------------------------------------------------------------------
def encoder_layer(doc_input, rel_input, slf_attn_mask, params,
                  *, n_head, d_k, d_v):
    """Forward pass of EncoderLayer (inference; dropout = identity)."""
    if slf_attn_mask is not None:
        # TODO(synk): padding/attention masks are not wired into the fused
        # kernel; only the module-default None path is implemented.
        raise NotImplementedError("slf_attn_mask must be None")

    B, L, D = doc_input.shape
    d_inner = params["w1"].shape[-1]
    hk = n_head * d_k
    hkv = n_head * (d_k + d_v)
    hv = n_head * d_v

    # Stack ONCE; the same array serves as query input (index s) and K/V
    # input (index 1-s).  stream 0: doc queries over rel K/V; stream 1: rev.
    x = jnp.stack([doc_input, rel_input]).astype(jnp.bfloat16)     # [2,B,L,D]

    q_spec = pl.BlockSpec((1, 1, L, D), lambda s, b: (s, b, 0, 0))
    kv_spec = pl.BlockSpec((1, 1, L, D), lambda s, b: (1 - s, b, 0, 0))

    def per_stream(last2):
        return pl.BlockSpec((1,) + last2, lambda s, b: (s, 0, 0))

    in_specs = [
        q_spec, kv_spec,
        per_stream((D, hk)), per_stream((1, hk)),          # wq, bq (scaled)
        per_stream((D, hkv)), per_stream((1, hkv)),        # wkv, bkv
        per_stream((hv, D)), per_stream((1, D)),           # wo, bo
        per_stream((1, D)), per_stream((1, D)),            # ln1 gamma, beta
        per_stream((D, d_inner)), per_stream((1, d_inner)),  # w1, b1
        per_stream((d_inner, D)), per_stream((1, D)),        # w2, b2
        per_stream((1, D)), per_stream((1, D)),            # ln2 gamma, beta
    ]

    kernel = functools.partial(_encoder_layer_kernel,
                               n_head=n_head, d_k=d_k, d_v=d_v)
    out = pl.pallas_call(
        kernel,
        out_shape=jax.ShapeDtypeStruct((2, B, L, D), jnp.bfloat16),
        grid=(2, B),
        in_specs=in_specs,
        out_specs=pl.BlockSpec((1, 1, L, D), lambda s, b: (s, b, 0, 0)),
        compiler_params=pltpu.CompilerParams(
            dimension_semantics=("parallel", "parallel")),
    )(x, x,
      params["wq"], params["bq"], params["wkv"], params["bkv"],
      params["wo"], params["bo"],
      params["ln1_g"], params["ln1_b"],
      params["w1"], params["b1"], params["w2"], params["b2"],
      params["ln2_g"], params["ln2_b"])
    return out[0], out[1]


# ----------------------------------------------------------------------------
# Deterministic parameter init (weights bf16 for MXU, biases/LN in f32).
# Leading axis 0/1 = doc/rel stream.  Per-head projections are stored merged:
#   wq  : [2, D, H*d_k]            (1/sqrt(d_k) folded in)
#   wkv : [2, D, H*d_k + H*d_v]    ([all K heads | all V heads])
#   wo  : [2, H*d_v, D]
# Conv1d(d_model, d_inner, 1) == per-position Linear, stored as [2, D, d_inner].
# ----------------------------------------------------------------------------
def init_encoder_layer_params(key, d_model, d_inner, n_head, d_k, d_v):
    ks = jax.random.split(key, 5)
    f32 = jnp.float32
    scale = 1.0 / (float(d_k) ** 0.5)

    def normal(k, shape):
        return jax.random.normal(k, shape, f32) * 0.05

    return {
        "wq": (normal(ks[0], (2, d_model, n_head * d_k)) * scale
               ).astype(jnp.bfloat16),
        "bq": jnp.zeros((2, 1, n_head * d_k), f32),         # scale pre-folded
        "wkv": normal(ks[1], (2, d_model, n_head * (d_k + d_v))
                      ).astype(jnp.bfloat16),
        "bkv": jnp.zeros((2, 1, n_head * (d_k + d_v)), f32),
        "wo": normal(ks[2], (2, n_head * d_v, d_model)).astype(jnp.bfloat16),
        "bo": jnp.zeros((2, 1, d_model), f32),
        "ln1_g": jnp.ones((2, 1, d_model), f32),
        "ln1_b": jnp.zeros((2, 1, d_model), f32),
        "w1": normal(ks[3], (2, d_model, d_inner)).astype(jnp.bfloat16),
        "b1": jnp.zeros((2, 1, d_inner), f32),
        "w2": normal(ks[4], (2, d_inner, d_model)).astype(jnp.bfloat16),
        "b2": jnp.zeros((2, 1, d_model), f32),
        "ln2_g": jnp.ones((2, 1, d_model), f32),
        "ln2_b": jnp.zeros((2, 1, d_model), f32),
    }


if __name__ == "__main__":
    # Small but lane-dense shapes (all feature dims multiples of 128,
    # sequence a multiple of 8), consistent with the module's hyperparams.
    B, L = 2, 128
    d_model, d_inner, n_head, d_k, d_v = 128, 256, 2, 128, 128

    key = jax.random.PRNGKey(0)
    k_doc, k_rel, k_par = jax.random.split(key, 3)
    doc_input = jax.random.normal(k_doc, (B, L, d_model), jnp.float32)
    rel_input = jax.random.normal(k_rel, (B, L, d_model), jnp.float32)
    params = init_encoder_layer_params(k_par, d_model, d_inner,
                                       n_head, d_k, d_v)

    # slf_attn_mask=None (module default) -> no mask tensor is built or DMA'd.
    doc_out, rel_out = encoder_layer(doc_input, rel_input, None, params,
                                     n_head=n_head, d_k=d_k, d_v=d_v)
    jax.block_until_ready((doc_out, rel_out))
    assert doc_out.shape == (B, L, d_model)
    assert rel_out.shape == (B, L, d_model)
    assert bool(jnp.all(jnp.isfinite(doc_out.astype(jnp.float32))))
    assert bool(jnp.all(jnp.isfinite(rel_out.astype(jnp.float32))))
    print("KERNEL_OK")
</pallas_src>

<mosaic_0001>
module attributes {stable_mosaic.version = 11 : i64} {
  func.func @_encoder_layer_kernel(%arg0: i32, %arg1: i32, %arg2: memref<1x1x128x128xbf16, #tpu.memory_space<vmem>>, %arg3: memref<1x1x128x128xbf16, #tpu.memory_space<vmem>>, %arg4: memref<1x128x256xbf16, #tpu.memory_space<vmem>>, %arg5: memref<1x1x256xf32, #tpu.memory_space<vmem>>, %arg6: memref<1x128x512xbf16, #tpu.memory_space<vmem>>, %arg7: memref<1x1x512xf32, #tpu.memory_space<vmem>>, %arg8: memref<1x256x128xbf16, #tpu.memory_space<vmem>>, %arg9: memref<1x1x128xf32, #tpu.memory_space<vmem>>, %arg10: memref<1x1x128xf32, #tpu.memory_space<vmem>>, %arg11: memref<1x1x128xf32, #tpu.memory_space<vmem>>, %arg12: memref<1x128x256xbf16, #tpu.memory_space<vmem>>, %arg13: memref<1x1x256xf32, #tpu.memory_space<vmem>>, %arg14: memref<1x256x128xbf16, #tpu.memory_space<vmem>>, %arg15: memref<1x1x128xf32, #tpu.memory_space<vmem>>, %arg16: memref<1x1x128xf32, #tpu.memory_space<vmem>>, %arg17: memref<1x1x128xf32, #tpu.memory_space<vmem>>, %arg18: memref<1x1x128x128xbf16, #tpu.memory_space<vmem>>) attributes {dimension_semantics = [#tpu.dimension_semantics<parallel>, #tpu.dimension_semantics<parallel>], iteration_bounds = array<i64: 2, 2>, scalar_prefetch = 0 : i64, scratch_operands = 0 : i64, tpu.core_type = #tpu.core_type<tc>, window_params = [{transform_indices = @transform_0, window_bounds = array<i64: 1, 1, 128, 128>}, {transform_indices = @transform_1, window_bounds = array<i64: 1, 1, 128, 128>}, {transform_indices = @transform_2, window_bounds = array<i64: 1, 128, 256>}, {transform_indices = @transform_3, window_bounds = array<i64: 1, 1, 256>}, {transform_indices = @transform_4, window_bounds = array<i64: 1, 128, 512>}, {transform_indices = @transform_5, window_bounds = array<i64: 1, 1, 512>}, {transform_indices = @transform_6, window_bounds = array<i64: 1, 256, 128>}, {transform_indices = @transform_7, window_bounds = array<i64: 1, 1, 128>}, {transform_indices = @transform_8, window_bounds = array<i64: 1, 1, 128>}, {transform_indices = @transform_9, window_bounds = array<i64: 1, 1, 128>}, {transform_indices = @transform_10, window_bounds = array<i64: 1, 128, 256>}, {transform_indices = @transform_11, window_bounds = array<i64: 1, 1, 256>}, {transform_indices = @transform_12, window_bounds = array<i64: 1, 256, 128>}, {transform_indices = @transform_13, window_bounds = array<i64: 1, 1, 128>}, {transform_indices = @transform_14, window_bounds = array<i64: 1, 1, 128>}, {transform_indices = @transform_15, window_bounds = array<i64: 1, 1, 128>}, {transform_indices = @transform_16, window_bounds = array<i64: 1, 1, 128, 128>}]} {
    %c0 = arith.constant 0 : index
    %c0_0 = arith.constant 0 : index
    %c0_1 = arith.constant 0 : index
    %c0_2 = arith.constant 0 : index
    %0 = vector.load %arg2[%c0, %c0_0, %c0_1, %c0_2] : memref<1x1x128x128xbf16, #tpu.memory_space<vmem>>, vector<1x1x128x128xbf16>
    %1 = vector.shape_cast %0 : vector<1x1x128x128xbf16> to vector<128x128xbf16>
    %c0_3 = arith.constant 0 : index
    %c0_4 = arith.constant 0 : index
    %c0_5 = arith.constant 0 : index
    %c0_6 = arith.constant 0 : index
    %2 = vector.load %arg3[%c0_3, %c0_4, %c0_5, %c0_6] : memref<1x1x128x128xbf16, #tpu.memory_space<vmem>>, vector<1x1x128x128xbf16>
    %3 = vector.shape_cast %2 : vector<1x1x128x128xbf16> to vector<128x128xbf16>
    %c0_7 = arith.constant 0 : index
    %c0_8 = arith.constant 0 : index
    %c0_9 = arith.constant 0 : index
    %4 = vector.load %arg4[%c0_7, %c0_8, %c0_9] : memref<1x128x256xbf16, #tpu.memory_space<vmem>>, vector<1x128x256xbf16>
    %5 = vector.shape_cast %4 : vector<1x128x256xbf16> to vector<128x256xbf16>
    %cst = arith.constant dense<0.000000e+00> : vector<128x256xf32>
    %6 = tpu.matmul %1, %5, %cst {dimension_numbers = #tpu.dot_dimension_numbers<[1], [0], [0], [1], [0, 0, 1, 1], [], []>} : vector<128x128xbf16>, vector<128x256xbf16>, vector<128x256xf32> -> vector<128x256xf32>
    %c0_10 = arith.constant 0 : index
    %c0_11 = arith.constant 0 : index
    %c0_12 = arith.constant 0 : index
    %7 = vector.load %arg5[%c0_10, %c0_11, %c0_12] : memref<1x1x256xf32, #tpu.memory_space<vmem>>, vector<1x1x256xf32>
    %8 = vector.shape_cast %7 : vector<1x1x256xf32> to vector<1x256xf32>
    %9 = vector.broadcast %8 : vector<1x256xf32> to vector<128x256xf32>
    %10 = arith.addf %6, %9 : vector<128x256xf32>
    %c0_13 = arith.constant 0 : index
    %c0_14 = arith.constant 0 : index
    %c0_15 = arith.constant 0 : index
    %11 = vector.load %arg6[%c0_13, %c0_14, %c0_15] : memref<1x128x512xbf16, #tpu.memory_space<vmem>>, vector<1x128x512xbf16>
    %12 = vector.shape_cast %11 : vector<1x128x512xbf16> to vector<128x512xbf16>
    %cst_16 = arith.constant dense<0.000000e+00> : vector<128x512xf32>
    %13 = tpu.matmul %3, %12, %cst_16 {dimension_numbers = #tpu.dot_dimension_numbers<[1], [0], [0], [1], [0, 0, 1, 1], [], []>} : vector<128x128xbf16>, vector<128x512xbf16>, vector<128x512xf32> -> vector<128x512xf32>
    %c0_17 = arith.constant 0 : index
    %c0_18 = arith.constant 0 : index
    %c0_19 = arith.constant 0 : index
    %14 = vector.load %arg7[%c0_17, %c0_18, %c0_19] : memref<1x1x512xf32, #tpu.memory_space<vmem>>, vector<1x1x512xf32>
    %15 = vector.shape_cast %14 : vector<1x1x512xf32> to vector<1x512xf32>
    %16 = vector.broadcast %15 : vector<1x512xf32> to vector<128x512xf32>
    %17 = arith.addf %13, %16 : vector<128x512xf32>
    %18 = vector.extract_strided_slice %10 {offsets = [0, 0], sizes = [128, 128], strides = [1, 1]} : vector<128x256xf32> to vector<128x128xf32>
    %19 = arith.truncf %18 : vector<128x128xf32> to vector<128x128xbf16>
    %20 = vector.extract_strided_slice %17 {offsets = [0, 0], sizes = [128, 128], strides = [1, 1]} : vector<128x512xf32> to vector<128x128xf32>
    %21 = arith.truncf %20 : vector<128x128xf32> to vector<128x128xbf16>
    %22 = vector.extract_strided_slice %17 {offsets = [0, 256], sizes = [128, 128], strides = [1, 1]} : vector<128x512xf32> to vector<128x128xf32>
    %23 = arith.truncf %22 : vector<128x128xf32> to vector<128x128xbf16>
    %cst_20 = arith.constant dense<0.000000e+00> : vector<128x128xf32>
    %24 = tpu.matmul %19, %21, %cst_20 {dimension_numbers = #tpu.dot_dimension_numbers<[1], [1], [0], [0], [0, 0, 1, 0], [], []>} : vector<128x128xbf16>, vector<128x128xbf16>, vector<128x128xf32> -> vector<128x128xf32>
    %cst_21 = arith.constant dense<0xFF800000> : vector<128xf32>
    %25 = vector.multi_reduction <maximumf>, %24, %cst_21 [1] : vector<128x128xf32> to vector<128xf32>
    %26 = vector.shape_cast %25 : vector<128xf32> to vector<128x1xf32>
    %27 = vector.broadcast %26 : vector<128x1xf32> to vector<128x128xf32>
    %28 = arith.subf %24, %27 : vector<128x128xf32>
    %29 = math.exp %28 : vector<128x128xf32>
    %cst_22 = arith.constant dense<0.000000e+00> : vector<128xf32>
    %30 = vector.multi_reduction <add>, %29, %cst_22 [1] : vector<128x128xf32> to vector<128xf32>
    %31 = vector.shape_cast %30 : vector<128xf32> to vector<128x1xf32>
    %32 = tpu.reciprocal %31 {approx = true} : vector<128x1xf32> -> vector<128x1xf32>
    %33 = vector.broadcast %32 : vector<128x1xf32> to vector<128x128xf32>
    %34 = arith.mulf %29, %33 : vector<128x128xf32>
    %35 = arith.truncf %34 : vector<128x128xf32> to vector<128x128xbf16>
    %cst_23 = arith.constant dense<0.000000e+00> : vector<128x128xf32>
    %36 = tpu.matmul %35, %23, %cst_23 {dimension_numbers = #tpu.dot_dimension_numbers<[1], [0], [0], [1], [0, 0, 1, 1], [], []>} : vector<128x128xbf16>, vector<128x128xbf16>, vector<128x128xf32> -> vector<128x128xf32>
    %37 = arith.truncf %36 : vector<128x128xf32> to vector<128x128xbf16>
    %38 = vector.extract_strided_slice %10 {offsets = [0, 128], sizes = [128, 128], strides = [1, 1]} : vector<128x256xf32> to vector<128x128xf32>
    %39 = arith.truncf %38 : vector<128x128xf32> to vector<128x128xbf16>
    %40 = vector.extract_strided_slice %17 {offsets = [0, 128], sizes = [128, 128], strides = [1, 1]} : vector<128x512xf32> to vector<128x128xf32>
    %41 = arith.truncf %40 : vector<128x128xf32> to vector<128x128xbf16>
    %42 = vector.extract_strided_slice %17 {offsets = [0, 384], sizes = [128, 128], strides = [1, 1]} : vector<128x512xf32> to vector<128x128xf32>
    %43 = arith.truncf %42 : vector<128x128xf32> to vector<128x128xbf16>
    %cst_24 = arith.constant dense<0.000000e+00> : vector<128x128xf32>
    %44 = tpu.matmul %39, %41, %cst_24 {dimension_numbers = #tpu.dot_dimension_numbers<[1], [1], [0], [0], [0, 0, 1, 0], [], []>} : vector<128x128xbf16>, vector<128x128xbf16>, vector<128x128xf32> -> vector<128x128xf32>
    %cst_25 = arith.constant dense<0xFF800000> : vector<128xf32>
    %45 = vector.multi_reduction <maximumf>, %44, %cst_25 [1] : vector<128x128xf32> to vector<128xf32>
    %46 = vector.shape_cast %45 : vector<128xf32> to vector<128x1xf32>
    %47 = vector.broadcast %46 : vector<128x1xf32> to vector<128x128xf32>
    %48 = arith.subf %44, %47 : vector<128x128xf32>
    %49 = math.exp %48 : vector<128x128xf32>
    %cst_26 = arith.constant dense<0.000000e+00> : vector<128xf32>
    %50 = vector.multi_reduction <add>, %49, %cst_26 [1] : vector<128x128xf32> to vector<128xf32>
    %51 = vector.shape_cast %50 : vector<128xf32> to vector<128x1xf32>
    %52 = tpu.reciprocal %51 {approx = true} : vector<128x1xf32> -> vector<128x1xf32>
    %53 = vector.broadcast %52 : vector<128x1xf32> to vector<128x128xf32>
    %54 = arith.mulf %49, %53 : vector<128x128xf32>
    %55 = arith.truncf %54 : vector<128x128xf32> to vector<128x128xbf16>
    %cst_27 = arith.constant dense<0.000000e+00> : vector<128x128xf32>
    %56 = tpu.matmul %55, %43, %cst_27 {dimension_numbers = #tpu.dot_dimension_numbers<[1], [0], [0], [1], [0, 0, 1, 1], [], []>} : vector<128x128xbf16>, vector<128x128xbf16>, vector<128x128xf32> -> vector<128x128xf32>
    %57 = arith.truncf %56 : vector<128x128xf32> to vector<128x128xbf16>
    %58 = tpu.concatenate %37, %57 in 1 : vector<128x128xbf16>, vector<128x128xbf16> -> vector<128x256xbf16>
    %c0_28 = arith.constant 0 : index
    %c0_29 = arith.constant 0 : index
    %c0_30 = arith.constant 0 : index
    %59 = vector.load %arg8[%c0_28, %c0_29, %c0_30] : memref<1x256x128xbf16, #tpu.memory_space<vmem>>, vector<1x256x128xbf16>
    %60 = vector.shape_cast %59 : vector<1x256x128xbf16> to vector<256x128xbf16>
    %cst_31 = arith.constant dense<0.000000e+00> : vector<128x128xf32>
    %61 = tpu.matmul %58, %60, %cst_31 {dimension_numbers = #tpu.dot_dimension_numbers<[1], [0], [0], [1], [0, 0, 1, 1], [], []>} : vector<128x256xbf16>, vector<256x128xbf16>, vector<128x128xf32> -> vector<128x128xf32>
    %c0_32 = arith.constant 0 : index
    %c0_33 = arith.constant 0 : index
    %c0_34 = arith.constant 0 : index
    %62 = vector.load %arg9[%c0_32, %c0_33, %c0_34] : memref<1x1x128xf32, #tpu.memory_space<vmem>>, vector<1x1x128xf32>
    %63 = vector.shape_cast %62 : vector<1x1x128xf32> to vector<1x128xf32>
    %64 = vector.broadcast %63 : vector<1x128xf32> to vector<128x128xf32>
    %65 = arith.addf %61, %64 : vector<128x128xf32>
    %66 = arith.extf %1 : vector<128x128xbf16> to vector<128x128xf32>
    %67 = arith.addf %65, %66 : vector<128x128xf32>
    %cst_35 = arith.constant dense<0.000000e+00> : vector<128xf32>
    %68 = vector.multi_reduction <add>, %67, %cst_35 [1] : vector<128x128xf32> to vector<128xf32>
    %69 = vector.shape_cast %68 : vector<128xf32> to vector<128x1xf32>
    %cst_36 = arith.constant 1.280000e+02 : f32
    %70 = vector.broadcast %cst_36 : f32 to vector<128x1xf32>
    %71 = arith.divf %69, %70 : vector<128x1xf32>
    %72 = vector.broadcast %71 : vector<128x1xf32> to vector<128x128xf32>
    %73 = arith.subf %67, %72 : vector<128x128xf32>
    %74 = arith.mulf %73, %73 : vector<128x128xf32>
    %cst_37 = arith.constant dense<0.000000e+00> : vector<128xf32>
    %75 = vector.multi_reduction <add>, %74, %cst_37 [1] : vector<128x128xf32> to vector<128xf32>
    %76 = vector.shape_cast %75 : vector<128xf32> to vector<128x1xf32>
    %cst_38 = arith.constant 1.280000e+02 : f32
    %77 = vector.broadcast %cst_38 : f32 to vector<128x1xf32>
    %78 = arith.divf %76, %77 : vector<128x1xf32>
    %cst_39 = arith.constant 9.99999974E-6 : f32
    %79 = vector.broadcast %cst_39 : f32 to vector<128x1xf32>
    %80 = arith.addf %78, %79 : vector<128x1xf32>
    %81 = math.rsqrt %80 : vector<128x1xf32>
    %82 = vector.broadcast %81 : vector<128x1xf32> to vector<128x128xf32>
    %83 = arith.mulf %73, %82 : vector<128x128xf32>
    %c0_40 = arith.constant 0 : index
    %c0_41 = arith.constant 0 : index
    %c0_42 = arith.constant 0 : index
    %84 = vector.load %arg10[%c0_40, %c0_41, %c0_42] : memref<1x1x128xf32, #tpu.memory_space<vmem>>, vector<1x1x128xf32>
    %85 = vector.shape_cast %84 : vector<1x1x128xf32> to vector<1x128xf32>
    %86 = vector.broadcast %85 : vector<1x128xf32> to vector<128x128xf32>
    %87 = arith.mulf %83, %86 : vector<128x128xf32>
    %c0_43 = arith.constant 0 : index
    %c0_44 = arith.constant 0 : index
    %c0_45 = arith.constant 0 : index
    %88 = vector.load %arg11[%c0_43, %c0_44, %c0_45] : memref<1x1x128xf32, #tpu.memory_space<vmem>>, vector<1x1x128xf32>
    %89 = vector.shape_cast %88 : vector<1x1x128xf32> to vector<1x128xf32>
    %90 = vector.broadcast %89 : vector<1x128xf32> to vector<128x128xf32>
    %91 = arith.addf %87, %90 : vector<128x128xf32>
    %92 = arith.truncf %91 : vector<128x128xf32> to vector<128x128xbf16>
    %c0_46 = arith.constant 0 : index
    %c0_47 = arith.constant 0 : index
    %c0_48 = arith.constant 0 : index
    %93 = vector.load %arg12[%c0_46, %c0_47, %c0_48] : memref<1x128x256xbf16, #tpu.memory_space<vmem>>, vector<1x128x256xbf16>
    %94 = vector.shape_cast %93 : vector<1x128x256xbf16> to vector<128x256xbf16>
    %cst_49 = arith.constant dense<0.000000e+00> : vector<128x256xf32>
    %95 = tpu.matmul %92, %94, %cst_49 {dimension_numbers = #tpu.dot_dimension_numbers<[1], [0], [0], [1], [0, 0, 1, 1], [], []>} : vector<128x128xbf16>, vector<128x256xbf16>, vector<128x256xf32> -> vector<128x256xf32>
    %c0_50 = arith.constant 0 : index
    %c0_51 = arith.constant 0 : index
    %c0_52 = arith.constant 0 : index
    %96 = vector.load %arg13[%c0_50, %c0_51, %c0_52] : memref<1x1x256xf32, #tpu.memory_space<vmem>>, vector<1x1x256xf32>
    %97 = vector.shape_cast %96 : vector<1x1x256xf32> to vector<1x256xf32>
    %98 = vector.broadcast %97 : vector<1x256xf32> to vector<128x256xf32>
    %99 = arith.addf %95, %98 : vector<128x256xf32>
    %cst_53 = arith.constant 0.000000e+00 : f32
    %100 = vector.broadcast %cst_53 : f32 to vector<128x256xf32>
    %101 = arith.maximumf %99, %100 : vector<128x256xf32>
    %102 = arith.truncf %101 : vector<128x256xf32> to vector<128x256xbf16>
    %c0_54 = arith.constant 0 : index
    %c0_55 = arith.constant 0 : index
    %c0_56 = arith.constant 0 : index
    %103 = vector.load %arg14[%c0_54, %c0_55, %c0_56] : memref<1x256x128xbf16, #tpu.memory_space<vmem>>, vector<1x256x128xbf16>
    %104 = vector.shape_cast %103 : vector<1x256x128xbf16> to vector<256x128xbf16>
    %cst_57 = arith.constant dense<0.000000e+00> : vector<128x128xf32>
    %105 = tpu.matmul %102, %104, %cst_57 {dimension_numbers = #tpu.dot_dimension_numbers<[1], [0], [0], [1], [0, 0, 1, 1], [], []>} : vector<128x256xbf16>, vector<256x128xbf16>, vector<128x128xf32> -> vector<128x128xf32>
    %c0_58 = arith.constant 0 : index
    %c0_59 = arith.constant 0 : index
    %c0_60 = arith.constant 0 : index
    %106 = vector.load %arg15[%c0_58, %c0_59, %c0_60] : memref<1x1x128xf32, #tpu.memory_space<vmem>>, vector<1x1x128xf32>
    %107 = vector.shape_cast %106 : vector<1x1x128xf32> to vector<1x128xf32>
    %108 = vector.broadcast %107 : vector<1x128xf32> to vector<128x128xf32>
    %109 = arith.addf %105, %108 : vector<128x128xf32>
    %110 = arith.addf %109, %91 : vector<128x128xf32>
    %cst_61 = arith.constant dense<0.000000e+00> : vector<128xf32>
    %111 = vector.multi_reduction <add>, %110, %cst_61 [1] : vector<128x128xf32> to vector<128xf32>
    %112 = vector.shape_cast %111 : vector<128xf32> to vector<128x1xf32>
    %cst_62 = arith.constant 1.280000e+02 : f32
    %113 = vector.broadcast %cst_62 : f32 to vector<128x1xf32>
    %114 = arith.divf %112, %113 : vector<128x1xf32>
    %115 = vector.broadcast %114 : vector<128x1xf32> to vector<128x128xf32>
    %116 = arith.subf %110, %115 : vector<128x128xf32>
    %117 = arith.mulf %116, %116 : vector<128x128xf32>
    %cst_63 = arith.constant dense<0.000000e+00> : vector<128xf32>
    %118 = vector.multi_reduction <add>, %117, %cst_63 [1] : vector<128x128xf32> to vector<128xf32>
    %119 = vector.shape_cast %118 : vector<128xf32> to vector<128x1xf32>
    %cst_64 = arith.constant 1.280000e+02 : f32
    %120 = vector.broadcast %cst_64 : f32 to vector<128x1xf32>
    %121 = arith.divf %119, %120 : vector<128x1xf32>
    %cst_65 = arith.constant 9.99999974E-6 : f32
    %122 = vector.broadcast %cst_65 : f32 to vector<128x1xf32>
    %123 = arith.addf %121, %122 : vector<128x1xf32>
    %124 = math.rsqrt %123 : vector<128x1xf32>
    %125 = vector.broadcast %124 : vector<128x1xf32> to vector<128x128xf32>
    %126 = arith.mulf %116, %125 : vector<128x128xf32>
    %c0_66 = arith.constant 0 : index
    %c0_67 = arith.constant 0 : index
    %c0_68 = arith.constant 0 : index
    %127 = vector.load %arg16[%c0_66, %c0_67, %c0_68] : memref<1x1x128xf32, #tpu.memory_space<vmem>>, vector<1x1x128xf32>
    %128 = vector.shape_cast %127 : vector<1x1x128xf32> to vector<1x128xf32>
    %129 = vector.broadcast %128 : vector<1x128xf32> to vector<128x128xf32>
    %130 = arith.mulf %126, %129 : vector<128x128xf32>
    %c0_69 = arith.constant 0 : index
    %c0_70 = arith.constant 0 : index
    %c0_71 = arith.constant 0 : index
    %131 = vector.load %arg17[%c0_69, %c0_70, %c0_71] : memref<1x1x128xf32, #tpu.memory_space<vmem>>, vector<1x1x128xf32>
    %132 = vector.shape_cast %131 : vector<1x1x128xf32> to vector<1x128xf32>
    %133 = vector.broadcast %132 : vector<1x128xf32> to vector<128x128xf32>
    %134 = arith.addf %130, %133 : vector<128x128xf32>
    %135 = arith.truncf %134 : vector<128x128xf32> to vector<128x128xbf16>
    %c0_72 = arith.constant 0 : index
    %c0_73 = arith.constant 0 : index
    %c0_74 = arith.constant 0 : index
    %c0_75 = arith.constant 0 : index
    %136 = vector.load %arg18[%c0_72, %c0_73, %c0_74, %c0_75] : memref<1x1x128x128xbf16, #tpu.memory_space<vmem>>, vector<1x1x128x128xbf16>
    %137 = vector.shape_cast %136 : vector<1x1x128x128xbf16> to vector<128x128xbf16>
    %138 = vector.shape_cast %135 : vector<128x128xbf16> to vector<1x1x128x128xbf16>
    tpu.vector_store %arg18[%c0_72, %c0_73, %c0_74, %c0_75], %138 {strides = array<i32>} : memref<1x1x128x128xbf16, #tpu.memory_space<vmem>>, vector<1x1x128x128xbf16>,
    return
  }
  func.func @transform_0(%arg0: i32, %arg1: i32) -> (i32, i32, i32, i32) {
    %c0_i32 = arith.constant 0 : i32
    %c0_i32_0 = arith.constant 0 : i32
    %c0_i32_1 = arith.constant 0 : i32
    return %arg0, %arg1, %c0_i32, %c0_i32_0 : i32, i32, i32, i32
  }
  func.func @transform_1(%arg0: i32, %arg1: i32) -> (i32, i32, i32, i32) {
    %c1_i32 = arith.constant 1 : i32
    %0 = arith.subi %c1_i32, %arg0 : i32
    %c0_i32 = arith.constant 0 : i32
    %c0_i32_0 = arith.constant 0 : i32
    %c0_i32_1 = arith.constant 0 : i32
    return %0, %arg1, %c0_i32, %c0_i32_0 : i32, i32, i32, i32
  }
  func.func @transform_2(%arg0: i32, %arg1: i32) -> (i32, i32, i32) {
    %c0_i32 = arith.constant 0 : i32
    %c0_i32_0 = arith.constant 0 : i32
    %c0_i32_1 = arith.constant 0 : i32
    return %arg0, %c0_i32, %c0_i32_0 : i32, i32, i32
  }
  func.func @transform_3(%arg0: i32, %arg1: i32) -> (i32, i32, i32) {
    %c0_i32 = arith.constant 0 : i32
    %c0_i32_0 = arith.constant 0 : i32
    %c0_i32_1 = arith.constant 0 : i32
    return %arg0, %c0_i32, %c0_i32_0 : i32, i32, i32
  }
  func.func @transform_4(%arg0: i32, %arg1: i32) -> (i32, i32, i32) {
    %c0_i32 = arith.constant 0 : i32
    %c0_i32_0 = arith.constant 0 : i32
    %c0_i32_1 = arith.constant 0 : i32
    return %arg0, %c0_i32, %c0_i32_0 : i32, i32, i32
  }
  func.func @transform_5(%arg0: i32, %arg1: i32) -> (i32, i32, i32) {
    %c0_i32 = arith.constant 0 : i32
    %c0_i32_0 = arith.constant 0 : i32
    %c0_i32_1 = arith.constant 0 : i32
    return %arg0, %c0_i32, %c0_i32_0 : i32, i32, i32
  }
  func.func @transform_6(%arg0: i32, %arg1: i32) -> (i32, i32, i32) {
    %c0_i32 = arith.constant 0 : i32
    %c0_i32_0 = arith.constant 0 : i32
    %c0_i32_1 = arith.constant 0 : i32
    return %arg0, %c0_i32, %c0_i32_0 : i32, i32, i32
  }
  func.func @transform_7(%arg0: i32, %arg1: i32) -> (i32, i32, i32) {
    %c0_i32 = arith.constant 0 : i32
    %c0_i32_0 = arith.constant 0 : i32
    %c0_i32_1 = arith.constant 0 : i32
    return %arg0, %c0_i32, %c0_i32_0 : i32, i32, i32
  }
  func.func @transform_8(%arg0: i32, %arg1: i32) -> (i32, i32, i32) {
    %c0_i32 = arith.constant 0 : i32
    %c0_i32_0 = arith.constant 0 : i32
    %c0_i32_1 = arith.constant 0 : i32
    return %arg0, %c0_i32, %c0_i32_0 : i32, i32, i32
  }
  func.func @transform_9(%arg0: i32, %arg1: i32) -> (i32, i32, i32) {
    %c0_i32 = arith.constant 0 : i32
    %c0_i32_0 = arith.constant 0 : i32
    %c0_i32_1 = arith.constant 0 : i32
    return %arg0, %c0_i32, %c0_i32_0 : i32, i32, i32
  }
  func.func @transform_10(%arg0: i32, %arg1: i32) -> (i32, i32, i32) {
    %c0_i32 = arith.constant 0 : i32
    %c0_i32_0 = arith.constant 0 : i32
    %c0_i32_1 = arith.constant 0 : i32
    return %arg0, %c0_i32, %c0_i32_0 : i32, i32, i32
  }
  func.func @transform_11(%arg0: i32, %arg1: i32) -> (i32, i32, i32) {
    %c0_i32 = arith.constant 0 : i32
    %c0_i32_0 = arith.constant 0 : i32
    %c0_i32_1 = arith.constant 0 : i32
    return %arg0, %c0_i32, %c0_i32_0 : i32, i32, i32
  }
  func.func @transform_12(%arg0: i32, %arg1: i32) -> (i32, i32, i32) {
    %c0_i32 = arith.constant 0 : i32
    %c0_i32_0 = arith.constant 0 : i32
    %c0_i32_1 = arith.constant 0 : i32
    return %arg0, %c0_i32, %c0_i32_0 : i32, i32, i32
  }
  func.func @transform_13(%arg0: i32, %arg1: i32) -> (i32, i32, i32) {
    %c0_i32 = arith.constant 0 : i32
    %c0_i32_0 = arith.constant 0 : i32
    %c0_i32_1 = arith.constant 0 : i32
    return %arg0, %c0_i32, %c0_i32_0 : i32, i32, i32
  }
  func.func @transform_14(%arg0: i32, %arg1: i32) -> (i32, i32, i32) {
    %c0_i32 = arith.constant 0 : i32
    %c0_i32_0 = arith.constant 0 : i32
    %c0_i32_1 = arith.constant 0 : i32
    return %arg0, %c0_i32, %c0_i32_0 : i32, i32, i32
  }
  func.func @transform_15(%arg0: i32, %arg1: i32) -> (i32, i32, i32) {
    %c0_i32 = arith.constant 0 : i32
    %c0_i32_0 = arith.constant 0 : i32
    %c0_i32_1 = arith.constant 0 : i32
    return %arg0, %c0_i32, %c0_i32_0 : i32, i32, i32
  }
  func.func @transform_16(%arg0: i32, %arg1: i32) -> (i32, i32, i32, i32) {
    %c0_i32 = arith.constant 0 : i32
    %c0_i32_0 = arith.constant 0 : i32
    %c0_i32_1 = arith.constant 0 : i32
    return %arg0, %arg1, %c0_i32, %c0_i32_0 : i32, i32, i32, i32
  }
}

</mosaic_0001>

<llo_original>
// kernel: tpu_custom_call.1
$region0: #{tpu_custom_call.1}
  #allocation0 [shape = 'u32[]', space=smem, size = 0x4, offset = 0x4, fixed_abs, tag = 'smem constant byte address 0x4 - core index']
  #allocation1 [shape = 'u32[144,128]{1,0:T(1,128)}', space=vmem, size = 0x12000, scoped, tag = 'internal scratch']
  %s0 = inlined_call_operand.hbm [shape: bf16[2,2,128,128], index: 0, kind: input, shape index: {}]
  %s1 = inlined_call_operand.hbm [shape: bf16[2,2,128,128], index: 1, kind: input, shape index: {}]
  %s2 = inlined_call_operand.hbm [shape: bf16[2,128,256], index: 2, kind: input, shape index: {}]
  %s3 = inlined_call_operand.hbm [shape: f32[2,1,256], index: 3, kind: input, shape index: {}]
  %s4 = inlined_call_operand.hbm [shape: bf16[2,128,512], index: 4, kind: input, shape index: {}]
  %s5 = inlined_call_operand.vmem [shape: f32[2,1,512], index: 5, kind: input, shape index: {}]
  %s6 = inlined_call_operand.hbm [shape: bf16[2,256,128], index: 6, kind: input, shape index: {}]
  %s7 = inlined_call_operand.hbm [shape: f32[2,1,128], index: 7, kind: input, shape index: {}]
  %s8 = inlined_call_operand.vmem [shape: f32[2,1,128], index: 8, kind: input, shape index: {}]
  %s9 = inlined_call_operand.vmem [shape: f32[2,1,128], index: 9, kind: input, shape index: {}]
  %s10 = inlined_call_operand.hbm [shape: bf16[2,128,256], index: 10, kind: input, shape index: {}]
  %s11 = inlined_call_operand.vmem [shape: f32[2,1,256], index: 11, kind: input, shape index: {}]
  %s12 = inlined_call_operand.hbm [shape: bf16[2,256,128], index: 12, kind: input, shape index: {}]
  %s13 = inlined_call_operand.vmem [shape: f32[2,1,128], index: 13, kind: input, shape index: {}]
  %s14 = inlined_call_operand.vmem [shape: f32[2,1,128], index: 14, kind: input, shape index: {}]
  %s15 = inlined_call_operand.vmem [shape: f32[2,1,128], index: 15, kind: input, shape index: {}]
  %s16 = inlined_call_operand.hbm [shape: bf16[2,2,128,128], index: 16, kind: output, shape index: {}]
  %s17 = sld [smem:[#allocation0]]
  $region133: #{tpu_custom_call.1} parent=0
    _
  %s19 = ssub.s32 1, %s17
  %s20 = scalar_select 0, %s19, %s17
  $region1: #{tpu_custom_call.1} parent=0
    #allocation2 [shape = 'u8[65536]{0}', space=vmem, size = 0x10000, scoped, tag = 'input window, operand 0']
    #allocation3 [shape = 's32[2]{0}', space=sflag, size = 0x8, scoped, tag = 'scoped memory for tpu_custom_call.1']
    #allocation4 [shape = 's32[2]{0}', space=sflag, size = 0x8, scoped, tag = 'scoped memory for tpu_custom_call.1']
    #allocation5 [shape = 'u8[65536]{0}', space=vmem, size = 0x10000, scoped, tag = 'input window, operand 1']
    #allocation6 [shape = 's32[2]{0}', space=sflag, size = 0x8, scoped, tag = 'scoped memory for tpu_custom_call.1']
    #allocation7 [shape = 'u8[131072]{0}', space=vmem, size = 0x20000, scoped, tag = 'input window, operand 2']
    #allocation8 [shape = 'u8[2048]{0}', space=vmem, size = 0x800, scoped, tag = 'input window, operand 3']
    #allocation9 [shape = 's32[2]{0}', space=sflag, size = 0x8, scoped, tag = 'scoped memory for tpu_custom_call.1']
    #allocation10 [shape = 'u8[262144]{0}', space=vmem, size = 0x40000, scoped, tag = 'input window, operand 4']
    #allocation11 [shape = 'u8[131072]{0}', space=vmem, size = 0x20000, scoped, tag = 'input window, operand 6']
    #allocation12 [shape = 's32[2]{0}', space=sflag, size = 0x8, scoped, tag = 'scoped memory for tpu_custom_call.1']
    #allocation13 [shape = 'u8[1024]{0}', space=vmem, size = 0x400, scoped, tag = 'input window, operand 7']
    #allocation14 [shape = 'u8[131072]{0}', space=vmem, size = 0x20000, scoped, tag = 'input window, operand 10']
    #allocation15 [shape = 's32[2]{0}', space=sflag, size = 0x8, scoped, tag = 'scoped memory for tpu_custom_call.1']
    #allocation16 [shape = 'u8[131072]{0}', space=vmem, size = 0x20000, scoped, tag = 'input window, operand 12']
    #allocation17 [shape = 'u8[65536]{0}', space=vmem, size = 0x10000, scoped, tag = 'output window, operand 0']
    %21 = vsyncpa [#allocation3], 0
    %s22 = scalar_lea.sflag [#allocation3], 1
    %23 = vsyncpa %s22, 0
    %24 = vsyncpa [#allocation6], 0
    %s25 = scalar_lea.sflag [#allocation6], 1
    %26 = vsyncpa %s25, 0
    %27 = vsyncpa [#allocation9], 0
    %s28 = scalar_lea.sflag [#allocation9], 1
    %29 = vsyncpa %s28, 0
    %30 = vsyncpa [#allocation12], 0
    %s31 = scalar_lea.sflag [#allocation12], 1
    %32 = vsyncpa %s31, 0
    %33 = vsyncpa [#allocation15], 0
    %s34 = scalar_lea.sflag [#allocation15], 1
    %35 = vsyncpa %s34, 0
    %36 = vsyncpa [#allocation4], 0
    %s37 = scalar_lea.sflag [#allocation4], 1
    %38 = vsyncpa %s37, 0
    loop: start=0, step=1, limit=6
    $region2: #{tpu_custom_call.1} parent=1 // loop_pre_header
      _
    $region3: #{tpu_custom_call.1} parent=1 // loop_header
      %s40 = sphi 0, %s44
      %p41 = scmp.ge.s32.totalorder %s40, 6
      %s47 = sphi 0, %s59
      %s48 = sphi 0, %s55
      %s49 = sphi 0, %s47
      %s50 = sphi 0, %s48
      %s51 = sphi 0, %s49
      %s52 = sphi 0, %s50
      %s64 = sphi 0, %s66
      %s67 = sphi 0, %s64
      %s68 = sphi 0, %s67
      %s84 = sphi 0, %s68
      %s94 = sphi 0, %s96
      %s97 = sphi 0, %s94
      %s98 = sphi 0, %s97
      %s114 = sphi 0, %s98
      %s120 = sphi 0, %s122
      %s123 = sphi 0, %s120
      %s124 = sphi 0, %s123
      %s140 = sphi 0, %s124
      %s146 = sphi 0, %s148
      %s149 = sphi 0, %s146
      %s150 = sphi 0, %s149
      %s166 = sphi 0, %s150
      %s172 = sphi 0, %s174
      %s175 = sphi 0, %s172
      %s176 = sphi 0, %s175
      %s192 = sphi 0, %s176
      %s198 = sphi 0, %s200
      %s201 = sphi 0, %s198
      %s202 = sphi 0, %s201
      %s218 = sphi 0, %s202
      %s224 = sphi 0, %s226
      %s227 = sphi 0, %s224
      %s228 = sphi 0, %s227
      %s244 = sphi 0, %s228
      %s250 = sphi 0, %s252
      %s253 = sphi 0, %s250
      %s254 = sphi 0, %s253
      %s270 = sphi 0, %s254
      %s276 = sphi 0, %s278
      %s279 = sphi 0, %s276
      %s280 = sphi 0, %s279
      %s296 = sphi 0, %s280
      %s302 = sphi 0, %s304
      %s305 = sphi 0, %s302
      %s306 = sphi 0, %s305
      %s322 = sphi 0, %s306
      %s328 = sphi 0, %s330
      %s331 = sphi 0, %s328
      %s332 = sphi 0, %s331
      %s348 = sphi 0, %s332
      %s354 = sphi 0, %s356
      %s357 = sphi 0, %s354
      %s358 = sphi 0, %s357
      %s374 = sphi 0, %s358
      %s380 = sphi 0, %s382
      %s383 = sphi 0, %s380
      %s384 = sphi 0, %s383
      %s400 = sphi 0, %s384
      %s406 = sphi 0, %s408
      %s409 = sphi 0, %s406
      %s410 = sphi 0, %s409
      %s426 = sphi 0, %s410
      %s432 = sphi 0, %s434
      %s435 = sphi 0, %s432
      %s436 = sphi 0, %s435
      %s452 = sphi 0, %s436
      %s458 = sphi 0, %s460
      %s461 = sphi 0, %s458
      %s462 = sphi 0, %s461
      %s478 = sphi 0, %s462
      %s486 = sphi 0, %s488
      %s489 = sphi 0, %s486
      %s490 = sphi 0, %s489
      %s506 = sphi 0, %s490
    $region4: #{tpu_custom_call.1} parent=1 // loop_header_branch
      %43 = sbr.rel (%p41) target = $region8
    $region5: #{tpu_custom_call.1} parent=1 // loop_body
      %s45 = ssub.s32 %s40, 1
      %s46 = ssub.s32 %s40, 2
      %s53 = sadd.s32 1, %s48
      %p54 = scmp.ge.s32.totalorder %s53, 2
      %s55 = scalar_select %p54, 0, %s53
      %s56 = sadd.s32 1, %s47
      %s57 = scalar_select %p54, %s56, %s47
      %p58 = scmp.ge.s32.totalorder %s57, 2
      %s59 = scalar_select %p58, 0, %s57
      %s60 = ssub.s32 %s47, %s59
      %s61 = ssub.s32 %s48, %s55
      %s62 = sor.u32 %s60, %s61
      %p63 = scmp.eq.s32.totalorder %s62, 0
      %s65 = sadd.s32 %s64, 1
      %s66 = scalar_select %p63, %s64, %s65
      %p69 = pneg %p63
      %p70 = scmp.eq.s32.totalorder %s40, 3
      %p71 = por %p69, %p70
      %p72 = scmp.ne.s32.totalorder %s64, %s67
      %p73 = scmp.eq.s32.totalorder %s40, 0
      %p74 = por %p72, %p73
      %p75 = scmp.ne.s32.totalorder %s64, %s67
      %p76 = scmp.eq.s32.totalorder %s45, 3
      %p77 = por %p75, %p76
      %p78 = scmp.ne.s32.totalorder %s67, %s68
      %p79 = scmp.eq.s32.totalorder %s45, 0
      %p80 = por %p78, %p79
      %p81 = scmp.ne.s32.totalorder %s67, %s68
      %p82 = scmp.eq.s32.totalorder %s46, 3
      %p83 = por %p81, %p82
      %p85 = scmp.ne.s32.totalorder %s68, %s84
      %p86 = scmp.eq.s32.totalorder %s46, 0
      %p87 = por %p85, %p86
      %s88 = ssub.s32 1, %s47
      %s89 = ssub.s32 1, %s59
      %s90 = ssub.s32 %s88, %s89
      %s91 = ssub.s32 %s48, %s55
      %s92 = sor.u32 %s90, %s91
      %p93 = scmp.eq.s32.totalorder %s92, 0
      %s95 = sadd.s32 %s94, 1
      %s96 = scalar_select %p93, %s94, %s95
      %p99 = pneg %p93
      %p100 = scmp.eq.s32.totalorder %s40, 3
      %p101 = por %p99, %p100
      %p102 = scmp.ne.s32.totalorder %s94, %s97
      %p103 = scmp.eq.s32.totalorder %s40, 0
      %p104 = por %p102, %p103
      %p105 = scmp.ne.s32.totalorder %s94, %s97
      %p106 = scmp.eq.s32.totalorder %s45, 3
      %p107 = por %p105, %p106
      %p108 = scmp.ne.s32.totalorder %s97, %s98
      %p109 = scmp.eq.s32.totalorder %s45, 0
      %p110 = por %p108, %p109
      %p111 = scmp.ne.s32.totalorder %s97, %s98
      %p112 = scmp.eq.s32.totalorder %s46, 3
      %p113 = por %p111, %p112
      %p115 = scmp.ne.s32.totalorder %s98, %s114
      %p116 = scmp.eq.s32.totalorder %s46, 0
      %p117 = por %p115, %p116
      %s118 = ssub.s32 %s47, %s59
      %p119 = scmp.eq.s32.totalorder %s118, 0
      %s121 = sadd.s32 %s120, 1
      %s122 = scalar_select %p119, %s120, %s121
      %p125 = pneg %p119
      %p126 = scmp.eq.s32.totalorder %s40, 3
      %p127 = por %p125, %p126
      %p128 = scmp.ne.s32.totalorder %s120, %s123
      %p129 = scmp.eq.s32.totalorder %s40, 0
      %p130 = por %p128, %p129
      %p131 = scmp.ne.s32.totalorder %s120, %s123
      %p132 = scmp.eq.s32.totalorder %s45, 3
      %p133 = por %p131, %p132
      %p134 = scmp.ne.s32.totalorder %s123, %s124
      %p135 = scmp.eq.s32.totalorder %s45, 0
      %p136 = por %p134, %p135
      %p137 = scmp.ne.s32.totalorder %s123, %s124
      %p138 = scmp.eq.s32.totalorder %s46, 3
      %p139 = por %p137, %p138
      %p141 = scmp.ne.s32.totalorder %s124, %s140
      %p142 = scmp.eq.s32.totalorder %s46, 0
      %p143 = por %p141, %p142
      %s144 = ssub.s32 %s47, %s59
      %p145 = scmp.eq.s32.totalorder %s144, 0
      %s147 = sadd.s32 %s146, 1
      %s148 = scalar_select %p145, %s146, %s147
      %p151 = pneg %p145
      %p152 = scmp.eq.s32.totalorder %s40, 3
      %p153 = por %p151, %p152
      %p154 = scmp.ne.s32.totalorder %s146, %s149
      %p155 = scmp.eq.s32.totalorder %s40, 0
      %p156 = por %p154, %p155
      %p157 = scmp.ne.s32.totalorder %s146, %s149
      %p158 = scmp.eq.s32.totalorder %s45, 3
      %p159 = por %p157, %p158
      %p160 = scmp.ne.s32.totalorder %s149, %s150
      %p161 = scmp.eq.s32.totalorder %s45, 0
      %p162 = por %p160, %p161
      %p163 = scmp.ne.s32.totalorder %s149, %s150
      %p164 = scmp.eq.s32.totalorder %s46, 3
      %p165 = por %p163, %p164
      %p167 = scmp.ne.s32.totalorder %s150, %s166
      %p168 = scmp.eq.s32.totalorder %s46, 0
      %p169 = por %p167, %p168
      %s170 = ssub.s32 %s47, %s59
      %p171 = scmp.eq.s32.totalorder %s170, 0
      %s173 = sadd.s32 %s172, 1
      %s174 = scalar_select %p171, %s172, %s173
      %p177 = pneg %p171
      %p178 = scmp.eq.s32.totalorder %s40, 3
      %p179 = por %p177, %p178
      %p180 = scmp.ne.s32.totalorder %s172, %s175
      %p181 = scmp.eq.s32.totalorder %s40, 0
      %p182 = por %p180, %p181
      %p183 = scmp.ne.s32.totalorder %s172, %s175
      %p184 = scmp.eq.s32.totalorder %s45, 3
      %p185 = por %p183, %p184
      %p186 = scmp.ne.s32.totalorder %s175, %s176
      %p187 = scmp.eq.s32.totalorder %s45, 0
      %p188 = por %p186, %p187
      %p189 = scmp.ne.s32.totalorder %s175, %s176
      %p190 = scmp.eq.s32.totalorder %s46, 3
      %p191 = por %p189, %p190
      %p193 = scmp.ne.s32.totalorder %s176, %s192
      %p194 = scmp.eq.s32.totalorder %s46, 0
      %p195 = por %p193, %p194
      %s196 = ssub.s32 %s47, %s59
      %p197 = scmp.eq.s32.totalorder %s196, 0
      %s199 = sadd.s32 %s198, 1
      %s200 = scalar_select %p197, %s198, %s199
      %p203 = pneg %p197
      %p204 = scmp.eq.s32.totalorder %s40, 3
      %p205 = por %p203, %p204
      %p206 = scmp.ne.s32.totalorder %s198, %s201
      %p207 = scmp.eq.s32.totalorder %s40, 0
      %p208 = por %p206, %p207
      %p209 = scmp.ne.s32.totalorder %s198, %s201
      %p210 = scmp.eq.s32.totalorder %s45, 3
      %p211 = por %p209, %p210
      %p212 = scmp.ne.s32.totalorder %s201, %s202
      %p213 = scmp.eq.s32.totalorder %s45, 0
      %p214 = por %p212, %p213
      %p215 = scmp.ne.s32.totalorder %s201, %s202
      %p216 = scmp.eq.s32.totalorder %s46, 3
      %p217 = por %p215, %p216
      %p219 = scmp.ne.s32.totalorder %s202, %s218
      %p220 = scmp.eq.s32.totalorder %s46, 0
      %p221 = por %p219, %p220
      %s222 = ssub.s32 %s47, %s59
      %p223 = scmp.eq.s32.totalorder %s222, 0
      %s225 = sadd.s32 %s224, 1
      %s226 = scalar_select %p223, %s224, %s225
      %p229 = pneg %p223
      %p230 = scmp.eq.s32.totalorder %s40, 3
      %p231 = por %p229, %p230
      %p232 = scmp.ne.s32.totalorder %s224, %s227
      %p233 = scmp.eq.s32.totalorder %s40, 0
      %p234 = por %p232, %p233
      %p235 = scmp.ne.s32.totalorder %s224, %s227
      %p236 = scmp.eq.s32.totalorder %s45, 3
      %p237 = por %p235, %p236
      %p238 = scmp.ne.s32.totalorder %s227, %s228
      %p239 = scmp.eq.s32.totalorder %s45, 0
      %p240 = por %p238, %p239
      %p241 = scmp.ne.s32.totalorder %s227, %s228
      %p242 = scmp.eq.s32.totalorder %s46, 3
      %p243 = por %p241, %p242
      %p245 = scmp.ne.s32.totalorder %s228, %s244
      %p246 = scmp.eq.s32.totalorder %s46, 0
      %p247 = por %p245, %p246
      %s248 = ssub.s32 %s47, %s59
      %p249 = scmp.eq.s32.totalorder %s248, 0
      %s251 = sadd.s32 %s250, 1
      %s252 = scalar_select %p249, %s250, %s251
      %p255 = pneg %p249
      %p256 = scmp.eq.s32.totalorder %s40, 3
      %p257 = por %p255, %p256
      %p258 = scmp.ne.s32.totalorder %s250, %s253
      %p259 = scmp.eq.s32.totalorder %s40, 0
      %p260 = por %p258, %p259
      %p261 = scmp.ne.s32.totalorder %s250, %s253
      %p262 = scmp.eq.s32.totalorder %s45, 3
      %p263 = por %p261, %p262
      %p264 = scmp.ne.s32.totalorder %s253, %s254
      %p265 = scmp.eq.s32.totalorder %s45, 0
      %p266 = por %p264, %p265
      %p267 = scmp.ne.s32.totalorder %s253, %s254
      %p268 = scmp.eq.s32.totalorder %s46, 3
      %p269 = por %p267, %p268
      %p271 = scmp.ne.s32.totalorder %s254, %s270
      %p272 = scmp.eq.s32.totalorder %s46, 0
      %p273 = por %p271, %p272
      %s274 = ssub.s32 %s47, %s59
      %p275 = scmp.eq.s32.totalorder %s274, 0
      %s277 = sadd.s32 %s276, 1
      %s278 = scalar_select %p275, %s276, %s277
      %p281 = pneg %p275
      %p282 = scmp.eq.s32.totalorder %s40, 3
      %p283 = por %p281, %p282
      %p284 = scmp.ne.s32.totalorder %s276, %s279
      %p285 = scmp.eq.s32.totalorder %s40, 0
      %p286 = por %p284, %p285
      %p287 = scmp.ne.s32.totalorder %s276, %s279
      %p288 = scmp.eq.s32.totalorder %s45, 3
      %p289 = por %p287, %p288
      %p290 = scmp.ne.s32.totalorder %s279, %s280
      %p291 = scmp.eq.s32.totalorder %s45, 0
      %p292 = por %p290, %p291
      %p293 = scmp.ne.s32.totalorder %s279, %s280
      %p294 = scmp.eq.s32.totalorder %s46, 3
      %p295 = por %p293, %p294
      %p297 = scmp.ne.s32.totalorder %s280, %s296
      %p298 = scmp.eq.s32.totalorder %s46, 0
      %p299 = por %p297, %p298
      %s300 = ssub.s32 %s47, %s59
      %p301 = scmp.eq.s32.totalorder %s300, 0
      %s303 = sadd.s32 %s302, 1
      %s304 = scalar_select %p301, %s302, %s303
      %p307 = pneg %p301
      %p308 = scmp.eq.s32.totalorder %s40, 3
      %p309 = por %p307, %p308
      %p310 = scmp.ne.s32.totalorder %s302, %s305
      %p311 = scmp.eq.s32.totalorder %s40, 0
      %p312 = por %p310, %p311
      %p313 = scmp.ne.s32.totalorder %s302, %s305
      %p314 = scmp.eq.s32.totalorder %s45, 3
      %p315 = por %p313, %p314
      %p316 = scmp.ne.s32.totalorder %s305, %s306
      %p317 = scmp.eq.s32.totalorder %s45, 0
      %p318 = por %p316, %p317
      %p319 = scmp.ne.s32.totalorder %s305, %s306
      %p320 = scmp.eq.s32.totalorder %s46, 3
      %p321 = por %p319, %p320
      %p323 = scmp.ne.s32.totalorder %s306, %s322
      %p324 = scmp.eq.s32.totalorder %s46, 0
      %p325 = por %p323, %p324
      %s326 = ssub.s32 %s47, %s59
      %p327 = scmp.eq.s32.totalorder %s326, 0
      %s329 = sadd.s32 %s328, 1
      %s330 = scalar_select %p327, %s328, %s329
      %p333 = pneg %p327
      %p334 = scmp.eq.s32.totalorder %s40, 3
      %p335 = por %p333, %p334
      %p336 = scmp.ne.s32.totalorder %s328, %s331
      %p337 = scmp.eq.s32.totalorder %s40, 0
      %p338 = por %p336, %p337
      %p339 = scmp.ne.s32.totalorder %s328, %s331
      %p340 = scmp.eq.s32.totalorder %s45, 3
      %p341 = por %p339, %p340
      %p342 = scmp.ne.s32.totalorder %s331, %s332
      %p343 = scmp.eq.s32.totalorder %s45, 0
      %p344 = por %p342, %p343
      %p345 = scmp.ne.s32.totalorder %s331, %s332
      %p346 = scmp.eq.s32.totalorder %s46, 3
      %p347 = por %p345, %p346
      %p349 = scmp.ne.s32.totalorder %s332, %s348
      %p350 = scmp.eq.s32.totalorder %s46, 0
      %p351 = por %p349, %p350
      %s352 = ssub.s32 %s47, %s59
      %p353 = scmp.eq.s32.totalorder %s352, 0
      %s355 = sadd.s32 %s354, 1
      %s356 = scalar_select %p353, %s354, %s355
      %p359 = pneg %p353
      %p360 = scmp.eq.s32.totalorder %s40, 3
      %p361 = por %p359, %p360
      %p362 = scmp.ne.s32.totalorder %s354, %s357
      %p363 = scmp.eq.s32.totalorder %s40, 0
      %p364 = por %p362, %p363
      %p365 = scmp.ne.s32.totalorder %s354, %s357
      %p366 = scmp.eq.s32.totalorder %s45, 3
      %p367 = por %p365, %p366
      %p368 = scmp.ne.s32.totalorder %s357, %s358
      %p369 = scmp.eq.s32.totalorder %s45, 0
      %p370 = por %p368, %p369
      %p371 = scmp.ne.s32.totalorder %s357, %s358
      %p372 = scmp.eq.s32.totalorder %s46, 3
      %p373 = por %p371, %p372
      %p375 = scmp.ne.s32.totalorder %s358, %s374
      %p376 = scmp.eq.s32.totalorder %s46, 0
      %p377 = por %p375, %p376
      %s378 = ssub.s32 %s47, %s59
      %p379 = scmp.eq.s32.totalorder %s378, 0
      %s381 = sadd.s32 %s380, 1
      %s382 = scalar_select %p379, %s380, %s381
      %p385 = pneg %p379
      %p386 = scmp.eq.s32.totalorder %s40, 3
      %p387 = por %p385, %p386
      %p388 = scmp.ne.s32.totalorder %s380, %s383
      %p389 = scmp.eq.s32.totalorder %s40, 0
      %p390 = por %p388, %p389
      %p391 = scmp.ne.s32.totalorder %s380, %s383
      %p392 = scmp.eq.s32.totalorder %s45, 3
      %p393 = por %p391, %p392
      %p394 = scmp.ne.s32.totalorder %s383, %s384
      %p395 = scmp.eq.s32.totalorder %s45, 0
      %p396 = por %p394, %p395
      %p397 = scmp.ne.s32.totalorder %s383, %s384
      %p398 = scmp.eq.s32.totalorder %s46, 3
      %p399 = por %p397, %p398
      %p401 = scmp.ne.s32.totalorder %s384, %s400
      %p402 = scmp.eq.s32.totalorder %s46, 0
      %p403 = por %p401, %p402
      %s404 = ssub.s32 %s47, %s59
      %p405 = scmp.eq.s32.totalorder %s404, 0
      %s407 = sadd.s32 %s406, 1
      %s408 = scalar_select %p405, %s406, %s407
      %p411 = pneg %p405
      %p412 = scmp.eq.s32.totalorder %s40, 3
      %p413 = por %p411, %p412
      %p414 = scmp.ne.s32.totalorder %s406, %s409
      %p415 = scmp.eq.s32.totalorder %s40, 0
      %p416 = por %p414, %p415
      %p417 = scmp.ne.s32.totalorder %s406, %s409
      %p418 = scmp.eq.s32.totalorder %s45, 3
      %p419 = por %p417, %p418
      %p420 = scmp.ne.s32.totalorder %s409, %s410
      %p421 = scmp.eq.s32.totalorder %s45, 0
      %p422 = por %p420, %p421
      %p423 = scmp.ne.s32.totalorder %s409, %s410
      %p424 = scmp.eq.s32.totalorder %s46, 3
      %p425 = por %p423, %p424
      %p427 = scmp.ne.s32.totalorder %s410, %s426
      %p428 = scmp.eq.s32.totalorder %s46, 0
      %p429 = por %p427, %p428
      %s430 = ssub.s32 %s47, %s59
      %p431 = scmp.eq.s32.totalorder %s430, 0
      %s433 = sadd.s32 %s432, 1
      %s434 = scalar_select %p431, %s432, %s433
      %p437 = pneg %p431
      %p438 = scmp.eq.s32.totalorder %s40, 3
      %p439 = por %p437, %p438
      %p440 = scmp.ne.s32.totalorder %s432, %s435
      %p441 = scmp.eq.s32.totalorder %s40, 0
      %p442 = por %p440, %p441
      %p443 = scmp.ne.s32.totalorder %s432, %s435
      %p444 = scmp.eq.s32.totalorder %s45, 3
      %p445 = por %p443, %p444
      %p446 = scmp.ne.s32.totalorder %s435, %s436
      %p447 = scmp.eq.s32.totalorder %s45, 0
      %p448 = por %p446, %p447
      %p449 = scmp.ne.s32.totalorder %s435, %s436
      %p450 = scmp.eq.s32.totalorder %s46, 3
      %p451 = por %p449, %p450
      %p453 = scmp.ne.s32.totalorder %s436, %s452
      %p454 = scmp.eq.s32.totalorder %s46, 0
      %p455 = por %p453, %p454
      %s456 = ssub.s32 %s47, %s59
      %p457 = scmp.eq.s32.totalorder %s456, 0
      %s459 = sadd.s32 %s458, 1
      %s460 = scalar_select %p457, %s458, %s459
      %p463 = pneg %p457
      %p464 = scmp.eq.s32.totalorder %s40, 3
      %p465 = por %p463, %p464
      %p466 = scmp.ne.s32.totalorder %s458, %s461
      %p467 = scmp.eq.s32.totalorder %s40, 0
      %p468 = por %p466, %p467
      %p469 = scmp.ne.s32.totalorder %s458, %s461
      %p470 = scmp.eq.s32.totalorder %s45, 3
      %p471 = por %p469, %p470
      %p472 = scmp.ne.s32.totalorder %s461, %s462
      %p473 = scmp.eq.s32.totalorder %s45, 0
      %p474 = por %p472, %p473
      %p475 = scmp.ne.s32.totalorder %s461, %s462
      %p476 = scmp.eq.s32.totalorder %s46, 3
      %p477 = por %p475, %p476
      %p479 = scmp.ne.s32.totalorder %s462, %s478
      %p480 = scmp.eq.s32.totalorder %s46, 0
      %p481 = por %p479, %p480
      %s482 = ssub.s32 %s47, %s59
      %s483 = ssub.s32 %s48, %s55
      %s484 = sor.u32 %s482, %s483
      %p485 = scmp.eq.s32.totalorder %s484, 0
      %s487 = sadd.s32 %s486, 1
      %s488 = scalar_select %p485, %s486, %s487
      %p491 = pneg %p485
      %p492 = scmp.eq.s32.totalorder %s40, 3
      %p493 = por %p491, %p492
      %p494 = scmp.ne.s32.totalorder %s486, %s489
      %p495 = scmp.eq.s32.totalorder %s40, 0
      %p496 = por %p494, %p495
      %p497 = scmp.ne.s32.totalorder %s486, %s489
      %p498 = scmp.eq.s32.totalorder %s45, 3
      %p499 = por %p497, %p498
      %p500 = scmp.ne.s32.totalorder %s489, %s490
      %p501 = scmp.eq.s32.totalorder %s45, 0
      %p502 = por %p500, %p501
      %p503 = scmp.ne.s32.totalorder %s489, %s490
      %p504 = scmp.eq.s32.totalorder %s46, 3
      %p505 = por %p503, %p504
      %p507 = scmp.ne.s32.totalorder %s490, %s506
      %p508 = scmp.eq.s32.totalorder %s46, 0
      %p509 = por %p507, %p508
      %p510 = scmp.le.s32.totalorder 1, %s40
      %p511 = scmp.lt.s32.totalorder %s40, 5
      %p512 = pnand %p510, %p511
      %p513 = pneg %p512
      // Predicated region
      $region9: #{tpu_custom_call.1} parent=5 // pred_check
        _
      $region10: #{tpu_custom_call.1} parent=5 // pred_check_branch
        %515 = sbr.rel (%p512) target = $region12
      $region11: #{tpu_custom_call.1} parent=5 // pred_region
        %s516 = ssub.s32 %s40, 1
      $region12: #{tpu_custom_call.1} parent=5 // pred_fallthru
        _
      %p517 = scmp.lt.s32.totalorder %s40, 4
      // Predicated region
      $region13: #{tpu_custom_call.1} parent=5 // pred_check
        %p518 = pneg %p517
      $region14: #{tpu_custom_call.1} parent=5 // pred_check_branch
        %520 = sbr.rel (%p518) target = $region16
      $region15: #{tpu_custom_call.1} parent=5 // pred_region
        // Predicated region
        $region17: #{tpu_custom_call.1} parent=15 // pred_check
          %p521 = pneg %p74
        $region18: #{tpu_custom_call.1} parent=15 // pred_check_branch
          %523 = sbr.rel (%p521) target = $region20
        $region19: #{tpu_custom_call.1} parent=15 // pred_region
          %s524 = sand.u32 %s64, 1
          %s525 = scalar_lea.sflag [#allocation3], %s524
          %s526 = sand.u32 %s64, 1
          %s527 = smul.addr %s526, 64
          %s528 = scalar_lea.vmem [#allocation2], %s527
          %s530 = ssub.s32 1024, 1024
          %531 = vsyncadd %s525, %s530
          %s532 = smul.addr %s48, 16
          %s533 = smul.addr %s47, 32
          %s534 = sadd.s32 %s532, %s533
          %s535 = smul.addr %s534, 64
          %s536 = scalar_lea.hbm %s0, %s535
          %s537 = sshll.u32 %s528, 4
          %s538 = int_to_ptr.vmem [resolvable:$true] %s537
          %543 = dma.hbm_to_vmem [thread:$0]  %s536, 1024, %s538, %s525, 64, 64, 4
        $region20: #{tpu_custom_call.1} parent=15 // pred_fallthru
          _
        // Predicated region
        $region21: #{tpu_custom_call.1} parent=15 // pred_check
          %p544 = pneg %p104
        $region22: #{tpu_custom_call.1} parent=15 // pred_check_branch
          %546 = sbr.rel (%p544) target = $region24
        $region23: #{tpu_custom_call.1} parent=15 // pred_region
          %s547 = sand.u32 %s40, 1
          %s548 = scalar_lea.sflag [#allocation6], %s547
          %s549 = sand.u32 %s94, 1
          %s550 = smul.addr %s549, 64
          %s551 = scalar_lea.vmem [#allocation5], %s550
          %s552 = ssub.s32 1, %s47
          %s554 = ssub.s32 1024, 1024
          %555 = vsyncadd %s548, %s554
          %s556 = smul.addr %s48, 16
          %s557 = smul.addr %s552, 32
          %s558 = sadd.s32 %s556, %s557
          %s559 = smul.addr %s558, 64
          %s560 = scalar_lea.hbm %s1, %s559
          %s561 = sshll.u32 %s551, 4
          %s562 = int_to_ptr.vmem [resolvable:$true] %s561
          %567 = dma.hbm_to_vmem [thread:$0]  %s560, 1024, %s562, %s548, 64, 64, 4
        $region24: #{tpu_custom_call.1} parent=15 // pred_fallthru
          _
        // Predicated region
        $region25: #{tpu_custom_call.1} parent=15 // pred_check
          %p568 = pneg %p130
        $region26: #{tpu_custom_call.1} parent=15 // pred_check_branch
          %570 = sbr.rel (%p568) target = $region28
        $region27: #{tpu_custom_call.1} parent=15 // pred_region
          %s571 = sand.u32 %s40, 1
          %s572 = scalar_lea.sflag [#allocation6], %s571
          %s573 = sand.u32 %s120, 1
          %s574 = smul.addr %s573, 128
          %s575 = scalar_lea.vmem [#allocation7], %s574
          %s577 = ssub.s32 2048, 2048
          %578 = vsyncadd %s572, %s577
          %s579 = smul.addr %s47, 32
          %s580 = smul.addr %s579, 64
          %s581 = scalar_lea.hbm %s2, %s580
          %s582 = sshll.u32 %s575, 4
          %s583 = int_to_ptr.vmem [resolvable:$true] %s582
          %588 = dma.hbm_to_vmem [thread:$0]  %s581, 2048, %s583, %s572, 128, 128, 8
        $region28: #{tpu_custom_call.1} parent=15 // pred_fallthru
          _
        // Predicated region
        $region29: #{tpu_custom_call.1} parent=15 // pred_check
          %p589 = pneg %p156
        $region30: #{tpu_custom_call.1} parent=15 // pred_check_branch
          %591 = sbr.rel (%p589) target = $region32
        $region31: #{tpu_custom_call.1} parent=15 // pred_region
          %s592 = sand.u32 %s40, 1
          %s593 = scalar_lea.sflag [#allocation9], %s592
          %s594 = sand.u32 %s146, 1
          %s595 = smul.addr %s594, 2
          %s596 = scalar_lea.vmem [#allocation8], %s595
          %s598 = ssub.s32 32, 32
          %599 = vsyncadd %s593, %s598
          %s600 = smul.addr %s47, 2
          %s601 = smul.addr %s600, 16
          %s602 = scalar_lea.hbm %s3, %s601
          %s604 = sshll.u32 %s596, 4
          %s605 = int_to_ptr.vmem [resolvable:$true] %s604
          %607 = dma.hbm_to_vmem [thread:$0]  %s602, 32, %s605, %s593
        $region32: #{tpu_custom_call.1} parent=15 // pred_fallthru
          _
        // Predicated region
        $region33: #{tpu_custom_call.1} parent=15 // pred_check
          %p608 = pneg %p182
        $region34: #{tpu_custom_call.1} parent=15 // pred_check_branch
          %610 = sbr.rel (%p608) target = $region36
        $region35: #{tpu_custom_call.1} parent=15 // pred_region
          %s611 = sand.u32 %s40, 1
          %s612 = scalar_lea.sflag [#allocation9], %s611
          %s613 = sand.u32 %s172, 1
          %s614 = smul.addr %s613, 256
          %s615 = scalar_lea.vmem [#allocation10], %s614
          %s617 = ssub.s32 4096, 4096
          %618 = vsyncadd %s612, %s617
          %s619 = smul.addr %s47, 64
          %s620 = smul.addr %s619, 64
          %s621 = scalar_lea.hbm %s4, %s620
          %s622 = sshll.u32 %s615, 4
          %s623 = int_to_ptr.vmem [resolvable:$true] %s622
          %628 = dma.hbm_to_vmem [thread:$0]  %s621, 4096, %s623, %s612, 256, 256, 16
        $region36: #{tpu_custom_call.1} parent=15 // pred_fallthru
          _
        // Predicated region
        $region37: #{tpu_custom_call.1} parent=15 // pred_check
          %p629 = pneg %p208
        $region38: #{tpu_custom_call.1} parent=15 // pred_check_branch
          %631 = sbr.rel (%p629) target = $region40
        $region39: #{tpu_custom_call.1} parent=15 // pred_region
          %p632 = scmp.lt.s32.totalorder %s47, 1
          %s633 = scalar_select %p632, %s47, 1
          %s634 = smul.addr %s633, 4
          %s635 = scalar_lea.vmem %s5, %s634
        $region40: #{tpu_custom_call.1} parent=15 // pred_fallthru
          _
        // Predicated region
        $region41: #{tpu_custom_call.1} parent=15 // pred_check
          %p636 = pneg %p234
        $region42: #{tpu_custom_call.1} parent=15 // pred_check_branch
          %638 = sbr.rel (%p636) target = $region44
        $region43: #{tpu_custom_call.1} parent=15 // pred_region
          %s639 = sand.u32 %s40, 1
          %s640 = scalar_lea.sflag [#allocation12], %s639
          %s641 = sand.u32 %s224, 1
          %s642 = smul.addr %s641, 128
          %s643 = scalar_lea.vmem [#allocation11], %s642
          %s645 = ssub.s32 2048, 2048
          %646 = vsyncadd %s640, %s645
          %s647 = smul.addr %s47, 32
          %s648 = smul.addr %s647, 64
          %s649 = scalar_lea.hbm %s6, %s648
          %s650 = sshll.u32 %s643, 4
          %s651 = int_to_ptr.vmem [resolvable:$true] %s650
          %656 = dma.hbm_to_vmem [thread:$0]  %s649, 2048, %s651, %s640, 64, 64, 4
        $region44: #{tpu_custom_call.1} parent=15 // pred_fallthru
          _
        // Predicated region
        $region45: #{tpu_custom_call.1} parent=15 // pred_check
          %p657 = pneg %p260
        $region46: #{tpu_custom_call.1} parent=15 // pred_check_branch
          %659 = sbr.rel (%p657) target = $region48
        $region47: #{tpu_custom_call.1} parent=15 // pred_region
          %s660 = sand.u32 %s40, 1
          %s661 = scalar_lea.sflag [#allocation12], %s660
          %s662 = sand.u32 %s250, 1
          %s663 = scalar_lea.vmem [#allocation13], %s662
          %s665 = ssub.s32 16, 16
          %666 = vsyncadd %s661, %s665
          %s667 = smul.addr %s47, 16
          %s668 = scalar_lea.hbm %s7, %s667
          %s670 = sshll.u32 %s663, 4
          %s671 = int_to_ptr.vmem [resolvable:$true] %s670
          %673 = dma.hbm_to_vmem [thread:$0]  %s668, 16, %s671, %s661
        $region48: #{tpu_custom_call.1} parent=15 // pred_fallthru
          _
        // Predicated region
        $region49: #{tpu_custom_call.1} parent=15 // pred_check
          %p674 = pneg %p286
        $region50: #{tpu_custom_call.1} parent=15 // pred_check_branch
          %676 = sbr.rel (%p674) target = $region52
        $region51: #{tpu_custom_call.1} parent=15 // pred_region
          %p677 = scmp.lt.s32.totalorder %s47, 1
          %s678 = scalar_select %p677, %s47, 1
          %s679 = scalar_lea.vmem %s8, %s678
        $region52: #{tpu_custom_call.1} parent=15 // pred_fallthru
          _
        // Predicated region
        $region53: #{tpu_custom_call.1} parent=15 // pred_check
          %p680 = pneg %p312
        $region54: #{tpu_custom_call.1} parent=15 // pred_check_branch
          %682 = sbr.rel (%p680) target = $region56
        $region55: #{tpu_custom_call.1} parent=15 // pred_region
          %p683 = scmp.lt.s32.totalorder %s47, 1
          %s684 = scalar_select %p683, %s47, 1
          %s685 = scalar_lea.vmem %s9, %s684
        $region56: #{tpu_custom_call.1} parent=15 // pred_fallthru
          _
        // Predicated region
        $region57: #{tpu_custom_call.1} parent=15 // pred_check
          %p686 = pneg %p338
        $region58: #{tpu_custom_call.1} parent=15 // pred_check_branch
          %688 = sbr.rel (%p686) target = $region60
        $region59: #{tpu_custom_call.1} parent=15 // pred_region
          %s689 = sand.u32 %s40, 1
          %s690 = scalar_lea.sflag [#allocation15], %s689
          %s691 = sand.u32 %s328, 1
          %s692 = smul.addr %s691, 128
          %s693 = scalar_lea.vmem [#allocation14], %s692
          %s695 = ssub.s32 2048, 2048
          %696 = vsyncadd %s690, %s695
          %s697 = smul.addr %s47, 32
          %s698 = smul.addr %s697, 64
          %s699 = scalar_lea.hbm %s10, %s698
          %s700 = sshll.u32 %s693, 4
          %s701 = int_to_ptr.vmem [resolvable:$true] %s700
          %706 = dma.hbm_to_vmem [thread:$0]  %s699, 2048, %s701, %s690, 128, 128, 8
        $region60: #{tpu_custom_call.1} parent=15 // pred_fallthru
          _
        // Predicated region
        $region61: #{tpu_custom_call.1} parent=15 // pred_check
          %p707 = pneg %p364
        $region62: #{tpu_custom_call.1} parent=15 // pred_check_branch
          %709 = sbr.rel (%p707) target = $region64
        $region63: #{tpu_custom_call.1} parent=15 // pred_region
          %p710 = scmp.lt.s32.totalorder %s47, 1
          %s711 = scalar_select %p710, %s47, 1
          %s712 = smul.addr %s711, 2
          %s713 = scalar_lea.vmem %s11, %s712
        $region64: #{tpu_custom_call.1} parent=15 // pred_fallthru
          _
        // Predicated region
        $region65: #{tpu_custom_call.1} parent=15 // pred_check
          %p714 = pneg %p390
        $region66: #{tpu_custom_call.1} parent=15 // pred_check_branch
          %716 = sbr.rel (%p714) target = $region68
        $region67: #{tpu_custom_call.1} parent=15 // pred_region
          %s717 = sand.u32 %s40, 1
          %s718 = scalar_lea.sflag [#allocation15], %s717
          %s719 = sand.u32 %s380, 1
          %s720 = smul.addr %s719, 128
          %s721 = scalar_lea.vmem [#allocation16], %s720
          %s723 = ssub.s32 2048, 2048
          %724 = vsyncadd %s718, %s723
          %s725 = smul.addr %s47, 32
          %s726 = smul.addr %s725, 64
          %s727 = scalar_lea.hbm %s12, %s726
          %s728 = sshll.u32 %s721, 4
          %s729 = int_to_ptr.vmem [resolvable:$true] %s728
          %734 = dma.hbm_to_vmem [thread:$0]  %s727, 2048, %s729, %s718, 64, 64, 4
        $region68: #{tpu_custom_call.1} parent=15 // pred_fallthru
          _
        // Predicated region
        $region69: #{tpu_custom_call.1} parent=15 // pred_check
          %p735 = pneg %p416
        $region70: #{tpu_custom_call.1} parent=15 // pred_check_branch
          %737 = sbr.rel (%p735) target = $region72
        $region71: #{tpu_custom_call.1} parent=15 // pred_region
          %p738 = scmp.lt.s32.totalorder %s47, 1
          %s739 = scalar_select %p738, %s47, 1
          %s740 = scalar_lea.vmem %s13, %s739
        $region72: #{tpu_custom_call.1} parent=15 // pred_fallthru
          _
        // Predicated region
        $region73: #{tpu_custom_call.1} parent=15 // pred_check
          %p741 = pneg %p442
        $region74: #{tpu_custom_call.1} parent=15 // pred_check_branch
          %743 = sbr.rel (%p741) target = $region76
        $region75: #{tpu_custom_call.1} parent=15 // pred_region
          %p744 = scmp.lt.s32.totalorder %s47, 1
          %s745 = scalar_select %p744, %s47, 1
          %s746 = scalar_lea.vmem %s14, %s745
        $region76: #{tpu_custom_call.1} parent=15 // pred_fallthru
          _
        // Predicated region
        $region77: #{tpu_custom_call.1} parent=15 // pred_check
          %p747 = pneg %p468
        $region78: #{tpu_custom_call.1} parent=15 // pred_check_branch
          %749 = sbr.rel (%p747) target = $region80
        $region79: #{tpu_custom_call.1} parent=15 // pred_region
          %p750 = scmp.lt.s32.totalorder %s47, 1
          %s751 = scalar_select %p750, %s47, 1
          %s752 = scalar_lea.vmem %s15, %s751
        $region80: #{tpu_custom_call.1} parent=15 // pred_fallthru
          _
      $region16: #{tpu_custom_call.1} parent=5 // pred_fallthru
        _
      %p753 = scmp.le.s32.totalorder 1, %s40
      %p754 = scmp.lt.s32.totalorder %s40, 5
      %p755 = pnand %p753, %p754
      %p756 = pneg %p755
      // Predicated region
      $region81: #{tpu_custom_call.1} parent=5 // pred_check
        _
      $region82: #{tpu_custom_call.1} parent=5 // pred_check_branch
        %758 = sbr.rel (%p755) target = $region84
      $region83: #{tpu_custom_call.1} parent=5 // pred_region
        %s759 = ssub.s32 %s40, 1
        %s760 = sand.u32 %s67, 1
        %s761 = scalar_lea.sflag [#allocation3], %s760
        %s762 = sand.u32 %s67, 1
        %s763 = smul.addr %s762, 64
        %s764 = scalar_lea.vmem [#allocation2], %s763
        // Predicated region
        $region85: #{tpu_custom_call.1} parent=83 // pred_check
          %p765 = pneg %p80
        $region86: #{tpu_custom_call.1} parent=83 // pred_check_branch
          %767 = sbr.rel (%p765) target = $region88
        $region87: #{tpu_custom_call.1} parent=83 // pred_region
          %768 = dma.done %s761, 1024
        $region88: #{tpu_custom_call.1} parent=83 // pred_fallthru
          _
        %s769 = sand.u32 %s45, 1
        %s770 = scalar_lea.sflag [#allocation6], %s769
        %s771 = sand.u32 %s97, 1
        %s772 = smul.addr %s771, 64
        %s773 = scalar_lea.vmem [#allocation5], %s772
        // Predicated region
        $region89: #{tpu_custom_call.1} parent=83 // pred_check
          %p774 = pneg %p110
        $region90: #{tpu_custom_call.1} parent=83 // pred_check_branch
          %776 = sbr.rel (%p774) target = $region92
        $region91: #{tpu_custom_call.1} parent=83 // pred_region
          %777 = dma.done %s770, 1024
        $region92: #{tpu_custom_call.1} parent=83 // pred_fallthru
          _
        %s778 = sand.u32 %s45, 1
        %s779 = scalar_lea.sflag [#allocation6], %s778
        %s780 = sand.u32 %s123, 1
        %s781 = smul.addr %s780, 128
        %s782 = scalar_lea.vmem [#allocation7], %s781
        // Predicated region
        $region93: #{tpu_custom_call.1} parent=83 // pred_check
          %p783 = pneg %p136
        $region94: #{tpu_custom_call.1} parent=83 // pred_check_branch
          %785 = sbr.rel (%p783) target = $region96
        $region95: #{tpu_custom_call.1} parent=83 // pred_region
          %786 = dma.done %s779, 2048
        $region96: #{tpu_custom_call.1} parent=83 // pred_fallthru
          _
        %s787 = sand.u32 %s45, 1
        %s788 = scalar_lea.sflag [#allocation9], %s787
        %s789 = sand.u32 %s149, 1
        %s790 = smul.addr %s789, 2
        %s791 = scalar_lea.vmem [#allocation8], %s790
        // Predicated region
        $region97: #{tpu_custom_call.1} parent=83 // pred_check
          %p792 = pneg %p162
        $region98: #{tpu_custom_call.1} parent=83 // pred_check_branch
          %794 = sbr.rel (%p792) target = $region100
        $region99: #{tpu_custom_call.1} parent=83 // pred_region
          %795 = dma.done %s788, 32
        $region100: #{tpu_custom_call.1} parent=83 // pred_fallthru
          _
        %s796 = sand.u32 %s45, 1
        %s797 = scalar_lea.sflag [#allocation9], %s796
        %s798 = sand.u32 %s175, 1
        %s799 = smul.addr %s798, 256
        %s800 = scalar_lea.vmem [#allocation10], %s799
        // Predicated region
        $region101: #{tpu_custom_call.1} parent=83 // pred_check
          %p801 = pneg %p188
        $region102: #{tpu_custom_call.1} parent=83 // pred_check_branch
          %803 = sbr.rel (%p801) target = $region104
        $region103: #{tpu_custom_call.1} parent=83 // pred_region
          %804 = dma.done %s797, 4096
        $region104: #{tpu_custom_call.1} parent=83 // pred_fallthru
          _
        %s805 = sand.u32 %s45, 1
        %s806 = scalar_lea.sflag [#allocation12], %s805
        %s807 = sand.u32 %s227, 1
        %s808 = smul.addr %s807, 128
        %s809 = scalar_lea.vmem [#allocation11], %s808
        // Predicated region
        $region105: #{tpu_custom_call.1} parent=83 // pred_check
          %p810 = pneg %p240
        $region106: #{tpu_custom_call.1} parent=83 // pred_check_branch
          %812 = sbr.rel (%p810) target = $region108
        $region107: #{tpu_custom_call.1} parent=83 // pred_region
          %813 = dma.done %s806, 2048
        $region108: #{tpu_custom_call.1} parent=83 // pred_fallthru
          _
        %s814 = sand.u32 %s45, 1
        %s815 = scalar_lea.sflag [#allocation12], %s814
        %s816 = sand.u32 %s253, 1
        %s817 = scalar_lea.vmem [#allocation13], %s816
        // Predicated region
        $region109: #{tpu_custom_call.1} parent=83 // pred_check
          %p818 = pneg %p266
        $region110: #{tpu_custom_call.1} parent=83 // pred_check_branch
          %820 = sbr.rel (%p818) target = $region112
        $region111: #{tpu_custom_call.1} parent=83 // pred_region
          %821 = dma.done %s815, 16
        $region112: #{tpu_custom_call.1} parent=83 // pred_fallthru
          _
        %s822 = sand.u32 %s45, 1
        %s823 = scalar_lea.sflag [#allocation15], %s822
        %s824 = sand.u32 %s331, 1
        %s825 = smul.addr %s824, 128
        %s826 = scalar_lea.vmem [#allocation14], %s825
        // Predicated region
        $region113: #{tpu_custom_call.1} parent=83 // pred_check
          %p827 = pneg %p344
        $region114: #{tpu_custom_call.1} parent=83 // pred_check_branch
          %829 = sbr.rel (%p827) target = $region116
        $region115: #{tpu_custom_call.1} parent=83 // pred_region
          %830 = dma.done %s823, 2048
        $region116: #{tpu_custom_call.1} parent=83 // pred_fallthru
          _
        %s831 = sand.u32 %s45, 1
        %s832 = scalar_lea.sflag [#allocation15], %s831
        %s833 = sand.u32 %s383, 1
        %s834 = smul.addr %s833, 128
        %s835 = scalar_lea.vmem [#allocation16], %s834
        // Predicated region
        $region117: #{tpu_custom_call.1} parent=83 // pred_check
          %p836 = pneg %p396
        $region118: #{tpu_custom_call.1} parent=83 // pred_check_branch
          %838 = sbr.rel (%p836) target = $region120
        $region119: #{tpu_custom_call.1} parent=83 // pred_region
          %839 = dma.done %s832, 2048
        $region120: #{tpu_custom_call.1} parent=83 // pred_fallthru
          _
        %s840 = sand.u32 %s67, 1
        %s841 = scalar_lea.sflag [#allocation3], %s840
        %s842 = sand.u32 %s67, 1
        %s843 = smul.addr %s842, 64
        %s844 = scalar_lea.vmem [#allocation2], %s843
        %p845 = pneg %p80
        %p846 = pneg %p77
        %s847 = sand.u32 %s45, 1
        %s848 = scalar_lea.sflag [#allocation6], %s847
        %s849 = sand.u32 %s97, 1
        %s850 = smul.addr %s849, 64
        %s851 = scalar_lea.vmem [#allocation5], %s850
        %p852 = pneg %p110
        %p853 = pneg %p107
        %s854 = sand.u32 %s45, 1
        %s855 = scalar_lea.sflag [#allocation6], %s854
        %s856 = sand.u32 %s123, 1
        %s857 = smul.addr %s856, 128
        %s858 = scalar_lea.vmem [#allocation7], %s857
        %p859 = pneg %p136
        %p860 = pneg %p133
        %s861 = sand.u32 %s45, 1
        %s862 = scalar_lea.sflag [#allocation9], %s861
        %s863 = sand.u32 %s149, 1
        %s864 = smul.addr %s863, 2
        %s865 = scalar_lea.vmem [#allocation8], %s864
        %p866 = pneg %p162
        %p867 = pneg %p159
        %s868 = sand.u32 %s45, 1
        %s869 = scalar_lea.sflag [#allocation9], %s868
        %s870 = sand.u32 %s175, 1
        %s871 = smul.addr %s870, 256
        %s872 = scalar_lea.vmem [#allocation10], %s871
        %p873 = pneg %p188
        %p874 = pneg %p185
        %p875 = scmp.lt.s32.totalorder %s49, 1
        %s876 = scalar_select %p875, %s49, 1
        %s877 = smul.addr %s876, 4
        %s878 = scalar_lea.vmem %s5, %s877
        %p879 = pneg %p214
        %p880 = pneg %p211
        %s881 = sand.u32 %s45, 1
        %s882 = scalar_lea.sflag [#allocation12], %s881
        %s883 = sand.u32 %s227, 1
        %s884 = smul.addr %s883, 128
        %s885 = scalar_lea.vmem [#allocation11], %s884
        %p886 = pneg %p240
        %p887 = pneg %p237
        %s888 = sand.u32 %s45, 1
        %s889 = scalar_lea.sflag [#allocation12], %s888
        %s890 = sand.u32 %s253, 1
        %s891 = scalar_lea.vmem [#allocation13], %s890
        %p892 = pneg %p266
        %p893 = pneg %p263
        %p894 = scmp.lt.s32.totalorder %s49, 1
        %s895 = scalar_select %p894, %s49, 1
        %s896 = scalar_lea.vmem %s8, %s895
        %p897 = pneg %p292
        %p898 = pneg %p289
        %p899 = scmp.lt.s32.totalorder %s49, 1
        %s900 = scalar_select %p899, %s49, 1
        %s901 = scalar_lea.vmem %s9, %s900
        %p902 = pneg %p318
        %p903 = pneg %p315
        %s904 = sand.u32 %s45, 1
        %s905 = scalar_lea.sflag [#allocation15], %s904
        %s906 = sand.u32 %s331, 1
        %s907 = smul.addr %s906, 128
        %s908 = scalar_lea.vmem [#allocation14], %s907
        %p909 = pneg %p344
        %p910 = pneg %p341
        %p911 = scmp.lt.s32.totalorder %s49, 1
        %s912 = scalar_select %p911, %s49, 1
        %s913 = smul.addr %s912, 2
        %s914 = scalar_lea.vmem %s11, %s913
        %p915 = pneg %p370
        %p916 = pneg %p367
        %s917 = sand.u32 %s45, 1
        %s918 = scalar_lea.sflag [#allocation15], %s917
        %s919 = sand.u32 %s383, 1
        %s920 = smul.addr %s919, 128
        %s921 = scalar_lea.vmem [#allocation16], %s920
        %p922 = pneg %p396
        %p923 = pneg %p393
        %p924 = scmp.lt.s32.totalorder %s49, 1
        %s925 = scalar_select %p924, %s49, 1
        %s926 = scalar_lea.vmem %s13, %s925
        %p927 = pneg %p422
        %p928 = pneg %p419
        %p929 = scmp.lt.s32.totalorder %s49, 1
        %s930 = scalar_select %p929, %s49, 1
        %s931 = scalar_lea.vmem %s14, %s930
        %p932 = pneg %p448
        %p933 = pneg %p445
        %p934 = scmp.lt.s32.totalorder %s49, 1
        %s935 = scalar_select %p934, %s49, 1
        %s936 = scalar_lea.vmem %s15, %s935
        %p937 = pneg %p474
        %p938 = pneg %p471
        %p939 = pneg %p502
        %p940 = pneg %p499
        %s941 = sand.u32 %s489, 1
        %s942 = scalar_lea.sflag [#allocation4], %s941
        %s943 = sand.u32 %s489, 1
        %s944 = smul.addr %s943, 64
        %s945 = scalar_lea.vmem [#allocation17], %s944
        %s946 = ssub.s32 1, %s49
        %p947 = scmp.lt.s32.totalorder %s49, 1
        %s948 = scalar_select %p947, %s49, 1
        %s949 = smul.addr %s948, 4
        %s950 = scalar_lea.vmem %s5, %s949
        %p951 = scmp.lt.s32.totalorder %s49, 1
        %s952 = scalar_select %p951, %s49, 1
        %s953 = scalar_lea.vmem %s8, %s952
        %p954 = scmp.lt.s32.totalorder %s49, 1
        %s955 = scalar_select %p954, %s49, 1
        %s956 = scalar_lea.vmem %s9, %s955
        %p957 = scmp.lt.s32.totalorder %s49, 1
        %s958 = scalar_select %p957, %s49, 1
        %s959 = smul.addr %s958, 2
        %s960 = scalar_lea.vmem %s11, %s959
        %p961 = scmp.lt.s32.totalorder %s49, 1
        %s962 = scalar_select %p961, %s49, 1
        %s963 = scalar_lea.vmem %s13, %s962
        %p964 = scmp.lt.s32.totalorder %s49, 1
        %s965 = scalar_select %p964, %s49, 1
        %s966 = scalar_lea.vmem %s14, %s965
        %p967 = scmp.lt.s32.totalorder %s49, 1
        %s968 = scalar_select %p967, %s49, 1
        %s969 = scalar_lea.vmem %s15, %s968
        %v971 = vld [vmem:[%s764] sm:$0xf]
        %v972 = vld [vmem:[%s764 + $0x4] sm:$0xf]
        %v973 = vld [vmem:[%s764 + $0x8] sm:$0xf]
        %v974 = vld [vmem:[%s764 + $0xc] sm:$0xf]
        %v975 = vld [vmem:[%s764 + $0x10] sm:$0xf]
        %v976 = vld [vmem:[%s764 + $0x14] sm:$0xf]
        %v977 = vld [vmem:[%s764 + $0x18] sm:$0xf]
        %v978 = vld [vmem:[%s764 + $0x1c] sm:$0xf]
        %v979 = vld [vmem:[%s764 + $0x20] sm:$0xf]
        %v980 = vld [vmem:[%s764 + $0x24] sm:$0xf]
        %v981 = vld [vmem:[%s764 + $0x28] sm:$0xf]
        %v982 = vld [vmem:[%s764 + $0x2c] sm:$0xf]
        %v983 = vld [vmem:[%s764 + $0x30] sm:$0xf]
        %v984 = vld [vmem:[%s764 + $0x34] sm:$0xf]
        %v985 = vld [vmem:[%s764 + $0x38] sm:$0xf]
        %v986 = vld [vmem:[%s764 + $0x3c] sm:$0xf]
        %v987 = vld [vmem:[%s773] sm:$0xf]
        %v988 = vld [vmem:[%s773 + $0x4] sm:$0xf]
        %v989 = vld [vmem:[%s773 + $0x8] sm:$0xf]
        %v990 = vld [vmem:[%s773 + $0xc] sm:$0xf]
        %v991 = vld [vmem:[%s773 + $0x10] sm:$0xf]
        %v992 = vld [vmem:[%s773 + $0x14] sm:$0xf]
        %v993 = vld [vmem:[%s773 + $0x18] sm:$0xf]
        %v994 = vld [vmem:[%s773 + $0x1c] sm:$0xf]
        %v995 = vld [vmem:[%s773 + $0x20] sm:$0xf]
        %v996 = vld [vmem:[%s773 + $0x24] sm:$0xf]
        %v997 = vld [vmem:[%s773 + $0x28] sm:$0xf]
        %v998 = vld [vmem:[%s773 + $0x2c] sm:$0xf]
        %v999 = vld [vmem:[%s773 + $0x30] sm:$0xf]
        %v1000 = vld [vmem:[%s773 + $0x34] sm:$0xf]
        %v1001 = vld [vmem:[%s773 + $0x38] sm:$0xf]
        %v1002 = vld [vmem:[%s773 + $0x3c] sm:$0xf]
        %v1003 = vld [vmem:[%s782] sm:$0xff]
        %v1004 = vld [vmem:[%s782 + $0x8] sm:$0xff]
        %v1005 = vld [vmem:[%s782 + $0x10] sm:$0xff]
        %v1006 = vld [vmem:[%s782 + $0x18] sm:$0xff]
        %v1007 = vld [vmem:[%s782 + $0x20] sm:$0xff]
        %v1008 = vld [vmem:[%s782 + $0x28] sm:$0xff]
        %v1009 = vld [vmem:[%s782 + $0x30] sm:$0xff]
        %v1010 = vld [vmem:[%s782 + $0x38] sm:$0xff]
        %v1011 = vld [vmem:[%s782 + $0x40] sm:$0xff]
        %v1012 = vld [vmem:[%s782 + $0x48] sm:$0xff]
        %v1013 = vld [vmem:[%s782 + $0x50] sm:$0xff]
        %v1014 = vld [vmem:[%s782 + $0x58] sm:$0xff]
        %v1015 = vld [vmem:[%s782 + $0x60] sm:$0xff]
        %v1016 = vld [vmem:[%s782 + $0x68] sm:$0xff]
        %v1017 = vld [vmem:[%s782 + $0x70] sm:$0xff]
        %v1018 = vld [vmem:[%s782 + $0x78] sm:$0xff]
        %v1019 = vld [vmem:[%s791] sm:$0x3]
        %v1021 = vlaneseq
        %v1022 = vshrl.u32 %v1021, 7
        %v1023 = vsub.s32 0, %v1022
        %v1024 = vrot.slane %v1019, %v1023
        %v1025 = vlaneseq
        %v1026 = vshrl.u32 %v1025, 7
        %v1027 = vsub.s32 1, %v1026
        %v1028 = vrot.slane %v1019, %v1027
        %v1047 = vunpack.c.l.b16 %v971
        %v1048 = vunpack.c.l.b16 %v972
        %v1049 = vunpack.c.l.b16 %v973
        %v1050 = vunpack.c.l.b16 %v974
        %v1051 = vunpack.c.l.b16 %v975
        %v1052 = vunpack.c.l.b16 %v976
        %v1053 = vunpack.c.l.b16 %v977
        %v1054 = vunpack.c.l.b16 %v978
        %v1055 = vunpack.c.l.b16 %v979
        %v1056 = vunpack.c.l.b16 %v980
        %v1057 = vunpack.c.l.b16 %v981
        %v1058 = vunpack.c.l.b16 %v982
        %v1059 = vunpack.c.l.b16 %v983
        %v1060 = vunpack.c.l.b16 %v984
        %v1061 = vunpack.c.l.b16 %v985
        %v1062 = vunpack.c.l.b16 %v986
        %v1063 = vpack.c.b16 %v1048, %v1047
        %v1064 = vpack.c.b16 %v1050, %v1049
        %v1065 = vpack.c.b16 %v1052, %v1051
        %v1066 = vpack.c.b16 %v1054, %v1053
        %v1067 = vpack.c.b16 %v1056, %v1055
        %v1068 = vpack.c.b16 %v1058, %v1057
        %v1069 = vpack.c.b16 %v1060, %v1059
        %v1070 = vpack.c.b16 %v1062, %v1061
        %v1095 = vunpack.c.l.b16 %v1003
        %v1096 = vunpack.c.h.b16 %v1003
        %v1097 = vunpack.c.l.b16 %v1004
        %v1098 = vunpack.c.h.b16 %v1004
        %v1099 = vunpack.c.l.b16 %v1005
        %v1100 = vunpack.c.h.b16 %v1005
        %v1101 = vunpack.c.l.b16 %v1006
        %v1102 = vunpack.c.h.b16 %v1006
        %v1103 = vunpack.c.l.b16 %v1007
        %v1104 = vunpack.c.h.b16 %v1007
        %v1105 = vunpack.c.l.b16 %v1008
        %v1106 = vunpack.c.h.b16 %v1008
        %v1107 = vunpack.c.l.b16 %v1009
        %v1108 = vunpack.c.h.b16 %v1009
        %v1109 = vunpack.c.l.b16 %v1010
        %v1110 = vunpack.c.h.b16 %v1010
        %v1111 = vunpack.c.l.b16 %v1011
        %v1112 = vunpack.c.h.b16 %v1011
        %v1113 = vunpack.c.l.b16 %v1012
        %v1114 = vunpack.c.h.b16 %v1012
        %v1115 = vunpack.c.l.b16 %v1013
        %v1116 = vunpack.c.h.b16 %v1013
        %v1117 = vunpack.c.l.b16 %v1014
        %v1118 = vunpack.c.h.b16 %v1014
        %v1119 = vunpack.c.l.b16 %v1015
        %v1120 = vunpack.c.h.b16 %v1015
        %v1121 = vunpack.c.l.b16 %v1016
        %v1122 = vunpack.c.h.b16 %v1016
        %v1123 = vunpack.c.l.b16 %v1017
        %v1124 = vunpack.c.h.b16 %v1017
        %v1125 = vunpack.c.l.b16 %v1018
        %v1126 = vunpack.c.h.b16 %v1018
        %v1127 = vpack.c.b16 %v1097, %v1095
        %v1128 = vpack.c.b16 %v1098, %v1096
        %v1129 = vpack.c.b16 %v1101, %v1099
        %v1130 = vpack.c.b16 %v1102, %v1100
        %v1131 = vpack.c.b16 %v1105, %v1103
        %v1132 = vpack.c.b16 %v1106, %v1104
        %v1133 = vpack.c.b16 %v1109, %v1107
        %v1134 = vpack.c.b16 %v1110, %v1108
        %v1135 = vpack.c.b16 %v1113, %v1111
        %v1136 = vpack.c.b16 %v1114, %v1112
        %v1137 = vpack.c.b16 %v1117, %v1115
        %v1138 = vpack.c.b16 %v1118, %v1116
        %v1139 = vpack.c.b16 %v1121, %v1119
        %v1140 = vpack.c.b16 %v1122, %v1120
        %v1141 = vpack.c.b16 %v1125, %v1123
        %v1142 = vpack.c.b16 %v1126, %v1124
        %1159 = vmatprep.subr.bf16.mxu0 %v1142
        %1160 = vmatpush1.bf16.msra.mxu0 %v1141
        %1161 = vmatprep.subr.bf16.mxu0 %v1140
        %1162 = vmatpush1.bf16.msra.mxu0 %v1139
        %1163 = vmatprep.subr.bf16.mxu0 %v1138
        %1164 = vmatpush1.bf16.msra.mxu0 %v1137
        %1165 = vmatprep.subr.bf16.mxu0 %v1136
        %1166 = vmatpush1.bf16.msra.mxu0 %v1135
        %1167 = vmatprep.subr.bf16.mxu0 %v1134
        %1168 = vmatpush1.bf16.msra.mxu0 %v1133
        %1169 = vmatprep.subr.bf16.mxu0 %v1132
        %1170 = vmatpush1.bf16.msra.mxu0 %v1131
        %1171 = vmatprep.subr.bf16.mxu0 %v1130
        %1172 = vmatpush1.bf16.msra.mxu0 %v1129
        %1173 = vmatprep.subr.bf16.mxu0 %v1128
        %1174 = vmatpush1.bf16.msra.mxu0 %v1127
        %1175 = vmatprep.subr.bf16.mxu0 0
        %1176 = vmatpush2.bf16.msra.mxu0 0
        %1177 = vmatprep.subr.bf16.mxu0 0
        %1178 = vmatpush2.bf16.msra.mxu0 0
        %1179 = vmatprep.subr.bf16.mxu0 0
        %1180 = vmatpush2.bf16.msra.mxu0 0
        %1181 = vmatprep.subr.bf16.mxu0 0
        %1182 = vmatpush2.bf16.msra.mxu0 0
        %1183 = vmatprep.subr.bf16.mxu0 0
        %1184 = vmatpush2.bf16.msra.mxu0 0
        %1185 = vmatprep.subr.bf16.mxu0 0
        %1186 = vmatpush2.bf16.msra.mxu0 0
        %1187 = vmatprep.subr.bf16.mxu0 0
        %1188 = vmatpush2.bf16.msra.mxu0 0
        %1189 = vmatprep.subr.bf16.mxu0 0
        %1190 = vmatpush2.bf16.msra.mxu0 0
        %1191 = vmatprep.mubr.bf16.mxu0 0
        %1192 = vmatmul.mubr.bf16.gmra.mxu0 %v1063
        %v1193 = vpop.f32.mrf.mxu0
        %v1194 = vadd.f32 %v1024, %v1193
        %v1195 = vpop.f32.mrf.mxu0
        %v1196 = vadd.f32 %v1028, %v1195
        %v1197 = vpop.f32.mrf.mxu0
        %v1198 = vadd.f32 %v1024, %v1197
        %v1199 = vpop.f32.mrf.mxu0
        %v1200 = vadd.f32 %v1028, %v1199
        %1201 = vmatprep.mubr.bf16.mxu0 0
        %1202 = vmatmul.mubr.bf16.gmra.mxu0 %v1064
        %v1203 = vpop.f32.mrf.mxu0
        %v1204 = vadd.f32 %v1024, %v1203
        %v1205 = vpop.f32.mrf.mxu0
        %v1206 = vadd.f32 %v1028, %v1205
        %v1207 = vpop.f32.mrf.mxu0
        %v1208 = vadd.f32 %v1024, %v1207
        %v1209 = vpop.f32.mrf.mxu0
        %v1210 = vadd.f32 %v1028, %v1209
        %1211 = vmatprep.mubr.bf16.mxu0 0
        %1212 = vmatmul.mubr.bf16.gmra.mxu0 %v1065
        %v1213 = vpop.f32.mrf.mxu0
        %v1214 = vadd.f32 %v1024, %v1213
        %v1215 = vpop.f32.mrf.mxu0
        %v1216 = vadd.f32 %v1028, %v1215
        %v1217 = vpop.f32.mrf.mxu0
        %v1218 = vadd.f32 %v1024, %v1217
        %v1219 = vpop.f32.mrf.mxu0
        %v1220 = vadd.f32 %v1028, %v1219
        %1221 = vmatprep.mubr.bf16.mxu0 0
        %1222 = vmatmul.mubr.bf16.gmra.mxu0 %v1066
        %v1223 = vpop.f32.mrf.mxu0
        %v1224 = vadd.f32 %v1024, %v1223
        %v1225 = vpop.f32.mrf.mxu0
        %v1226 = vadd.f32 %v1028, %v1225
        %v1227 = vpop.f32.mrf.mxu0
        %v1228 = vadd.f32 %v1024, %v1227
        %v1229 = vpop.f32.mrf.mxu0
        %v1230 = vadd.f32 %v1028, %v1229
        %1231 = vmatprep.mubr.bf16.mxu0 0
        %1232 = vmatmul.mubr.bf16.gmra.mxu0 %v1067
        %v1233 = vpop.f32.mrf.mxu0
        %v1234 = vadd.f32 %v1024, %v1233
        %v1235 = vpop.f32.mrf.mxu0
        %v1236 = vadd.f32 %v1028, %v1235
        %v1237 = vpop.f32.mrf.mxu0
        %v1238 = vadd.f32 %v1024, %v1237
        %v1239 = vpop.f32.mrf.mxu0
        %v1240 = vadd.f32 %v1028, %v1239
        %1241 = vmatprep.mubr.bf16.mxu0 0
        %1242 = vmatmul.mubr.bf16.gmra.mxu0 %v1068
        %v1243 = vpop.f32.mrf.mxu0
        %v1244 = vadd.f32 %v1024, %v1243
        %v1245 = vpop.f32.mrf.mxu0
        %v1246 = vadd.f32 %v1028, %v1245
        %v1247 = vpop.f32.mrf.mxu0
        %v1248 = vadd.f32 %v1024, %v1247
        %v1249 = vpop.f32.mrf.mxu0
        %v1250 = vadd.f32 %v1028, %v1249
        %1251 = vmatprep.mubr.bf16.mxu0 0
        %1252 = vmatmul.mubr.bf16.gmra.mxu0 %v1069
        %v1253 = vpop.f32.mrf.mxu0
        %v1254 = vadd.f32 %v1024, %v1253
        %v1255 = vpop.f32.mrf.mxu0
        %v1256 = vadd.f32 %v1028, %v1255
        %v1257 = vpop.f32.mrf.mxu0
        %v1258 = vadd.f32 %v1024, %v1257
        %v1259 = vpop.f32.mrf.mxu0
        %v1260 = vadd.f32 %v1028, %v1259
        %1261 = vmatprep.mubr.bf16.mxu0 0
        %1262 = vmatmul.mubr.bf16.gmra.mxu0 %v1070
        %v1263 = vpop.f32.mrf.mxu0
        %v1264 = vadd.f32 %v1024, %v1263
        %v1265 = vpop.f32.mrf.mxu0
        %v1266 = vadd.f32 %v1028, %v1265
        %v1267 = vpop.f32.mrf.mxu0
        %v1268 = vadd.f32 %v1024, %v1267
        %v1269 = vpop.f32.mrf.mxu0
        %v1270 = vadd.f32 %v1028, %v1269
        %1271 = vdwg.mxu0
        %v1272 = vld [vmem:[%s800] sm:$0xff]
        %v1273 = vld [vmem:[%s800 + $0x8] sm:$0xff]
        %v1274 = vld [vmem:[%s800 + $0x10] sm:$0xff]
        %v1275 = vld [vmem:[%s800 + $0x18] sm:$0xff]
        %v1276 = vld [vmem:[%s800 + $0x20] sm:$0xff]
        %v1277 = vld [vmem:[%s800 + $0x28] sm:$0xff]
        %v1278 = vld [vmem:[%s800 + $0x30] sm:$0xff]
        %v1279 = vld [vmem:[%s800 + $0x38] sm:$0xff]
        %v1280 = vld [vmem:[%s800 + $0x40] sm:$0xff]
        %v1281 = vld [vmem:[%s800 + $0x48] sm:$0xff]
        %v1282 = vld [vmem:[%s800 + $0x50] sm:$0xff]
        %v1283 = vld [vmem:[%s800 + $0x58] sm:$0xff]
        %v1284 = vld [vmem:[%s800 + $0x60] sm:$0xff]
        %v1285 = vld [vmem:[%s800 + $0x68] sm:$0xff]
        %v1286 = vld [vmem:[%s800 + $0x70] sm:$0xff]
        %v1287 = vld [vmem:[%s800 + $0x78] sm:$0xff]
        %v1288 = vld [vmem:[%s800 + $0x80] sm:$0xff]
        %v1289 = vld [vmem:[%s800 + $0x88] sm:$0xff]
        %v1290 = vld [vmem:[%s800 + $0x90] sm:$0xff]
        %v1291 = vld [vmem:[%s800 + $0x98] sm:$0xff]
        %v1292 = vld [vmem:[%s800 + $0xa0] sm:$0xff]
        %v1293 = vld [vmem:[%s800 + $0xa8] sm:$0xff]
        %v1294 = vld [vmem:[%s800 + $0xb0] sm:$0xff]
        %v1295 = vld [vmem:[%s800 + $0xb8] sm:$0xff]
        %v1296 = vld [vmem:[%s800 + $0xc0] sm:$0xff]
        %v1297 = vld [vmem:[%s800 + $0xc8] sm:$0xff]
        %v1298 = vld [vmem:[%s800 + $0xd0] sm:$0xff]
        %v1299 = vld [vmem:[%s800 + $0xd8] sm:$0xff]
        %v1300 = vld [vmem:[%s800 + $0xe0] sm:$0xff]
        %v1301 = vld [vmem:[%s800 + $0xe8] sm:$0xff]
        %v1302 = vld [vmem:[%s800 + $0xf0] sm:$0xff]
        %v1303 = vld [vmem:[%s800 + $0xf8] sm:$0xff]
        %v1304 = vld [vmem:[%s950] sm:$0xf]
        %v1306 = vlaneseq
        %v1307 = vshrl.u32 %v1306, 7
        %v1308 = vsub.s32 0, %v1307
        %v1309 = vrot.slane %v1304, %v1308
        %v1310 = vlaneseq
        %v1311 = vshrl.u32 %v1310, 7
        %v1312 = vsub.s32 1, %v1311
        %v1313 = vrot.slane %v1304, %v1312
        %v1314 = vlaneseq
        %v1315 = vshrl.u32 %v1314, 7
        %v1316 = vsub.s32 2, %v1315
        %v1317 = vrot.slane %v1304, %v1316
        %v1318 = vlaneseq
        %v1319 = vshrl.u32 %v1318, 7
        %v1320 = vsub.s32 3, %v1319
        %v1321 = vrot.slane %v1304, %v1320
        %v1342 = vunpack.c.l.b16 %v987
        %v1343 = vunpack.c.l.b16 %v988
        %v1344 = vunpack.c.l.b16 %v989
        %v1345 = vunpack.c.l.b16 %v990
        %v1346 = vunpack.c.l.b16 %v991
        %v1347 = vunpack.c.l.b16 %v992
        %v1348 = vunpack.c.l.b16 %v993
        %v1349 = vunpack.c.l.b16 %v994
        %v1350 = vunpack.c.l.b16 %v995
        %v1351 = vunpack.c.l.b16 %v996
        %v1352 = vunpack.c.l.b16 %v997
        %v1353 = vunpack.c.l.b16 %v998
        %v1354 = vunpack.c.l.b16 %v999
        %v1355 = vunpack.c.l.b16 %v1000
        %v1356 = vunpack.c.l.b16 %v1001
        %v1357 = vunpack.c.l.b16 %v1002
        %v1358 = vpack.c.b16 %v1343, %v1342
        %v1359 = vpack.c.b16 %v1345, %v1344
        %v1360 = vpack.c.b16 %v1347, %v1346
        %v1361 = vpack.c.b16 %v1349, %v1348
        %v1362 = vpack.c.b16 %v1351, %v1350
        %v1363 = vpack.c.b16 %v1353, %v1352
        %v1364 = vpack.c.b16 %v1355, %v1354
        %v1365 = vpack.c.b16 %v1357, %v1356
        %v1406 = vunpack.c.l.b16 %v1272
        %v1407 = vunpack.c.h.b16 %v1272
        %v1408 = vunpack.c.l.b16 %v1273
        %v1409 = vunpack.c.h.b16 %v1273
        %v1410 = vunpack.c.l.b16 %v1274
        %v1411 = vunpack.c.h.b16 %v1274
        %v1412 = vunpack.c.l.b16 %v1275
        %v1413 = vunpack.c.h.b16 %v1275
        %v1414 = vunpack.c.l.b16 %v1276
        %v1415 = vunpack.c.h.b16 %v1276
        %v1416 = vunpack.c.l.b16 %v1277
        %v1417 = vunpack.c.h.b16 %v1277
        %v1418 = vunpack.c.l.b16 %v1278
        %v1419 = vunpack.c.h.b16 %v1278
        %v1420 = vunpack.c.l.b16 %v1279
        %v1421 = vunpack.c.h.b16 %v1279
        %v1422 = vunpack.c.l.b16 %v1280
        %v1423 = vunpack.c.h.b16 %v1280
        %v1424 = vunpack.c.l.b16 %v1281
        %v1425 = vunpack.c.h.b16 %v1281
        %v1426 = vunpack.c.l.b16 %v1282
        %v1427 = vunpack.c.h.b16 %v1282
        %v1428 = vunpack.c.l.b16 %v1283
        %v1429 = vunpack.c.h.b16 %v1283
        %v1430 = vunpack.c.l.b16 %v1284
        %v1431 = vunpack.c.h.b16 %v1284
        %v1432 = vunpack.c.l.b16 %v1285
        %v1433 = vunpack.c.h.b16 %v1285
        %v1434 = vunpack.c.l.b16 %v1286
        %v1435 = vunpack.c.h.b16 %v1286
        %v1436 = vunpack.c.l.b16 %v1287
        %v1437 = vunpack.c.h.b16 %v1287
        %v1438 = vunpack.c.l.b16 %v1288
        %v1439 = vunpack.c.h.b16 %v1288
        %v1440 = vunpack.c.l.b16 %v1289
        %v1441 = vunpack.c.h.b16 %v1289
        %v1442 = vunpack.c.l.b16 %v1290
        %v1443 = vunpack.c.h.b16 %v1290
        %v1444 = vunpack.c.l.b16 %v1291
        %v1445 = vunpack.c.h.b16 %v1291
        %v1446 = vunpack.c.l.b16 %v1292
        %v1447 = vunpack.c.h.b16 %v1292
        %v1448 = vunpack.c.l.b16 %v1293
        %v1449 = vunpack.c.h.b16 %v1293
        %v1450 = vunpack.c.l.b16 %v1294
        %v1451 = vunpack.c.h.b16 %v1294
        %v1452 = vunpack.c.l.b16 %v1295
        %v1453 = vunpack.c.h.b16 %v1295
        %v1454 = vunpack.c.l.b16 %v1296
        %v1455 = vunpack.c.h.b16 %v1296
        %v1456 = vunpack.c.l.b16 %v1297
        %v1457 = vunpack.c.h.b16 %v1297
        %v1458 = vunpack.c.l.b16 %v1298
        %v1459 = vunpack.c.h.b16 %v1298
        %v1460 = vunpack.c.l.b16 %v1299
        %v1461 = vunpack.c.h.b16 %v1299
        %v1462 = vunpack.c.l.b16 %v1300
        %v1463 = vunpack.c.h.b16 %v1300
        %v1464 = vunpack.c.l.b16 %v1301
        %v1465 = vunpack.c.h.b16 %v1301
        %v1466 = vunpack.c.l.b16 %v1302
        %v1467 = vunpack.c.h.b16 %v1302
        %v1468 = vunpack.c.l.b16 %v1303
        %v1469 = vunpack.c.h.b16 %v1303
        %v1470 = vpack.c.b16 %v1410, %v1406
        %v1471 = vpack.c.b16 %v1411, %v1407
        %v1472 = vpack.c.b16 %v1412, %v1408
        %v1473 = vpack.c.b16 %v1413, %v1409
        %v1474 = vpack.c.b16 %v1418, %v1414
        %v1475 = vpack.c.b16 %v1419, %v1415
        %v1476 = vpack.c.b16 %v1420, %v1416
        %v1477 = vpack.c.b16 %v1421, %v1417
        %v1478 = vpack.c.b16 %v1426, %v1422
        %v1479 = vpack.c.b16 %v1427, %v1423
        %v1480 = vpack.c.b16 %v1428, %v1424
        %v1481 = vpack.c.b16 %v1429, %v1425
        %v1482 = vpack.c.b16 %v1434, %v1430
        %v1483 = vpack.c.b16 %v1435, %v1431
        %v1484 = vpack.c.b16 %v1436, %v1432
        %v1485 = vpack.c.b16 %v1437, %v1433
        %v1486 = vpack.c.b16 %v1442, %v1438
        %v1487 = vpack.c.b16 %v1443, %v1439
        %v1488 = vpack.c.b16 %v1444, %v1440
        %v1489 = vpack.c.b16 %v1445, %v1441
        %v1490 = vpack.c.b16 %v1450, %v1446
        %v1491 = vpack.c.b16 %v1451, %v1447
        %v1492 = vpack.c.b16 %v1452, %v1448
        %v1493 = vpack.c.b16 %v1453, %v1449
        %v1494 = vpack.c.b16 %v1458, %v1454
        %v1495 = vpack.c.b16 %v1459, %v1455
        %v1496 = vpack.c.b16 %v1460, %v1456
        %v1497 = vpack.c.b16 %v1461, %v1457
        %v1498 = vpack.c.b16 %v1466, %v1462
        %v1499 = vpack.c.b16 %v1467, %v1463
        %v1500 = vpack.c.b16 %v1468, %v1464
        %v1501 = vpack.c.b16 %v1469, %v1465
        %1534 = vmatprep.subr.bf16.mxu0 %v1499
        %1535 = vmatpush1.bf16.msra.mxu0 %v1498
        %1536 = vmatprep.subr.bf16.mxu0 %v1495
        %1537 = vmatpush1.bf16.msra.mxu0 %v1494
        %1538 = vmatprep.subr.bf16.mxu0 %v1491
        %1539 = vmatpush1.bf16.msra.mxu0 %v1490
        %1540 = vmatprep.subr.bf16.mxu0 %v1487
        %1541 = vmatpush1.bf16.msra.mxu0 %v1486
        %1542 = vmatprep.subr.bf16.mxu0 %v1483
        %1543 = vmatpush1.bf16.msra.mxu0 %v1482
        %1544 = vmatprep.subr.bf16.mxu0 %v1479
        %1545 = vmatpush1.bf16.msra.mxu0 %v1478
        %1546 = vmatprep.subr.bf16.mxu0 %v1475
        %1547 = vmatpush1.bf16.msra.mxu0 %v1474
        %1548 = vmatprep.subr.bf16.mxu0 %v1471
        %1549 = vmatpush1.bf16.msra.mxu0 %v1470
        %1550 = vmatprep.subr.bf16.mxu0 0
        %1551 = vmatpush2.bf16.msra.mxu0 0
        %1552 = vmatprep.subr.bf16.mxu0 0
        %1553 = vmatpush2.bf16.msra.mxu0 0
        %1554 = vmatprep.subr.bf16.mxu0 0
        %1555 = vmatpush2.bf16.msra.mxu0 0
        %1556 = vmatprep.subr.bf16.mxu0 0
        %1557 = vmatpush2.bf16.msra.mxu0 0
        %1558 = vmatprep.subr.bf16.mxu0 0
        %1559 = vmatpush2.bf16.msra.mxu0 0
        %1560 = vmatprep.subr.bf16.mxu0 0
        %1561 = vmatpush2.bf16.msra.mxu0 0
        %1562 = vmatprep.subr.bf16.mxu0 0
        %1563 = vmatpush2.bf16.msra.mxu0 0
        %1564 = vmatprep.subr.bf16.mxu0 0
        %1565 = vmatpush2.bf16.msra.mxu0 0
        %1566 = vmatprep.mubr.bf16.mxu0 0
        %1567 = vmatmul.mubr.bf16.gmra.mxu0 %v1358
        %v1568 = vpop.f32.mrf.mxu0
        %v1569 = vadd.f32 %v1309, %v1568
        %v1570 = vpop.f32.mrf.mxu0
        %v1571 = vadd.f32 %v1313, %v1570
        %v1572 = vpop.f32.mrf.mxu0
        %v1573 = vadd.f32 %v1309, %v1572
        %v1574 = vpop.f32.mrf.mxu0
        %v1575 = vadd.f32 %v1313, %v1574
        %1576 = vmatprep.mubr.bf16.mxu0 0
        %1577 = vmatmul.mubr.bf16.gmra.mxu0 %v1359
        %v1578 = vpop.f32.mrf.mxu0
        %v1579 = vadd.f32 %v1309, %v1578
        %v1580 = vpop.f32.mrf.mxu0
        %v1581 = vadd.f32 %v1313, %v1580
        %v1582 = vpop.f32.mrf.mxu0
        %v1583 = vadd.f32 %v1309, %v1582
        %v1584 = vpop.f32.mrf.mxu0
        %v1585 = vadd.f32 %v1313, %v1584
        %1586 = vmatprep.mubr.bf16.mxu0 0
        %1587 = vmatmul.mubr.bf16.gmra.mxu0 %v1360
        %v1588 = vpop.f32.mrf.mxu0
        %v1589 = vadd.f32 %v1309, %v1588
        %v1590 = vpop.f32.mrf.mxu0
        %v1591 = vadd.f32 %v1313, %v1590
        %v1592 = vpop.f32.mrf.mxu0
        %v1593 = vadd.f32 %v1309, %v1592
        %v1594 = vpop.f32.mrf.mxu0
        %v1595 = vadd.f32 %v1313, %v1594
        %1596 = vmatprep.mubr.bf16.mxu0 0
        %1597 = vmatmul.mubr.bf16.gmra.mxu0 %v1361
        %v1598 = vpop.f32.mrf.mxu0
        %v1599 = vadd.f32 %v1309, %v1598
        %v1600 = vpop.f32.mrf.mxu0
        %v1601 = vadd.f32 %v1313, %v1600
        %v1602 = vpop.f32.mrf.mxu0
        %v1603 = vadd.f32 %v1309, %v1602
        %v1604 = vpop.f32.mrf.mxu0
        %v1605 = vadd.f32 %v1313, %v1604
        %1606 = vmatprep.mubr.bf16.mxu0 0
        %1607 = vmatmul.mubr.bf16.gmra.mxu0 %v1362
        %v1608 = vpop.f32.mrf.mxu0
        %v1609 = vadd.f32 %v1309, %v1608
        %v1610 = vpop.f32.mrf.mxu0
        %v1611 = vadd.f32 %v1313, %v1610
        %v1612 = vpop.f32.mrf.mxu0
        %v1613 = vadd.f32 %v1309, %v1612
        %v1614 = vpop.f32.mrf.mxu0
        %v1615 = vadd.f32 %v1313, %v1614
        %1616 = vmatprep.mubr.bf16.mxu0 0
        %1617 = vmatmul.mubr.bf16.gmra.mxu0 %v1363
        %v1618 = vpop.f32.mrf.mxu0
        %v1619 = vadd.f32 %v1309, %v1618
        %v1620 = vpop.f32.mrf.mxu0
        %v1621 = vadd.f32 %v1313, %v1620
        %v1622 = vpop.f32.mrf.mxu0
        %v1623 = vadd.f32 %v1309, %v1622
        %v1624 = vpop.f32.mrf.mxu0
        %v1625 = vadd.f32 %v1313, %v1624
        %1626 = vmatprep.mubr.bf16.mxu0 0
        %1627 = vmatmul.mubr.bf16.gmra.mxu0 %v1364
        %v1628 = vpop.f32.mrf.mxu0
        %v1629 = vadd.f32 %v1309, %v1628
        %v1630 = vpop.f32.mrf.mxu0
        %v1631 = vadd.f32 %v1313, %v1630
        %v1632 = vpop.f32.mrf.mxu0
        %v1633 = vadd.f32 %v1309, %v1632
        %v1634 = vpop.f32.mrf.mxu0
        %v1635 = vadd.f32 %v1313, %v1634
        %1636 = vmatprep.mubr.bf16.mxu0 0
        %1637 = vmatmul.mubr.bf16.gmra.mxu0 %v1365
        %v1638 = vpop.f32.mrf.mxu0
        %v1639 = vadd.f32 %v1309, %v1638
        %v1640 = vpop.f32.mrf.mxu0
        %v1641 = vadd.f32 %v1313, %v1640
        %v1642 = vpop.f32.mrf.mxu0
        %v1643 = vadd.f32 %v1309, %v1642
        %v1644 = vpop.f32.mrf.mxu0
        %v1645 = vadd.f32 %v1313, %v1644
        %1646 = vdwg.mxu0
        %1647 = vmatprep.subr.bf16.mxu0 %v1501
        %1648 = vmatpush1.bf16.msra.mxu0 %v1500
        %1649 = vmatprep.subr.bf16.mxu0 %v1497
        %1650 = vmatpush1.bf16.msra.mxu0 %v1496
        %1651 = vmatprep.subr.bf16.mxu0 %v1493
        %1652 = vmatpush1.bf16.msra.mxu0 %v1492
        %1653 = vmatprep.subr.bf16.mxu0 %v1489
        %1654 = vmatpush1.bf16.msra.mxu0 %v1488
        %1655 = vmatprep.subr.bf16.mxu0 %v1485
        %1656 = vmatpush1.bf16.msra.mxu0 %v1484
        %1657 = vmatprep.subr.bf16.mxu0 %v1481
        %1658 = vmatpush1.bf16.msra.mxu0 %v1480
        %1659 = vmatprep.subr.bf16.mxu0 %v1477
        %1660 = vmatpush1.bf16.msra.mxu0 %v1476
        %1661 = vmatprep.subr.bf16.mxu0 %v1473
        %1662 = vmatpush1.bf16.msra.mxu0 %v1472
        %1663 = vmatprep.subr.bf16.mxu0 0
        %1664 = vmatpush2.bf16.msra.mxu0 0
        %1665 = vmatprep.subr.bf16.mxu0 0
        %1666 = vmatpush2.bf16.msra.mxu0 0
        %1667 = vmatprep.subr.bf16.mxu0 0
        %1668 = vmatpush2.bf16.msra.mxu0 0
        %1669 = vmatprep.subr.bf16.mxu0 0
        %1670 = vmatpush2.bf16.msra.mxu0 0
        %1671 = vmatprep.subr.bf16.mxu0 0
        %1672 = vmatpush2.bf16.msra.mxu0 0
        %1673 = vmatprep.subr.bf16.mxu0 0
        %1674 = vmatpush2.bf16.msra.mxu0 0
        %1675 = vmatprep.subr.bf16.mxu0 0
        %1676 = vmatpush2.bf16.msra.mxu0 0
        %1677 = vmatprep.subr.bf16.mxu0 0
        %1678 = vmatpush2.bf16.msra.mxu0 0
        %1679 = vmatprep.mubr.bf16.mxu0 0
        %1680 = vmatmul.mubr.bf16.gmra.mxu0 %v1358
        %v1681 = vpop.f32.mrf.mxu0
        %v1682 = vadd.f32 %v1317, %v1681
        %v1683 = vpop.f32.mrf.mxu0
        %v1684 = vadd.f32 %v1321, %v1683
        %v1685 = vpop.f32.mrf.mxu0
        %v1686 = vadd.f32 %v1317, %v1685
        %v1687 = vpop.f32.mrf.mxu0
        %v1688 = vadd.f32 %v1321, %v1687
        %1689 = vmatprep.mubr.bf16.mxu0 0
        %1690 = vmatmul.mubr.bf16.gmra.mxu0 %v1359
        %v1691 = vpop.f32.mrf.mxu0
        %v1692 = vadd.f32 %v1317, %v1691
        %v1693 = vpop.f32.mrf.mxu0
        %v1694 = vadd.f32 %v1321, %v1693
        %v1695 = vpop.f32.mrf.mxu0
        %v1696 = vadd.f32 %v1317, %v1695
        %v1697 = vpop.f32.mrf.mxu0
        %v1698 = vadd.f32 %v1321, %v1697
        %1699 = vmatprep.mubr.bf16.mxu0 0
        %1700 = vmatmul.mubr.bf16.gmra.mxu0 %v1360
        %v1701 = vpop.f32.mrf.mxu0
        %v1702 = vadd.f32 %v1317, %v1701
        %v1703 = vpop.f32.mrf.mxu0
        %v1704 = vadd.f32 %v1321, %v1703
        %v1705 = vpop.f32.mrf.mxu0
        %v1706 = vadd.f32 %v1317, %v1705
        %v1707 = vpop.f32.mrf.mxu0
        %v1708 = vadd.f32 %v1321, %v1707
        %1709 = vmatprep.mubr.bf16.mxu0 0
        %1710 = vmatmul.mubr.bf16.gmra.mxu0 %v1361
        %v1711 = vpop.f32.mrf.mxu0
        %v1712 = vadd.f32 %v1317, %v1711
        %v1713 = vpop.f32.mrf.mxu0
        %v1714 = vadd.f32 %v1321, %v1713
        %v1715 = vpop.f32.mrf.mxu0
        %v1716 = vadd.f32 %v1317, %v1715
        %v1717 = vpop.f32.mrf.mxu0
        %v1718 = vadd.f32 %v1321, %v1717
        %1719 = vmatprep.mubr.bf16.mxu0 0
        %1720 = vmatmul.mubr.bf16.gmra.mxu0 %v1362
        %v1721 = vpop.f32.mrf.mxu0
        %v1722 = vadd.f32 %v1317, %v1721
        %v1723 = vpop.f32.mrf.mxu0
        %v1724 = vadd.f32 %v1321, %v1723
        %v1725 = vpop.f32.mrf.mxu0
        %v1726 = vadd.f32 %v1317, %v1725
        %v1727 = vpop.f32.mrf.mxu0
        %v1728 = vadd.f32 %v1321, %v1727
        %1729 = vmatprep.mubr.bf16.mxu0 0
        %1730 = vmatmul.mubr.bf16.gmra.mxu0 %v1363
        %v1731 = vpop.f32.mrf.mxu0
        %v1732 = vadd.f32 %v1317, %v1731
        %v1733 = vpop.f32.mrf.mxu0
        %v1734 = vadd.f32 %v1321, %v1733
        %v1735 = vpop.f32.mrf.mxu0
        %v1736 = vadd.f32 %v1317, %v1735
        %v1737 = vpop.f32.mrf.mxu0
        %v1738 = vadd.f32 %v1321, %v1737
        %1739 = vmatprep.mubr.bf16.mxu0 0
        %1740 = vmatmul.mubr.bf16.gmra.mxu0 %v1364
        %v1741 = vpop.f32.mrf.mxu0
        %v1742 = vadd.f32 %v1317, %v1741
        %v1743 = vpop.f32.mrf.mxu0
        %v1744 = vadd.f32 %v1321, %v1743
        %v1745 = vpop.f32.mrf.mxu0
        %v1746 = vadd.f32 %v1317, %v1745
        %v1747 = vpop.f32.mrf.mxu0
        %v1748 = vadd.f32 %v1321, %v1747
        %1749 = vmatprep.mubr.bf16.mxu0 0
        %1750 = vmatmul.mubr.bf16.gmra.mxu0 %v1365
        %v1751 = vpop.f32.mrf.mxu0
        %v1752 = vadd.f32 %v1317, %v1751
        %v1753 = vpop.f32.mrf.mxu0
        %v1754 = vadd.f32 %v1321, %v1753
        %v1755 = vpop.f32.mrf.mxu0
        %v1756 = vadd.f32 %v1317, %v1755
        %v1757 = vpop.f32.mrf.mxu0
        %v1758 = vadd.f32 %v1321, %v1757
        %1759 = vdwg.mxu0
        %v1760 = vpack.c.bf16 %v1198, %v1194
        %v1761 = vpack.c.bf16 %v1208, %v1204
        %v1762 = vpack.c.bf16 %v1218, %v1214
        %v1763 = vpack.c.bf16 %v1228, %v1224
        %v1764 = vpack.c.bf16 %v1238, %v1234
        %v1765 = vpack.c.bf16 %v1248, %v1244
        %v1766 = vpack.c.bf16 %v1258, %v1254
        %v1767 = vpack.c.bf16 %v1268, %v1264
        %v1768 = vpack.c.bf16 %v1573, %v1569
        %v1769 = vpack.c.bf16 %v1583, %v1579
        %v1770 = vpack.c.bf16 %v1593, %v1589
        %v1771 = vpack.c.bf16 %v1603, %v1599
        %v1772 = vpack.c.bf16 %v1613, %v1609
        %v1773 = vpack.c.bf16 %v1623, %v1619
        %v1774 = vpack.c.bf16 %v1633, %v1629
        %v1775 = vpack.c.bf16 %v1643, %v1639
        %v1776 = vpack.c.bf16 %v1686, %v1682
        %v1777 = vpack.c.bf16 %v1696, %v1692
        %v1778 = vpack.c.bf16 %v1706, %v1702
        %v1779 = vpack.c.bf16 %v1716, %v1712
        %v1780 = vpack.c.bf16 %v1726, %v1722
        %v1781 = vpack.c.bf16 %v1736, %v1732
        %v1782 = vpack.c.bf16 %v1746, %v1742
        %v1783 = vpack.c.bf16 %v1756, %v1752
        %1784 = vmatprep.subr.bf16.mxu0 0
        %1785 = vmatpush1.bf16.xpose.msra.mxu0 %v1775
        %1786 = vmatprep.subr.bf16.mxu0 0
        %1787 = vmatpush1.bf16.xpose.msra.mxu0 %v1774
        %1788 = vmatprep.subr.bf16.mxu0 0
        %1789 = vmatpush1.bf16.xpose.msra.mxu0 %v1773
        %1790 = vmatprep.subr.bf16.mxu0 0
        %1791 = vmatpush1.bf16.xpose.msra.mxu0 %v1772
        %1792 = vmatprep.subr.bf16.mxu0 0
        %1793 = vmatpush1.bf16.xpose.msra.mxu0 %v1771
        %1794 = vmatprep.subr.bf16.mxu0 0
        %1795 = vmatpush1.bf16.xpose.msra.mxu0 %v1770
        %1796 = vmatprep.subr.bf16.mxu0 0
        %1797 = vmatpush1.bf16.xpose.msra.mxu0 %v1769
        %1798 = vmatprep.subr.bf16.mxu0 0
        %1799 = vmatpush1.bf16.xpose.msra.mxu0 %v1768
        %1800 = vmatprep.subr.bf16.mxu0 0
        %1801 = vmatpush2.bf16.xpose.msra.mxu0 0
        %1802 = vmatprep.subr.bf16.mxu0 0
        %1803 = vmatpush2.bf16.xpose.msra.mxu0 0
        %1804 = vmatprep.subr.bf16.mxu0 0
        %1805 = vmatpush2.bf16.xpose.msra.mxu0 0
        %1806 = vmatprep.subr.bf16.mxu0 0
        %1807 = vmatpush2.bf16.xpose.msra.mxu0 0
        %1808 = vmatprep.subr.bf16.mxu0 0
        %1809 = vmatpush2.bf16.xpose.msra.mxu0 0
        %1810 = vmatprep.subr.bf16.mxu0 0
        %1811 = vmatpush2.bf16.xpose.msra.mxu0 0
        %1812 = vmatprep.subr.bf16.mxu0 0
        %1813 = vmatpush2.bf16.xpose.msra.mxu0 0
        %1814 = vmatprep.subr.bf16.mxu0 0
        %1815 = vmatpush2.bf16.xpose.msra.mxu0 0
        %1816 = vmatprep.mubr.bf16.mxu0 0
        %1817 = vmatmul.mubr.bf16.gmra.mxu0 %v1760
        %v1818 = vpop.f32.mrf.mxu0
        %v1819 = vadd.f32 0.0, %v1818
        %v1820 = vpop.f32.mrf.mxu0
        %v1821 = vpop.f32.mrf.mxu0
        %v1822 = vadd.f32 0.0, %v1821
        %v1823 = vpop.f32.mrf.mxu0
        %1824 = vmatprep.mubr.bf16.mxu0 0
        %1825 = vmatmul.mubr.bf16.gmra.mxu0 %v1761
        %v1826 = vpop.f32.mrf.mxu0
        %v1827 = vadd.f32 0.0, %v1826
        %v1828 = vpop.f32.mrf.mxu0
        %v1829 = vpop.f32.mrf.mxu0
        %v1830 = vadd.f32 0.0, %v1829
        %v1831 = vpop.f32.mrf.mxu0
        %1832 = vmatprep.mubr.bf16.mxu0 0
        %1833 = vmatmul.mubr.bf16.gmra.mxu0 %v1762
        %v1834 = vpop.f32.mrf.mxu0
        %v1835 = vadd.f32 0.0, %v1834
        %v1836 = vpop.f32.mrf.mxu0
        %v1837 = vpop.f32.mrf.mxu0
        %v1838 = vadd.f32 0.0, %v1837
        %v1839 = vpop.f32.mrf.mxu0
        %1840 = vmatprep.mubr.bf16.mxu0 0
        %1841 = vmatmul.mubr.bf16.gmra.mxu0 %v1763
        %v1842 = vpop.f32.mrf.mxu0
        %v1843 = vadd.f32 0.0, %v1842
        %v1844 = vpop.f32.mrf.mxu0
        %v1845 = vpop.f32.mrf.mxu0
        %v1846 = vadd.f32 0.0, %v1845
        %v1847 = vpop.f32.mrf.mxu0
        %1848 = vmatprep.mubr.bf16.mxu0 0
        %1849 = vmatmul.mubr.bf16.gmra.mxu0 %v1764
        %v1850 = vpop.f32.mrf.mxu0
        %v1851 = vadd.f32 0.0, %v1850
        %v1852 = vpop.f32.mrf.mxu0
        %v1853 = vpop.f32.mrf.mxu0
        %v1854 = vadd.f32 0.0, %v1853
        %v1855 = vpop.f32.mrf.mxu0
        %1856 = vmatprep.mubr.bf16.mxu0 0
        %1857 = vmatmul.mubr.bf16.gmra.mxu0 %v1765
        %v1858 = vpop.f32.mrf.mxu0
        %v1859 = vadd.f32 0.0, %v1858
        %v1860 = vpop.f32.mrf.mxu0
        %v1861 = vpop.f32.mrf.mxu0
        %v1862 = vadd.f32 0.0, %v1861
        %v1863 = vpop.f32.mrf.mxu0
        %1864 = vmatprep.mubr.bf16.mxu0 0
        %1865 = vmatmul.mubr.bf16.gmra.mxu0 %v1766
        %v1866 = vpop.f32.mrf.mxu0
        %v1867 = vadd.f32 0.0, %v1866
        %v1868 = vpop.f32.mrf.mxu0
        %v1869 = vpop.f32.mrf.mxu0
        %v1870 = vadd.f32 0.0, %v1869
        %v1871 = vpop.f32.mrf.mxu0
        %1872 = vmatprep.mubr.bf16.mxu0 0
        %1873 = vmatmul.mubr.bf16.gmra.mxu0 %v1767
        %v1874 = vpop.f32.mrf.mxu0
        %v1875 = vadd.f32 0.0, %v1874
        %v1876 = vpop.f32.mrf.mxu0
        %v1877 = vpop.f32.mrf.mxu0
        %v1878 = vadd.f32 0.0, %v1877
        %v1879 = vpop.f32.mrf.mxu0
        %1880 = vdwg.mxu0
        %1881 = vmax.xlane.f32.xlu0 %v1819
        %v1882 = vpop.xlane.xlu0 %1881
        %1883 = vmax.xlane.f32.xlu0 %v1822
        %v1884 = vpop.xlane.xlu0 %1883
        %1885 = vmax.xlane.f32.xlu0 %v1827
        %v1886 = vpop.xlane.xlu0 %1885
        %1887 = vmax.xlane.f32.xlu0 %v1830
        %v1888 = vpop.xlane.xlu0 %1887
        %1889 = vmax.xlane.f32.xlu0 %v1835
        %v1890 = vpop.xlane.xlu0 %1889
        %1891 = vmax.xlane.f32.xlu0 %v1838
        %v1892 = vpop.xlane.xlu0 %1891
        %1893 = vmax.xlane.f32.xlu0 %v1843
        %v1894 = vpop.xlane.xlu0 %1893
        %1895 = vmax.xlane.f32.xlu0 %v1846
        %v1896 = vpop.xlane.xlu0 %1895
        %1897 = vmax.xlane.f32.xlu0 %v1851
        %v1898 = vpop.xlane.xlu0 %1897
        %1899 = vmax.xlane.f32.xlu0 %v1854
        %v1900 = vpop.xlane.xlu0 %1899
        %1901 = vmax.xlane.f32.xlu0 %v1859
        %v1902 = vpop.xlane.xlu0 %1901
        %1903 = vmax.xlane.f32.xlu0 %v1862
        %v1904 = vpop.xlane.xlu0 %1903
        %1905 = vmax.xlane.f32.xlu0 %v1867
        %v1906 = vpop.xlane.xlu0 %1905
        %1907 = vmax.xlane.f32.xlu0 %v1870
        %v1908 = vpop.xlane.xlu0 %1907
        %1909 = vmax.xlane.f32.xlu0 %v1875
        %v1910 = vpop.xlane.xlu0 %1909
        %1911 = vmax.xlane.f32.xlu0 %v1878
        %v1912 = vpop.xlane.xlu0 %1911
        %v1913 = vsub.f32 %v1819, %v1882
        %v1914 = vsub.f32 %v1822, %v1884
        %v1915 = vsub.f32 %v1827, %v1886
        %v1916 = vsub.f32 %v1830, %v1888
        %v1917 = vsub.f32 %v1835, %v1890
        %v1918 = vsub.f32 %v1838, %v1892
        %v1919 = vsub.f32 %v1843, %v1894
        %v1920 = vsub.f32 %v1846, %v1896
        %v1921 = vsub.f32 %v1851, %v1898
        %v1922 = vsub.f32 %v1854, %v1900
        %v1923 = vsub.f32 %v1859, %v1902
        %v1924 = vsub.f32 %v1862, %v1904
        %v1925 = vsub.f32 %v1867, %v1906
        %v1926 = vsub.f32 %v1870, %v1908
        %v1927 = vsub.f32 %v1875, %v1910
        %v1928 = vsub.f32 %v1878, %v1912
        %v1929 = vmul.f32 %v1913, 1.442695
        %v1930 = vpow.pop %v1929
        %v1931 = vmul.f32 %v1914, 1.442695
        %v1932 = vpow.pop %v1931
        %v1933 = vmul.f32 %v1915, 1.442695
        %v1934 = vpow.pop %v1933
        %v1935 = vmul.f32 %v1916, 1.442695
        %v1936 = vpow.pop %v1935
        %v1937 = vmul.f32 %v1917, 1.442695
        %v1938 = vpow.pop %v1937
        %v1939 = vmul.f32 %v1918, 1.442695
        %v1940 = vpow.pop %v1939
        %v1941 = vmul.f32 %v1919, 1.442695
        %v1942 = vpow.pop %v1941
        %v1943 = vmul.f32 %v1920, 1.442695
        %v1944 = vpow.pop %v1943
        %v1945 = vmul.f32 %v1921, 1.442695
        %v1946 = vpow.pop %v1945
        %v1947 = vmul.f32 %v1922, 1.442695
        %v1948 = vpow.pop %v1947
        %v1949 = vmul.f32 %v1923, 1.442695
        %v1950 = vpow.pop %v1949
        %v1951 = vmul.f32 %v1924, 1.442695
        %v1952 = vpow.pop %v1951
        %v1953 = vmul.f32 %v1925, 1.442695
        %v1954 = vpow.pop %v1953
        %v1955 = vmul.f32 %v1926, 1.442695
        %v1956 = vpow.pop %v1955
        %v1957 = vmul.f32 %v1927, 1.442695
        %v1958 = vpow.pop %v1957
        %v1959 = vmul.f32 %v1928, 1.442695
        %v1960 = vpow.pop %v1959
        %1961 = vadd.xlane.f32.xlu0 %v1930
        %v1962 = vpop.xlane.xlu0 %1961
        %1963 = vadd.xlane.f32.xlu0 %v1932
        %v1964 = vpop.xlane.xlu0 %1963
        %1965 = vadd.xlane.f32.xlu0 %v1934
        %v1966 = vpop.xlane.xlu0 %1965
        %1967 = vadd.xlane.f32.xlu0 %v1936
        %v1968 = vpop.xlane.xlu0 %1967
        %1969 = vadd.xlane.f32.xlu0 %v1938
        %v1970 = vpop.xlane.xlu0 %1969
        %1971 = vadd.xlane.f32.xlu0 %v1940
        %v1972 = vpop.xlane.xlu0 %1971
        %1973 = vadd.xlane.f32.xlu0 %v1942
        %v1974 = vpop.xlane.xlu0 %1973
        %1975 = vadd.xlane.f32.xlu0 %v1944
        %v1976 = vpop.xlane.xlu0 %1975
        %1977 = vadd.xlane.f32.xlu0 %v1946
        %v1978 = vpop.xlane.xlu0 %1977
        %1979 = vadd.xlane.f32.xlu0 %v1948
        %v1980 = vpop.xlane.xlu0 %1979
        %1981 = vadd.xlane.f32.xlu0 %v1950
        %v1982 = vpop.xlane.xlu0 %1981
        %1983 = vadd.xlane.f32.xlu0 %v1952
        %v1984 = vpop.xlane.xlu0 %1983
        %1985 = vadd.xlane.f32.xlu0 %v1954
        %v1986 = vpop.xlane.xlu0 %1985
        %1987 = vadd.xlane.f32.xlu0 %v1956
        %v1988 = vpop.xlane.xlu0 %1987
        %1989 = vadd.xlane.f32.xlu0 %v1958
        %v1990 = vpop.xlane.xlu0 %1989
        %1991 = vadd.xlane.f32.xlu0 %v1960
        %v1992 = vpop.xlane.xlu0 %1991
        %v1993 = vrcp.pop %v1962
        %v1994 = vrcp.pop %v1964
        %v1995 = vrcp.pop %v1966
        %v1996 = vrcp.pop %v1968
        %v1997 = vrcp.pop %v1970
        %v1998 = vrcp.pop %v1972
        %v1999 = vrcp.pop %v1974
        %v2000 = vrcp.pop %v1976
        %v2001 = vrcp.pop %v1978
        %v2002 = vrcp.pop %v1980
        %v2003 = vrcp.pop %v1982
        %v2004 = vrcp.pop %v1984
        %v2005 = vrcp.pop %v1986
        %v2006 = vrcp.pop %v1988
        %v2007 = vrcp.pop %v1990
        %v2008 = vrcp.pop %v1992
        %v2009 = vmul.f32 %v1930, %v1993
        %v2010 = vmul.f32 %v1932, %v1994
        %v2011 = vmul.f32 %v1934, %v1995
        %v2012 = vmul.f32 %v1936, %v1996
        %v2013 = vmul.f32 %v1938, %v1997
        %v2014 = vmul.f32 %v1940, %v1998
        %v2015 = vmul.f32 %v1942, %v1999
        %v2016 = vmul.f32 %v1944, %v2000
        %v2017 = vmul.f32 %v1946, %v2001
        %v2018 = vmul.f32 %v1948, %v2002
        %v2019 = vmul.f32 %v1950, %v2003
        %v2020 = vmul.f32 %v1952, %v2004
        %v2021 = vmul.f32 %v1954, %v2005
        %v2022 = vmul.f32 %v1956, %v2006
        %v2023 = vmul.f32 %v1958, %v2007
        %v2024 = vmul.f32 %v1960, %v2008
        %v2025 = vpack.c.bf16 %v2010, %v2009
        %v2026 = vpack.c.bf16 %v2012, %v2011
        %v2027 = vpack.c.bf16 %v2014, %v2013
        %v2028 = vpack.c.bf16 %v2016, %v2015
        %v2029 = vpack.c.bf16 %v2018, %v2017
        %v2030 = vpack.c.bf16 %v2020, %v2019
        %v2031 = vpack.c.bf16 %v2022, %v2021
        %v2032 = vpack.c.bf16 %v2024, %v2023
        %2033 = vmatprep.subr.bf16.mxu0 0
        %2034 = vmatpush1.bf16.msra.mxu0 %v1783
        %2035 = vmatprep.subr.bf16.mxu0 0
        %2036 = vmatpush1.bf16.msra.mxu0 %v1782
        %2037 = vmatprep.subr.bf16.mxu0 0
        %2038 = vmatpush1.bf16.msra.mxu0 %v1781
        %2039 = vmatprep.subr.bf16.mxu0 0
        %2040 = vmatpush1.bf16.msra.mxu0 %v1780
        %2041 = vmatprep.subr.bf16.mxu0 0
        %2042 = vmatpush1.bf16.msra.mxu0 %v1779
        %2043 = vmatprep.subr.bf16.mxu0 0
        %2044 = vmatpush1.bf16.msra.mxu0 %v1778
        %2045 = vmatprep.subr.bf16.mxu0 0
        %2046 = vmatpush1.bf16.msra.mxu0 %v1777
        %2047 = vmatprep.subr.bf16.mxu0 0
        %2048 = vmatpush1.bf16.msra.mxu0 %v1776
        %2049 = vmatprep.subr.bf16.mxu0 0
        %2050 = vmatpush2.bf16.msra.mxu0 0
        %2051 = vmatprep.subr.bf16.mxu0 0
        %2052 = vmatpush2.bf16.msra.mxu0 0
        %2053 = vmatprep.subr.bf16.mxu0 0
        %2054 = vmatpush2.bf16.msra.mxu0 0
        %2055 = vmatprep.subr.bf16.mxu0 0
        %2056 = vmatpush2.bf16.msra.mxu0 0
        %2057 = vmatprep.subr.bf16.mxu0 0
        %2058 = vmatpush2.bf16.msra.mxu0 0
        %2059 = vmatprep.subr.bf16.mxu0 0
        %2060 = vmatpush2.bf16.msra.mxu0 0
        %2061 = vmatprep.subr.bf16.mxu0 0
        %2062 = vmatpush2.bf16.msra.mxu0 0
        %2063 = vmatprep.subr.bf16.mxu0 0
        %2064 = vmatpush2.bf16.msra.mxu0 0
        %2065 = vmatprep.mubr.bf16.mxu0 0
        %2066 = vmatmul.mubr.bf16.gmra.mxu0 %v2025
        %v2067 = vpop.f32.mrf.mxu0
        %v2068 = vadd.f32 0.0, %v2067
        %v2069 = vpop.f32.mrf.mxu0
        %v2070 = vpop.f32.mrf.mxu0
        %v2071 = vadd.f32 0.0, %v2070
        %v2072 = vpop.f32.mrf.mxu0
        %2073 = vmatprep.mubr.bf16.mxu0 0
        %2074 = vmatmul.mubr.bf16.gmra.mxu0 %v2026
        %v2075 = vpop.f32.mrf.mxu0
        %v2076 = vadd.f32 0.0, %v2075
        %v2077 = vpop.f32.mrf.mxu0
        %v2078 = vpop.f32.mrf.mxu0
        %v2079 = vadd.f32 0.0, %v2078
        %v2080 = vpop.f32.mrf.mxu0
        %2081 = vmatprep.mubr.bf16.mxu0 0
        %2082 = vmatmul.mubr.bf16.gmra.mxu0 %v2027
        %v2083 = vpop.f32.mrf.mxu0
        %v2084 = vadd.f32 0.0, %v2083
        %v2085 = vpop.f32.mrf.mxu0
        %v2086 = vpop.f32.mrf.mxu0
        %v2087 = vadd.f32 0.0, %v2086
        %v2088 = vpop.f32.mrf.mxu0
        %2089 = vmatprep.mubr.bf16.mxu0 0
        %2090 = vmatmul.mubr.bf16.gmra.mxu0 %v2028
        %v2091 = vpop.f32.mrf.mxu0
        %v2092 = vadd.f32 0.0, %v2091
        %v2093 = vpop.f32.mrf.mxu0
        %v2094 = vpop.f32.mrf.mxu0
        %v2095 = vadd.f32 0.0, %v2094
        %v2096 = vpop.f32.mrf.mxu0
        %2097 = vmatprep.mubr.bf16.mxu0 0
        %2098 = vmatmul.mubr.bf16.gmra.mxu0 %v2029
        %v2099 = vpop.f32.mrf.mxu0
        %v2100 = vadd.f32 0.0, %v2099
        %v2101 = vpop.f32.mrf.mxu0
        %v2102 = vpop.f32.mrf.mxu0
        %v2103 = vadd.f32 0.0, %v2102
        %v2104 = vpop.f32.mrf.mxu0
        %2105 = vmatprep.mubr.bf16.mxu0 0
        %2106 = vmatmul.mubr.bf16.gmra.mxu0 %v2030
        %v2107 = vpop.f32.mrf.mxu0
        %v2108 = vadd.f32 0.0, %v2107
        %v2109 = vpop.f32.mrf.mxu0
        %v2110 = vpop.f32.mrf.mxu0
        %v2111 = vadd.f32 0.0, %v2110
        %v2112 = vpop.f32.mrf.mxu0
        %2113 = vmatprep.mubr.bf16.mxu0 0
        %2114 = vmatmul.mubr.bf16.gmra.mxu0 %v2031
        %v2115 = vpop.f32.mrf.mxu0
        %v2116 = vadd.f32 0.0, %v2115
        %v2117 = vpop.f32.mrf.mxu0
        %v2118 = vpop.f32.mrf.mxu0
        %v2119 = vadd.f32 0.0, %v2118
        %v2120 = vpop.f32.mrf.mxu0
        %2121 = vmatprep.mubr.bf16.mxu0 0
        %2122 = vmatmul.mubr.bf16.gmra.mxu0 %v2032
        %v2123 = vpop.f32.mrf.mxu0
        %v2124 = vadd.f32 0.0, %v2123
        %v2125 = vpop.f32.mrf.mxu0
        %v2126 = vpop.f32.mrf.mxu0
        %v2127 = vadd.f32 0.0, %v2126
        %v2128 = vpop.f32.mrf.mxu0
        %2129 = vdwg.mxu0
        %v2130 = vpack.c.bf16 %v2071, %v2068
        %v2131 = vpack.c.bf16 %v2079, %v2076
        %v2132 = vpack.c.bf16 %v2087, %v2084
        %v2133 = vpack.c.bf16 %v2095, %v2092
        %v2134 = vpack.c.bf16 %v2103, %v2100
        %v2135 = vpack.c.bf16 %v2111, %v2108
        %v2136 = vpack.c.bf16 %v2119, %v2116
        %v2137 = vpack.c.bf16 %v2127, %v2124
        %v2138 = vpack.c.bf16 %v1200, %v1196
        %v2139 = vpack.c.bf16 %v1210, %v1206
        %v2140 = vpack.c.bf16 %v1220, %v1216
        %v2141 = vpack.c.bf16 %v1230, %v1226
        %v2142 = vpack.c.bf16 %v1240, %v1236
        %v2143 = vpack.c.bf16 %v1250, %v1246
        %v2144 = vpack.c.bf16 %v1260, %v1256
        %v2145 = vpack.c.bf16 %v1270, %v1266
        %v2146 = vpack.c.bf16 %v1575, %v1571
        %v2147 = vpack.c.bf16 %v1585, %v1581
        %v2148 = vpack.c.bf16 %v1595, %v1591
        %v2149 = vpack.c.bf16 %v1605, %v1601
        %v2150 = vpack.c.bf16 %v1615, %v1611
        %v2151 = vpack.c.bf16 %v1625, %v1621
        %v2152 = vpack.c.bf16 %v1635, %v1631
        %v2153 = vpack.c.bf16 %v1645, %v1641
        %v2154 = vpack.c.bf16 %v1688, %v1684
        %v2155 = vpack.c.bf16 %v1698, %v1694
        %v2156 = vpack.c.bf16 %v1708, %v1704
        %v2157 = vpack.c.bf16 %v1718, %v1714
        %v2158 = vpack.c.bf16 %v1728, %v1724
        %v2159 = vpack.c.bf16 %v1738, %v1734
        %v2160 = vpack.c.bf16 %v1748, %v1744
        %v2161 = vpack.c.bf16 %v1758, %v1754
        %2162 = vmatprep.subr.bf16.mxu0 0
        %2163 = vmatpush1.bf16.xpose.msra.mxu0 %v2153
        %2164 = vmatprep.subr.bf16.mxu0 0
        %2165 = vmatpush1.bf16.xpose.msra.mxu0 %v2152
        %2166 = vmatprep.subr.bf16.mxu0 0
        %2167 = vmatpush1.bf16.xpose.msra.mxu0 %v2151
        %2168 = vmatprep.subr.bf16.mxu0 0
        %2169 = vmatpush1.bf16.xpose.msra.mxu0 %v2150
        %2170 = vmatprep.subr.bf16.mxu0 0
        %2171 = vmatpush1.bf16.xpose.msra.mxu0 %v2149
        %2172 = vmatprep.subr.bf16.mxu0 0
        %2173 = vmatpush1.bf16.xpose.msra.mxu0 %v2148
        %2174 = vmatprep.subr.bf16.mxu0 0
        %2175 = vmatpush1.bf16.xpose.msra.mxu0 %v2147
        %2176 = vmatprep.subr.bf16.mxu0 0
        %2177 = vmatpush1.bf16.xpose.msra.mxu0 %v2146
        %2178 = vmatprep.subr.bf16.mxu0 0
        %2179 = vmatpush2.bf16.xpose.msra.mxu0 0
        %2180 = vmatprep.subr.bf16.mxu0 0
        %2181 = vmatpush2.bf16.xpose.msra.mxu0 0
        %2182 = vmatprep.subr.bf16.mxu0 0
        %2183 = vmatpush2.bf16.xpose.msra.mxu0 0
        %2184 = vmatprep.subr.bf16.mxu0 0
        %2185 = vmatpush2.bf16.xpose.msra.mxu0 0
        %2186 = vmatprep.subr.bf16.mxu0 0
        %2187 = vmatpush2.bf16.xpose.msra.mxu0 0
        %2188 = vmatprep.subr.bf16.mxu0 0
        %2189 = vmatpush2.bf16.xpose.msra.mxu0 0
        %2190 = vmatprep.subr.bf16.mxu0 0
        %2191 = vmatpush2.bf16.xpose.msra.mxu0 0
        %2192 = vmatprep.subr.bf16.mxu0 0
        %2193 = vmatpush2.bf16.xpose.msra.mxu0 0
        %2194 = vmatprep.mubr.bf16.mxu0 0
        %2195 = vmatmul.mubr.bf16.gmra.mxu0 %v2138
        %v2196 = vpop.f32.mrf.mxu0
        %v2197 = vadd.f32 0.0, %v2196
        %v2198 = vpop.f32.mrf.mxu0
        %v2199 = vpop.f32.mrf.mxu0
        %v2200 = vadd.f32 0.0, %v2199
        %v2201 = vpop.f32.mrf.mxu0
        %2202 = vmatprep.mubr.bf16.mxu0 0
        %2203 = vmatmul.mubr.bf16.gmra.mxu0 %v2139
        %v2204 = vpop.f32.mrf.mxu0
        %v2205 = vadd.f32 0.0, %v2204
        %v2206 = vpop.f32.mrf.mxu0
        %v2207 = vpop.f32.mrf.mxu0
        %v2208 = vadd.f32 0.0, %v2207
        %v2209 = vpop.f32.mrf.mxu0
        %2210 = vmatprep.mubr.bf16.mxu0 0
        %2211 = vmatmul.mubr.bf16.gmra.mxu0 %v2140
        %v2212 = vpop.f32.mrf.mxu0
        %v2213 = vadd.f32 0.0, %v2212
        %v2214 = vpop.f32.mrf.mxu0
        %v2215 = vpop.f32.mrf.mxu0
        %v2216 = vadd.f32 0.0, %v2215
        %v2217 = vpop.f32.mrf.mxu0
        %2218 = vmatprep.mubr.bf16.mxu0 0
        %2219 = vmatmul.mubr.bf16.gmra.mxu0 %v2141
        %v2220 = vpop.f32.mrf.mxu0
        %v2221 = vadd.f32 0.0, %v2220
        %v2222 = vpop.f32.mrf.mxu0
        %v2223 = vpop.f32.mrf.mxu0
        %v2224 = vadd.f32 0.0, %v2223
        %v2225 = vpop.f32.mrf.mxu0
        %2226 = vmatprep.mubr.bf16.mxu0 0
        %2227 = vmatmul.mubr.bf16.gmra.mxu0 %v2142
        %v2228 = vpop.f32.mrf.mxu0
        %v2229 = vadd.f32 0.0, %v2228
        %v2230 = vpop.f32.mrf.mxu0
        %v2231 = vpop.f32.mrf.mxu0
        %v2232 = vadd.f32 0.0, %v2231
        %v2233 = vpop.f32.mrf.mxu0
        %2234 = vmatprep.mubr.bf16.mxu0 0
        %2235 = vmatmul.mubr.bf16.gmra.mxu0 %v2143
        %v2236 = vpop.f32.mrf.mxu0
        %v2237 = vadd.f32 0.0, %v2236
        %v2238 = vpop.f32.mrf.mxu0
        %v2239 = vpop.f32.mrf.mxu0
        %v2240 = vadd.f32 0.0, %v2239
        %v2241 = vpop.f32.mrf.mxu0
        %2242 = vmatprep.mubr.bf16.mxu0 0
        %2243 = vmatmul.mubr.bf16.gmra.mxu0 %v2144
        %v2244 = vpop.f32.mrf.mxu0
        %v2245 = vadd.f32 0.0, %v2244
        %v2246 = vpop.f32.mrf.mxu0
        %v2247 = vpop.f32.mrf.mxu0
        %v2248 = vadd.f32 0.0, %v2247
        %v2249 = vpop.f32.mrf.mxu0
        %2250 = vmatprep.mubr.bf16.mxu0 0
        %2251 = vmatmul.mubr.bf16.gmra.mxu0 %v2145
        %v2252 = vpop.f32.mrf.mxu0
        %v2253 = vadd.f32 0.0, %v2252
        %v2254 = vpop.f32.mrf.mxu0
        %v2255 = vpop.f32.mrf.mxu0
        %v2256 = vadd.f32 0.0, %v2255
        %v2257 = vpop.f32.mrf.mxu0
        %2258 = vdwg.mxu0
        %2259 = vmax.xlane.f32.xlu0 %v2197
        %v2260 = vpop.xlane.xlu0 %2259
        %2261 = vmax.xlane.f32.xlu0 %v2200
        %v2262 = vpop.xlane.xlu0 %2261
        %2263 = vmax.xlane.f32.xlu0 %v2205
        %v2264 = vpop.xlane.xlu0 %2263
        %2265 = vmax.xlane.f32.xlu0 %v2208
        %v2266 = vpop.xlane.xlu0 %2265
        %2267 = vmax.xlane.f32.xlu0 %v2213
        %v2268 = vpop.xlane.xlu0 %2267
        %2269 = vmax.xlane.f32.xlu0 %v2216
        %v2270 = vpop.xlane.xlu0 %2269
        %2271 = vmax.xlane.f32.xlu0 %v2221
        %v2272 = vpop.xlane.xlu0 %2271
        %2273 = vmax.xlane.f32.xlu0 %v2224
        %v2274 = vpop.xlane.xlu0 %2273
        %2275 = vmax.xlane.f32.xlu0 %v2229
        %v2276 = vpop.xlane.xlu0 %2275
        %2277 = vmax.xlane.f32.xlu0 %v2232
        %v2278 = vpop.xlane.xlu0 %2277
        %2279 = vmax.xlane.f32.xlu0 %v2237
        %v2280 = vpop.xlane.xlu0 %2279
        %2281 = vmax.xlane.f32.xlu0 %v2240
        %v2282 = vpop.xlane.xlu0 %2281
        %2283 = vmax.xlane.f32.xlu0 %v2245
        %v2284 = vpop.xlane.xlu0 %2283
        %2285 = vmax.xlane.f32.xlu0 %v2248
        %v2286 = vpop.xlane.xlu0 %2285
        %2287 = vmax.xlane.f32.xlu0 %v2253
        %v2288 = vpop.xlane.xlu0 %2287
        %2289 = vmax.xlane.f32.xlu0 %v2256
        %v2290 = vpop.xlane.xlu0 %2289
        %v2291 = vsub.f32 %v2197, %v2260
        %v2292 = vsub.f32 %v2200, %v2262
        %v2293 = vsub.f32 %v2205, %v2264
        %v2294 = vsub.f32 %v2208, %v2266
        %v2295 = vsub.f32 %v2213, %v2268
        %v2296 = vsub.f32 %v2216, %v2270
        %v2297 = vsub.f32 %v2221, %v2272
        %v2298 = vsub.f32 %v2224, %v2274
        %v2299 = vsub.f32 %v2229, %v2276
        %v2300 = vsub.f32 %v2232, %v2278
        %v2301 = vsub.f32 %v2237, %v2280
        %v2302 = vsub.f32 %v2240, %v2282
        %v2303 = vsub.f32 %v2245, %v2284
        %v2304 = vsub.f32 %v2248, %v2286
        %v2305 = vsub.f32 %v2253, %v2288
        %v2306 = vsub.f32 %v2256, %v2290
        %v2307 = vmul.f32 %v2291, 1.442695
        %v2308 = vpow.pop %v2307
        %v2309 = vmul.f32 %v2292, 1.442695
        %v2310 = vpow.pop %v2309
        %v2311 = vmul.f32 %v2293, 1.442695
        %v2312 = vpow.pop %v2311
        %v2313 = vmul.f32 %v2294, 1.442695
        %v2314 = vpow.pop %v2313
        %v2315 = vmul.f32 %v2295, 1.442695
        %v2316 = vpow.pop %v2315
        %v2317 = vmul.f32 %v2296, 1.442695
        %v2318 = vpow.pop %v2317
        %v2319 = vmul.f32 %v2297, 1.442695
        %v2320 = vpow.pop %v2319
        %v2321 = vmul.f32 %v2298, 1.442695
        %v2322 = vpow.pop %v2321
        %v2323 = vmul.f32 %v2299, 1.442695
        %v2324 = vpow.pop %v2323
        %v2325 = vmul.f32 %v2300, 1.442695
        %v2326 = vpow.pop %v2325
        %v2327 = vmul.f32 %v2301, 1.442695
        %v2328 = vpow.pop %v2327
        %v2329 = vmul.f32 %v2302, 1.442695
        %v2330 = vpow.pop %v2329
        %v2331 = vmul.f32 %v2303, 1.442695
        %v2332 = vpow.pop %v2331
        %v2333 = vmul.f32 %v2304, 1.442695
        %v2334 = vpow.pop %v2333
        %v2335 = vmul.f32 %v2305, 1.442695
        %v2336 = vpow.pop %v2335
        %v2337 = vmul.f32 %v2306, 1.442695
        %v2338 = vpow.pop %v2337
        %2339 = vadd.xlane.f32.xlu0 %v2308
        %v2340 = vpop.xlane.xlu0 %2339
        %2341 = vadd.xlane.f32.xlu0 %v2310
        %v2342 = vpop.xlane.xlu0 %2341
        %2343 = vadd.xlane.f32.xlu0 %v2312
        %v2344 = vpop.xlane.xlu0 %2343
        %2345 = vadd.xlane.f32.xlu0 %v2314
        %v2346 = vpop.xlane.xlu0 %2345
        %2347 = vadd.xlane.f32.xlu0 %v2316
        %v2348 = vpop.xlane.xlu0 %2347
        %2349 = vadd.xlane.f32.xlu0 %v2318
        %v2350 = vpop.xlane.xlu0 %2349
        %2351 = vadd.xlane.f32.xlu0 %v2320
        %v2352 = vpop.xlane.xlu0 %2351
        %2353 = vadd.xlane.f32.xlu0 %v2322
        %v2354 = vpop.xlane.xlu0 %2353
        %2355 = vadd.xlane.f32.xlu0 %v2324
        %v2356 = vpop.xlane.xlu0 %2355
        %2357 = vadd.xlane.f32.xlu0 %v2326
        %v2358 = vpop.xlane.xlu0 %2357
        %2359 = vadd.xlane.f32.xlu0 %v2328
        %v2360 = vpop.xlane.xlu0 %2359
        %2361 = vadd.xlane.f32.xlu0 %v2330
        %v2362 = vpop.xlane.xlu0 %2361
        %2363 = vadd.xlane.f32.xlu0 %v2332
        %v2364 = vpop.xlane.xlu0 %2363
        %2365 = vadd.xlane.f32.xlu0 %v2334
        %v2366 = vpop.xlane.xlu0 %2365
        %2367 = vadd.xlane.f32.xlu0 %v2336
        %v2368 = vpop.xlane.xlu0 %2367
        %2369 = vadd.xlane.f32.xlu0 %v2338
        %v2370 = vpop.xlane.xlu0 %2369
        %v2371 = vrcp.pop %v2340
        %v2372 = vrcp.pop %v2342
        %v2373 = vrcp.pop %v2344
        %v2374 = vrcp.pop %v2346
        %v2375 = vrcp.pop %v2348
        %v2376 = vrcp.pop %v2350
        %v2377 = vrcp.pop %v2352
        %v2378 = vrcp.pop %v2354
        %v2379 = vrcp.pop %v2356
        %v2380 = vrcp.pop %v2358
        %v2381 = vrcp.pop %v2360
        %v2382 = vrcp.pop %v2362
        %v2383 = vrcp.pop %v2364
        %v2384 = vrcp.pop %v2366
        %v2385 = vrcp.pop %v2368
        %v2386 = vrcp.pop %v2370
        %v2387 = vmul.f32 %v2308, %v2371
        %v2388 = vmul.f32 %v2310, %v2372
        %v2389 = vmul.f32 %v2312, %v2373
        %v2390 = vmul.f32 %v2314, %v2374
        %v2391 = vmul.f32 %v2316, %v2375
        %v2392 = vmul.f32 %v2318, %v2376
        %v2393 = vmul.f32 %v2320, %v2377
        %v2394 = vmul.f32 %v2322, %v2378
        %v2395 = vmul.f32 %v2324, %v2379
        %v2396 = vmul.f32 %v2326, %v2380
        %v2397 = vmul.f32 %v2328, %v2381
        %v2398 = vmul.f32 %v2330, %v2382
        %v2399 = vmul.f32 %v2332, %v2383
        %v2400 = vmul.f32 %v2334, %v2384
        %v2401 = vmul.f32 %v2336, %v2385
        %v2402 = vmul.f32 %v2338, %v2386
        %v2403 = vpack.c.bf16 %v2388, %v2387
        %v2404 = vpack.c.bf16 %v2390, %v2389
        %v2405 = vpack.c.bf16 %v2392, %v2391
        %v2406 = vpack.c.bf16 %v2394, %v2393
        %v2407 = vpack.c.bf16 %v2396, %v2395
        %v2408 = vpack.c.bf16 %v2398, %v2397
        %v2409 = vpack.c.bf16 %v2400, %v2399
        %v2410 = vpack.c.bf16 %v2402, %v2401
        %2411 = vmatprep.subr.bf16.mxu0 0
        %2412 = vmatpush1.bf16.msra.mxu0 %v2161
        %2413 = vmatprep.subr.bf16.mxu0 0
        %2414 = vmatpush1.bf16.msra.mxu0 %v2160
        %2415 = vmatprep.subr.bf16.mxu0 0
        %2416 = vmatpush1.bf16.msra.mxu0 %v2159
        %2417 = vmatprep.subr.bf16.mxu0 0
        %2418 = vmatpush1.bf16.msra.mxu0 %v2158
        %2419 = vmatprep.subr.bf16.mxu0 0
        %2420 = vmatpush1.bf16.msra.mxu0 %v2157
        %2421 = vmatprep.subr.bf16.mxu0 0
        %2422 = vmatpush1.bf16.msra.mxu0 %v2156
        %2423 = vmatprep.subr.bf16.mxu0 0
        %2424 = vmatpush1.bf16.msra.mxu0 %v2155
        %2425 = vmatprep.subr.bf16.mxu0 0
        %2426 = vmatpush1.bf16.msra.mxu0 %v2154
        %2427 = vmatprep.subr.bf16.mxu0 0
        %2428 = vmatpush2.bf16.msra.mxu0 0
        %2429 = vmatprep.subr.bf16.mxu0 0
        %2430 = vmatpush2.bf16.msra.mxu0 0
        %2431 = vmatprep.subr.bf16.mxu0 0
        %2432 = vmatpush2.bf16.msra.mxu0 0
        %2433 = vmatprep.subr.bf16.mxu0 0
        %2434 = vmatpush2.bf16.msra.mxu0 0
        %2435 = vmatprep.subr.bf16.mxu0 0
        %2436 = vmatpush2.bf16.msra.mxu0 0
        %2437 = vmatprep.subr.bf16.mxu0 0
        %2438 = vmatpush2.bf16.msra.mxu0 0
        %2439 = vmatprep.subr.bf16.mxu0 0
        %2440 = vmatpush2.bf16.msra.mxu0 0
        %2441 = vmatprep.subr.bf16.mxu0 0
        %2442 = vmatpush2.bf16.msra.mxu0 0
        %2443 = vmatprep.mubr.bf16.mxu0 0
        %2444 = vmatmul.mubr.bf16.gmra.mxu0 %v2403
        %v2445 = vpop.f32.mrf.mxu0
        %v2446 = vadd.f32 0.0, %v2445
        %v2447 = vpop.f32.mrf.mxu0
        %v2448 = vpop.f32.mrf.mxu0
        %v2449 = vadd.f32 0.0, %v2448
        %v2450 = vpop.f32.mrf.mxu0
        %2451 = vmatprep.mubr.bf16.mxu0 0
        %2452 = vmatmul.mubr.bf16.gmra.mxu0 %v2404
        %v2453 = vpop.f32.mrf.mxu0
        %v2454 = vadd.f32 0.0, %v2453
        %v2455 = vpop.f32.mrf.mxu0
        %v2456 = vpop.f32.mrf.mxu0
        %v2457 = vadd.f32 0.0, %v2456
        %v2458 = vpop.f32.mrf.mxu0
        %2459 = vmatprep.mubr.bf16.mxu0 0
        %2460 = vmatmul.mubr.bf16.gmra.mxu0 %v2405
        %v2461 = vpop.f32.mrf.mxu0
        %v2462 = vadd.f32 0.0, %v2461
        %v2463 = vpop.f32.mrf.mxu0
        %v2464 = vpop.f32.mrf.mxu0
        %v2465 = vadd.f32 0.0, %v2464
        %v2466 = vpop.f32.mrf.mxu0
        %2467 = vmatprep.mubr.bf16.mxu0 0
        %2468 = vmatmul.mubr.bf16.gmra.mxu0 %v2406
        %v2469 = vpop.f32.mrf.mxu0
        %v2470 = vadd.f32 0.0, %v2469
        %v2471 = vpop.f32.mrf.mxu0
        %v2472 = vpop.f32.mrf.mxu0
        %v2473 = vadd.f32 0.0, %v2472
        %v2474 = vpop.f32.mrf.mxu0
        %2475 = vmatprep.mubr.bf16.mxu0 0
        %2476 = vmatmul.mubr.bf16.gmra.mxu0 %v2407
        %v2477 = vpop.f32.mrf.mxu0
        %v2478 = vadd.f32 0.0, %v2477
        %v2479 = vpop.f32.mrf.mxu0
        %v2480 = vpop.f32.mrf.mxu0
        %v2481 = vadd.f32 0.0, %v2480
        %v2482 = vpop.f32.mrf.mxu0
        %2483 = vmatprep.mubr.bf16.mxu0 0
        %2484 = vmatmul.mubr.bf16.gmra.mxu0 %v2408
        %v2485 = vpop.f32.mrf.mxu0
        %v2486 = vadd.f32 0.0, %v2485
        %v2487 = vpop.f32.mrf.mxu0
        %v2488 = vpop.f32.mrf.mxu0
        %v2489 = vadd.f32 0.0, %v2488
        %v2490 = vpop.f32.mrf.mxu0
        %2491 = vmatprep.mubr.bf16.mxu0 0
        %2492 = vmatmul.mubr.bf16.gmra.mxu0 %v2409
        %v2493 = vpop.f32.mrf.mxu0
        %v2494 = vadd.f32 0.0, %v2493
        %v2495 = vpop.f32.mrf.mxu0
        %v2496 = vpop.f32.mrf.mxu0
        %v2497 = vadd.f32 0.0, %v2496
        %v2498 = vpop.f32.mrf.mxu0
        %2499 = vmatprep.mubr.bf16.mxu0 0
        %2500 = vmatmul.mubr.bf16.gmra.mxu0 %v2410
        %v2501 = vpop.f32.mrf.mxu0
        %v2502 = vadd.f32 0.0, %v2501
        %v2503 = vpop.f32.mrf.mxu0
        %v2504 = vpop.f32.mrf.mxu0
        %v2505 = vadd.f32 0.0, %v2504
        %v2506 = vpop.f32.mrf.mxu0
        %2507 = vdwg.mxu0
        %v2508 = vpack.c.bf16 %v2449, %v2446
        %v2509 = vpack.c.bf16 %v2457, %v2454
        %v2510 = vpack.c.bf16 %v2465, %v2462
        %v2511 = vpack.c.bf16 %v2473, %v2470
        %v2512 = vpack.c.bf16 %v2481, %v2478
        %v2513 = vpack.c.bf16 %v2489, %v2486
        %v2514 = vpack.c.bf16 %v2497, %v2494
        %v2515 = vpack.c.bf16 %v2505, %v2502
        %v2516 = vld [vmem:[%s809] sm:$0xf]
        %v2517 = vld [vmem:[%s809 + $0x4] sm:$0xf]
        %v2518 = vld [vmem:[%s809 + $0x8] sm:$0xf]
        %v2519 = vld [vmem:[%s809 + $0xc] sm:$0xf]
        %v2520 = vld [vmem:[%s809 + $0x10] sm:$0xf]
        %v2521 = vld [vmem:[%s809 + $0x14] sm:$0xf]
        %v2522 = vld [vmem:[%s809 + $0x18] sm:$0xf]
        %v2523 = vld [vmem:[%s809 + $0x1c] sm:$0xf]
        %v2524 = vld [vmem:[%s809 + $0x20] sm:$0xf]
        %v2525 = vld [vmem:[%s809 + $0x24] sm:$0xf]
        %v2526 = vld [vmem:[%s809 + $0x28] sm:$0xf]
        %v2527 = vld [vmem:[%s809 + $0x2c] sm:$0xf]
        %v2528 = vld [vmem:[%s809 + $0x30] sm:$0xf]
        %v2529 = vld [vmem:[%s809 + $0x34] sm:$0xf]
        %v2530 = vld [vmem:[%s809 + $0x38] sm:$0xf]
        %v2531 = vld [vmem:[%s809 + $0x3c] sm:$0xf]
        %v2532 = vld [vmem:[%s809 + $0x40] sm:$0xf]
        %v2533 = vld [vmem:[%s809 + $0x44] sm:$0xf]
        %v2534 = vld [vmem:[%s809 + $0x48] sm:$0xf]
        %v2535 = vld [vmem:[%s809 + $0x4c] sm:$0xf]
        %v2536 = vld [vmem:[%s809 + $0x50] sm:$0xf]
        %v2537 = vld [vmem:[%s809 + $0x54] sm:$0xf]
        %v2538 = vld [vmem:[%s809 + $0x58] sm:$0xf]
        %v2539 = vld [vmem:[%s809 + $0x5c] sm:$0xf]
        %v2540 = vld [vmem:[%s809 + $0x60] sm:$0xf]
        %v2541 = vld [vmem:[%s809 + $0x64] sm:$0xf]
        %v2542 = vld [vmem:[%s809 + $0x68] sm:$0xf]
        %v2543 = vld [vmem:[%s809 + $0x6c] sm:$0xf]
        %v2544 = vld [vmem:[%s809 + $0x70] sm:$0xf]
        %v2545 = vld [vmem:[%s809 + $0x74] sm:$0xf]
        %v2546 = vld [vmem:[%s809 + $0x78] sm:$0xf]
        %v2547 = vld [vmem:[%s809 + $0x7c] sm:$0xf]
        %v2548 = vld [vmem:[%s817] sm:$0x1]
        %v2550 = vlaneseq
        %v2551 = vshrl.u32 %v2550, 7
        %v2552 = vsub.s32 0, %v2551
        %v2553 = vrot.slane %v2548, %v2552
        %v2587 = vunpack.c.l.b16 %v2516
        %v2588 = vunpack.c.l.b16 %v2517
        %v2589 = vunpack.c.l.b16 %v2518
        %v2590 = vunpack.c.l.b16 %v2519
        %v2591 = vunpack.c.l.b16 %v2520
        %v2592 = vunpack.c.l.b16 %v2521
        %v2593 = vunpack.c.l.b16 %v2522
        %v2594 = vunpack.c.l.b16 %v2523
        %v2595 = vunpack.c.l.b16 %v2524
        %v2596 = vunpack.c.l.b16 %v2525
        %v2597 = vunpack.c.l.b16 %v2526
        %v2598 = vunpack.c.l.b16 %v2527
        %v2599 = vunpack.c.l.b16 %v2528
        %v2600 = vunpack.c.l.b16 %v2529
        %v2601 = vunpack.c.l.b16 %v2530
        %v2602 = vunpack.c.l.b16 %v2531
        %v2603 = vunpack.c.l.b16 %v2532
        %v2604 = vunpack.c.l.b16 %v2533
        %v2605 = vunpack.c.l.b16 %v2534
        %v2606 = vunpack.c.l.b16 %v2535
        %v2607 = vunpack.c.l.b16 %v2536
        %v2608 = vunpack.c.l.b16 %v2537
        %v2609 = vunpack.c.l.b16 %v2538
        %v2610 = vunpack.c.l.b16 %v2539
        %v2611 = vunpack.c.l.b16 %v2540
        %v2612 = vunpack.c.l.b16 %v2541
        %v2613 = vunpack.c.l.b16 %v2542
        %v2614 = vunpack.c.l.b16 %v2543
        %v2615 = vunpack.c.l.b16 %v2544
        %v2616 = vunpack.c.l.b16 %v2545
        %v2617 = vunpack.c.l.b16 %v2546
        %v2618 = vunpack.c.l.b16 %v2547
        %v2619 = vpack.c.b16 %v2588, %v2587
        %v2620 = vpack.c.b16 %v2590, %v2589
        %v2621 = vpack.c.b16 %v2592, %v2591
        %v2622 = vpack.c.b16 %v2594, %v2593
        %v2623 = vpack.c.b16 %v2596, %v2595
        %v2624 = vpack.c.b16 %v2598, %v2597
        %v2625 = vpack.c.b16 %v2600, %v2599
        %v2626 = vpack.c.b16 %v2602, %v2601
        %v2627 = vpack.c.b16 %v2604, %v2603
        %v2628 = vpack.c.b16 %v2606, %v2605
        %v2629 = vpack.c.b16 %v2608, %v2607
        %v2630 = vpack.c.b16 %v2610, %v2609
        %v2631 = vpack.c.b16 %v2612, %v2611
        %v2632 = vpack.c.b16 %v2614, %v2613
        %v2633 = vpack.c.b16 %v2616, %v2615
        %v2634 = vpack.c.b16 %v2618, %v2617
        %2651 = vmatprep.subr.bf16.mxu0 0
        %2652 = vmatpush1.bf16.msra.mxu0 %v2626
        %2653 = vmatprep.subr.bf16.mxu0 0
        %2654 = vmatpush1.bf16.msra.mxu0 %v2625
        %2655 = vmatprep.subr.bf16.mxu0 0
        %2656 = vmatpush1.bf16.msra.mxu0 %v2624
        %2657 = vmatprep.subr.bf16.mxu0 0
        %2658 = vmatpush1.bf16.msra.mxu0 %v2623
        %2659 = vmatprep.subr.bf16.mxu0 0
        %2660 = vmatpush1.bf16.msra.mxu0 %v2622
        %2661 = vmatprep.subr.bf16.mxu0 0
        %2662 = vmatpush1.bf16.msra.mxu0 %v2621
        %2663 = vmatprep.subr.bf16.mxu0 0
        %2664 = vmatpush1.bf16.msra.mxu0 %v2620
        %2665 = vmatprep.subr.bf16.mxu0 0
        %2666 = vmatpush1.bf16.msra.mxu0 %v2619
        %2667 = vmatprep.subr.bf16.mxu0 0
        %2668 = vmatpush2.bf16.msra.mxu0 %v2634
        %2669 = vmatprep.subr.bf16.mxu0 0
        %2670 = vmatpush2.bf16.msra.mxu0 %v2633
        %2671 = vmatprep.subr.bf16.mxu0 0
        %2672 = vmatpush2.bf16.msra.mxu0 %v2632
        %2673 = vmatprep.subr.bf16.mxu0 0
        %2674 = vmatpush2.bf16.msra.mxu0 %v2631
        %2675 = vmatprep.subr.bf16.mxu0 0
        %2676 = vmatpush2.bf16.msra.mxu0 %v2630
        %2677 = vmatprep.subr.bf16.mxu0 0
        %2678 = vmatpush2.bf16.msra.mxu0 %v2629
        %2679 = vmatprep.subr.bf16.mxu0 0
        %2680 = vmatpush2.bf16.msra.mxu0 %v2628
        %2681 = vmatprep.subr.bf16.mxu0 0
        %2682 = vmatpush2.bf16.msra.mxu0 %v2627
        %2683 = vmatprep.mubr.bf16.mxu0 %v2508
        %2684 = vmatmul.mubr.bf16.gmra.mxu0 %v2130
        %v2685 = vpop.f32.mrf.mxu0
        %v2686 = vadd.f32 %v2553, %v2685
        %v2687 = vpop.f32.mrf.mxu0
        %v2688 = vpop.f32.mrf.mxu0
        %v2689 = vadd.f32 %v2553, %v2688
        %v2690 = vpop.f32.mrf.mxu0
        %2691 = vmatprep.mubr.bf16.mxu0 %v2509
        %2692 = vmatmul.mubr.bf16.gmra.mxu0 %v2131
        %v2693 = vpop.f32.mrf.mxu0
        %v2694 = vadd.f32 %v2553, %v2693
        %v2695 = vpop.f32.mrf.mxu0
        %v2696 = vpop.f32.mrf.mxu0
        %v2697 = vadd.f32 %v2553, %v2696
        %v2698 = vpop.f32.mrf.mxu0
        %2699 = vmatprep.mubr.bf16.mxu0 %v2510
        %2700 = vmatmul.mubr.bf16.gmra.mxu0 %v2132
        %v2701 = vpop.f32.mrf.mxu0
        %v2702 = vadd.f32 %v2553, %v2701
        %v2703 = vpop.f32.mrf.mxu0
        %v2704 = vpop.f32.mrf.mxu0
        %v2705 = vadd.f32 %v2553, %v2704
        %v2706 = vpop.f32.mrf.mxu0
        %2707 = vmatprep.mubr.bf16.mxu0 %v2511
        %2708 = vmatmul.mubr.bf16.gmra.mxu0 %v2133
        %v2709 = vpop.f32.mrf.mxu0
        %v2710 = vadd.f32 %v2553, %v2709
        %v2711 = vpop.f32.mrf.mxu0
        %v2712 = vpop.f32.mrf.mxu0
        %v2713 = vadd.f32 %v2553, %v2712
        %v2714 = vpop.f32.mrf.mxu0
        %2715 = vmatprep.mubr.bf16.mxu0 %v2512
        %2716 = vmatmul.mubr.bf16.gmra.mxu0 %v2134
        %v2717 = vpop.f32.mrf.mxu0
        %v2718 = vadd.f32 %v2553, %v2717
        %v2719 = vpop.f32.mrf.mxu0
        %v2720 = vpop.f32.mrf.mxu0
        %v2721 = vadd.f32 %v2553, %v2720
        %v2722 = vpop.f32.mrf.mxu0
        %2723 = vmatprep.mubr.bf16.mxu0 %v2513
        %2724 = vmatmul.mubr.bf16.gmra.mxu0 %v2135
        %v2725 = vpop.f32.mrf.mxu0
        %v2726 = vadd.f32 %v2553, %v2725
        %v2727 = vpop.f32.mrf.mxu0
        %v2728 = vpop.f32.mrf.mxu0
        %v2729 = vadd.f32 %v2553, %v2728
        %v2730 = vpop.f32.mrf.mxu0
        %2731 = vmatprep.mubr.bf16.mxu0 %v2514
        %2732 = vmatmul.mubr.bf16.gmra.mxu0 %v2136
        %v2733 = vpop.f32.mrf.mxu0
        %v2734 = vadd.f32 %v2553, %v2733
        %v2735 = vpop.f32.mrf.mxu0
        %v2736 = vpop.f32.mrf.mxu0
        %v2737 = vadd.f32 %v2553, %v2736
        %v2738 = vpop.f32.mrf.mxu0
        %2739 = vmatprep.mubr.bf16.mxu0 %v2515
        %2740 = vmatmul.mubr.bf16.gmra.mxu0 %v2137
        %v2741 = vpop.f32.mrf.mxu0
        %v2742 = vadd.f32 %v2553, %v2741
        %v2743 = vpop.f32.mrf.mxu0
        %v2744 = vpop.f32.mrf.mxu0
        %v2745 = vadd.f32 %v2553, %v2744
        %v2746 = vpop.f32.mrf.mxu0
        %2747 = vdwg.mxu0
        %v2748 = vunpack.c.l.bf16 %v971
        %v2749 = vunpack.c.l.bf16 %v972
        %v2750 = vunpack.c.l.bf16 %v973
        %v2751 = vunpack.c.l.bf16 %v974
        %v2752 = vunpack.c.l.bf16 %v975
        %v2753 = vunpack.c.l.bf16 %v976
        %v2754 = vunpack.c.l.bf16 %v977
        %v2755 = vunpack.c.l.bf16 %v978
        %v2756 = vunpack.c.l.bf16 %v979
        %v2757 = vunpack.c.l.bf16 %v980
        %v2758 = vunpack.c.l.bf16 %v981
        %v2759 = vunpack.c.l.bf16 %v982
        %v2760 = vunpack.c.l.bf16 %v983
        %v2761 = vunpack.c.l.bf16 %v984
        %v2762 = vunpack.c.l.bf16 %v985
        %v2763 = vunpack.c.l.bf16 %v986
        %v2764 = vadd.f32 %v2686, %v2748
        %v2765 = vadd.f32 %v2689, %v2749
        %v2766 = vadd.f32 %v2694, %v2750
        %v2767 = vadd.f32 %v2697, %v2751
        %v2768 = vadd.f32 %v2702, %v2752
        %v2769 = vadd.f32 %v2705, %v2753
        %v2770 = vadd.f32 %v2710, %v2754
        %v2771 = vadd.f32 %v2713, %v2755
        %v2772 = vadd.f32 %v2718, %v2756
        %v2773 = vadd.f32 %v2721, %v2757
        %v2774 = vadd.f32 %v2726, %v2758
        %v2775 = vadd.f32 %v2729, %v2759
        %v2776 = vadd.f32 %v2734, %v2760
        %v2777 = vadd.f32 %v2737, %v2761
        %v2778 = vadd.f32 %v2742, %v2762
        %v2779 = vadd.f32 %v2745, %v2763
        %2780 = vadd.xlane.f32.xlu0 %v2764
        %v2781 = vpop.xlane.xlu0 %2780
        %2782 = vadd.xlane.f32.xlu0 %v2765
        %v2783 = vpop.xlane.xlu0 %2782
        %2784 = vadd.xlane.f32.xlu0 %v2766
        %v2785 = vpop.xlane.xlu0 %2784
        %2786 = vadd.xlane.f32.xlu0 %v2767
        %v2787 = vpop.xlane.xlu0 %2786
        %2788 = vadd.xlane.f32.xlu0 %v2768
        %v2789 = vpop.xlane.xlu0 %2788
        %2790 = vadd.xlane.f32.xlu0 %v2769
        %v2791 = vpop.xlane.xlu0 %2790
        %2792 = vadd.xlane.f32.xlu0 %v2770
        %v2793 = vpop.xlane.xlu0 %2792
        %2794 = vadd.xlane.f32.xlu0 %v2771
        %v2795 = vpop.xlane.xlu0 %2794
        %2796 = vadd.xlane.f32.xlu0 %v2772
        %v2797 = vpop.xlane.xlu0 %2796
        %2798 = vadd.xlane.f32.xlu0 %v2773
        %v2799 = vpop.xlane.xlu0 %2798
        %2800 = vadd.xlane.f32.xlu0 %v2774
        %v2801 = vpop.xlane.xlu0 %2800
        %2802 = vadd.xlane.f32.xlu0 %v2775
        %v2803 = vpop.xlane.xlu0 %2802
        %2804 = vadd.xlane.f32.xlu0 %v2776
        %v2805 = vpop.xlane.xlu0 %2804
        %2806 = vadd.xlane.f32.xlu0 %v2777
        %v2807 = vpop.xlane.xlu0 %2806
        %2808 = vadd.xlane.f32.xlu0 %v2778
        %v2809 = vpop.xlane.xlu0 %2808
        %2810 = vadd.xlane.f32.xlu0 %v2779
        %v2811 = vpop.xlane.xlu0 %2810
        %v2812 = vrcp.pop 128.0
        %v2813 = vmul.f32 %v2781, %v2812
        %v2814 = vmul.f32 %v2783, %v2812
        %v2815 = vmul.f32 %v2785, %v2812
        %v2816 = vmul.f32 %v2787, %v2812
        %v2817 = vmul.f32 %v2789, %v2812
        %v2818 = vmul.f32 %v2791, %v2812
        %v2819 = vmul.f32 %v2793, %v2812
        %v2820 = vmul.f32 %v2795, %v2812
        %v2821 = vmul.f32 %v2797, %v2812
        %v2822 = vmul.f32 %v2799, %v2812
        %v2823 = vmul.f32 %v2801, %v2812
        %v2824 = vmul.f32 %v2803, %v2812
        %v2825 = vmul.f32 %v2805, %v2812
        %v2826 = vmul.f32 %v2807, %v2812
        %v2827 = vmul.f32 %v2809, %v2812
        %v2828 = vmul.f32 %v2811, %v2812
        %v2829 = vsub.f32 %v2764, %v2813
        %v2830 = vsub.f32 %v2765, %v2814
        %v2831 = vsub.f32 %v2766, %v2815
        %v2832 = vsub.f32 %v2767, %v2816
        %v2833 = vsub.f32 %v2768, %v2817
        %v2834 = vsub.f32 %v2769, %v2818
        %v2835 = vsub.f32 %v2770, %v2819
        %v2836 = vsub.f32 %v2771, %v2820
        %v2837 = vsub.f32 %v2772, %v2821
        %v2838 = vsub.f32 %v2773, %v2822
        %v2839 = vsub.f32 %v2774, %v2823
        %v2840 = vsub.f32 %v2775, %v2824
        %v2841 = vsub.f32 %v2776, %v2825
        %v2842 = vsub.f32 %v2777, %v2826
        %v2843 = vsub.f32 %v2778, %v2827
        %v2844 = vsub.f32 %v2779, %v2828
        %v2845 = vmul.f32 %v2829, %v2829
        %v2846 = vmul.f32 %v2830, %v2830
        %v2847 = vmul.f32 %v2831, %v2831
        %v2848 = vmul.f32 %v2832, %v2832
        %v2849 = vmul.f32 %v2833, %v2833
        %v2850 = vmul.f32 %v2834, %v2834
        %v2851 = vmul.f32 %v2835, %v2835
        %v2852 = vmul.f32 %v2836, %v2836
        %v2853 = vmul.f32 %v2837, %v2837
        %v2854 = vmul.f32 %v2838, %v2838
        %v2855 = vmul.f32 %v2839, %v2839
        %v2856 = vmul.f32 %v2840, %v2840
        %v2857 = vmul.f32 %v2841, %v2841
        %v2858 = vmul.f32 %v2842, %v2842
        %v2859 = vmul.f32 %v2843, %v2843
        %v2860 = vmul.f32 %v2844, %v2844
        %2861 = vadd.xlane.f32.xlu0 %v2845
        %v2862 = vpop.xlane.xlu0 %2861
        %2863 = vadd.xlane.f32.xlu0 %v2846
        %v2864 = vpop.xlane.xlu0 %2863
        %2865 = vadd.xlane.f32.xlu0 %v2847
        %v2866 = vpop.xlane.xlu0 %2865
        %2867 = vadd.xlane.f32.xlu0 %v2848
        %v2868 = vpop.xlane.xlu0 %2867
        %2869 = vadd.xlane.f32.xlu0 %v2849
        %v2870 = vpop.xlane.xlu0 %2869
        %2871 = vadd.xlane.f32.xlu0 %v2850
        %v2872 = vpop.xlane.xlu0 %2871
        %2873 = vadd.xlane.f32.xlu0 %v2851
        %v2874 = vpop.xlane.xlu0 %2873
        %2875 = vadd.xlane.f32.xlu0 %v2852
        %v2876 = vpop.xlane.xlu0 %2875
        %2877 = vadd.xlane.f32.xlu0 %v2853
        %v2878 = vpop.xlane.xlu0 %2877
        %2879 = vadd.xlane.f32.xlu0 %v2854
        %v2880 = vpop.xlane.xlu0 %2879
        %2881 = vadd.xlane.f32.xlu0 %v2855
        %v2882 = vpop.xlane.xlu0 %2881
        %2883 = vadd.xlane.f32.xlu0 %v2856
        %v2884 = vpop.xlane.xlu0 %2883
        %2885 = vadd.xlane.f32.xlu0 %v2857
        %v2886 = vpop.xlane.xlu0 %2885
        %2887 = vadd.xlane.f32.xlu0 %v2858
        %v2888 = vpop.xlane.xlu0 %2887
        %2889 = vadd.xlane.f32.xlu0 %v2859
        %v2890 = vpop.xlane.xlu0 %2889
        %2891 = vadd.xlane.f32.xlu0 %v2860
        %v2892 = vpop.xlane.xlu0 %2891
        %v2893 = vmul.f32 %v2862, %v2812
        %v2894 = vmul.f32 %v2864, %v2812
        %v2895 = vmul.f32 %v2866, %v2812
        %v2896 = vmul.f32 %v2868, %v2812
        %v2897 = vmul.f32 %v2870, %v2812
        %v2898 = vmul.f32 %v2872, %v2812
        %v2899 = vmul.f32 %v2874, %v2812
        %v2900 = vmul.f32 %v2876, %v2812
        %v2901 = vmul.f32 %v2878, %v2812
        %v2902 = vmul.f32 %v2880, %v2812
        %v2903 = vmul.f32 %v2882, %v2812
        %v2904 = vmul.f32 %v2884, %v2812
        %v2905 = vmul.f32 %v2886, %v2812
        %v2906 = vmul.f32 %v2888, %v2812
        %v2907 = vmul.f32 %v2890, %v2812
        %v2908 = vmul.f32 %v2892, %v2812
        %v2909 = vadd.f32 %v2893, 1e-05
        %v2910 = vadd.f32 %v2894, 1e-05
        %v2911 = vadd.f32 %v2895, 1e-05
        %v2912 = vadd.f32 %v2896, 1e-05
        %v2913 = vadd.f32 %v2897, 1e-05
        %v2914 = vadd.f32 %v2898, 1e-05
        %v2915 = vadd.f32 %v2899, 1e-05
        %v2916 = vadd.f32 %v2900, 1e-05
        %v2917 = vadd.f32 %v2901, 1e-05
        %v2918 = vadd.f32 %v2902, 1e-05
        %v2919 = vadd.f32 %v2903, 1e-05
        %v2920 = vadd.f32 %v2904, 1e-05
        %v2921 = vadd.f32 %v2905, 1e-05
        %v2922 = vadd.f32 %v2906, 1e-05
        %v2923 = vadd.f32 %v2907, 1e-05
        %v2924 = vadd.f32 %v2908, 1e-05
        %v2925 = vrsqrt.pop %v2909
        %v2926 = vrsqrt.pop %v2910
        %v2927 = vrsqrt.pop %v2911
        %v2928 = vrsqrt.pop %v2912
        %v2929 = vrsqrt.pop %v2913
        %v2930 = vrsqrt.pop %v2914
        %v2931 = vrsqrt.pop %v2915
        %v2932 = vrsqrt.pop %v2916
        %v2933 = vrsqrt.pop %v2917
        %v2934 = vrsqrt.pop %v2918
        %v2935 = vrsqrt.pop %v2919
        %v2936 = vrsqrt.pop %v2920
        %v2937 = vrsqrt.pop %v2921
        %v2938 = vrsqrt.pop %v2922
        %v2939 = vrsqrt.pop %v2923
        %v2940 = vrsqrt.pop %v2924
        %v2941 = vmul.f32 %v2829, %v2925
        %v2942 = vmul.f32 %v2830, %v2926
        %v2943 = vmul.f32 %v2831, %v2927
        %v2944 = vmul.f32 %v2832, %v2928
        %v2945 = vmul.f32 %v2833, %v2929
        %v2946 = vmul.f32 %v2834, %v2930
        %v2947 = vmul.f32 %v2835, %v2931
        %v2948 = vmul.f32 %v2836, %v2932
        %v2949 = vmul.f32 %v2837, %v2933
        %v2950 = vmul.f32 %v2838, %v2934
        %v2951 = vmul.f32 %v2839, %v2935
        %v2952 = vmul.f32 %v2840, %v2936
        %v2953 = vmul.f32 %v2841, %v2937
        %v2954 = vmul.f32 %v2842, %v2938
        %v2955 = vmul.f32 %v2843, %v2939
        %v2956 = vmul.f32 %v2844, %v2940
        %v2957 = vld [vmem:[%s953] sm:$0x1]
        %v2959 = vlaneseq
        %v2960 = vshrl.u32 %v2959, 7
        %v2961 = vsub.s32 0, %v2960
        %v2962 = vrot.slane %v2957, %v2961
        %v2964 = vmul.f32 %v2941, %v2962
        %v2965 = vmul.f32 %v2942, %v2962
        %v2966 = vmul.f32 %v2943, %v2962
        %v2967 = vmul.f32 %v2944, %v2962
        %v2968 = vmul.f32 %v2945, %v2962
        %v2969 = vmul.f32 %v2946, %v2962
        %v2970 = vmul.f32 %v2947, %v2962
        %v2971 = vmul.f32 %v2948, %v2962
        %v2972 = vmul.f32 %v2949, %v2962
        %v2973 = vmul.f32 %v2950, %v2962
        %v2974 = vmul.f32 %v2951, %v2962
        %v2975 = vmul.f32 %v2952, %v2962
        %v2976 = vmul.f32 %v2953, %v2962
        %v2977 = vmul.f32 %v2954, %v2962
        %v2978 = vmul.f32 %v2955, %v2962
        %v2979 = vmul.f32 %v2956, %v2962
        %v2980 = vld [vmem:[%s956] sm:$0x1]
        %v2982 = vlaneseq
        %v2983 = vshrl.u32 %v2982, 7
        %v2984 = vsub.s32 0, %v2983
        %v2985 = vrot.slane %v2980, %v2984
        %v2987 = vadd.f32 %v2964, %v2985
        %v2988 = vadd.f32 %v2965, %v2985
        %v2989 = vadd.f32 %v2966, %v2985
        %v2990 = vadd.f32 %v2967, %v2985
        %v2991 = vadd.f32 %v2968, %v2985
        %v2992 = vadd.f32 %v2969, %v2985
        %v2993 = vadd.f32 %v2970, %v2985
        %v2994 = vadd.f32 %v2971, %v2985
        %v2995 = vadd.f32 %v2972, %v2985
        %v2996 = vadd.f32 %v2973, %v2985
        %v2997 = vadd.f32 %v2974, %v2985
        %v2998 = vadd.f32 %v2975, %v2985
        %v2999 = vadd.f32 %v2976, %v2985
        %v3000 = vadd.f32 %v2977, %v2985
        %v3001 = vadd.f32 %v2978, %v2985
        %v3002 = vadd.f32 %v2979, %v2985
        %v3003 = vpack.c.bf16 %v2988, %v2987
        %v3004 = vpack.c.bf16 %v2990, %v2989
        %v3005 = vpack.c.bf16 %v2992, %v2991
        %v3006 = vpack.c.bf16 %v2994, %v2993
        %v3007 = vpack.c.bf16 %v2996, %v2995
        %v3008 = vpack.c.bf16 %v2998, %v2997
        %v3009 = vpack.c.bf16 %v3000, %v2999
        %v3010 = vpack.c.bf16 %v3002, %v3001
        %v3011 = vld [vmem:[%s826] sm:$0xff]
        %v3012 = vld [vmem:[%s826 + $0x8] sm:$0xff]
        %v3013 = vld [vmem:[%s826 + $0x10] sm:$0xff]
        %v3014 = vld [vmem:[%s826 + $0x18] sm:$0xff]
        %v3015 = vld [vmem:[%s826 + $0x20] sm:$0xff]
        %v3016 = vld [vmem:[%s826 + $0x28] sm:$0xff]
        %v3017 = vld [vmem:[%s826 + $0x30] sm:$0xff]
        %v3018 = vld [vmem:[%s826 + $0x38] sm:$0xff]
        %v3019 = vld [vmem:[%s826 + $0x40] sm:$0xff]
        %v3020 = vld [vmem:[%s826 + $0x48] sm:$0xff]
        %v3021 = vld [vmem:[%s826 + $0x50] sm:$0xff]
        %v3022 = vld [vmem:[%s826 + $0x58] sm:$0xff]
        %v3023 = vld [vmem:[%s826 + $0x60] sm:$0xff]
        %v3024 = vld [vmem:[%s826 + $0x68] sm:$0xff]
        %v3025 = vld [vmem:[%s826 + $0x70] sm:$0xff]
        %v3026 = vld [vmem:[%s826 + $0x78] sm:$0xff]
        %v3027 = vld [vmem:[%s960] sm:$0x3]
        %v3029 = vlaneseq
        %v3030 = vshrl.u32 %v3029, 7
        %v3031 = vsub.s32 0, %v3030
        %v3032 = vrot.slane %v3027, %v3031
        %v3033 = vlaneseq
        %v3034 = vshrl.u32 %v3033, 7
        %v3035 = vsub.s32 1, %v3034
        %v3036 = vrot.slane %v3027, %v3035
        %v3055 = vunpack.c.l.b16 %v3011
        %v3056 = vunpack.c.h.b16 %v3011
        %v3057 = vunpack.c.l.b16 %v3012
        %v3058 = vunpack.c.h.b16 %v3012
        %v3059 = vunpack.c.l.b16 %v3013
        %v3060 = vunpack.c.h.b16 %v3013
        %v3061 = vunpack.c.l.b16 %v3014
        %v3062 = vunpack.c.h.b16 %v3014
        %v3063 = vunpack.c.l.b16 %v3015
        %v3064 = vunpack.c.h.b16 %v3015
        %v3065 = vunpack.c.l.b16 %v3016
        %v3066 = vunpack.c.h.b16 %v3016
        %v3067 = vunpack.c.l.b16 %v3017
        %v3068 = vunpack.c.h.b16 %v3017
        %v3069 = vunpack.c.l.b16 %v3018
        %v3070 = vunpack.c.h.b16 %v3018
        %v3071 = vunpack.c.l.b16 %v3019
        %v3072 = vunpack.c.h.b16 %v3019
        %v3073 = vunpack.c.l.b16 %v3020
        %v3074 = vunpack.c.h.b16 %v3020
        %v3075 = vunpack.c.l.b16 %v3021
        %v3076 = vunpack.c.h.b16 %v3021
        %v3077 = vunpack.c.l.b16 %v3022
        %v3078 = vunpack.c.h.b16 %v3022
        %v3079 = vunpack.c.l.b16 %v3023
        %v3080 = vunpack.c.h.b16 %v3023
        %v3081 = vunpack.c.l.b16 %v3024
        %v3082 = vunpack.c.h.b16 %v3024
        %v3083 = vunpack.c.l.b16 %v3025
        %v3084 = vunpack.c.h.b16 %v3025
        %v3085 = vunpack.c.l.b16 %v3026
        %v3086 = vunpack.c.h.b16 %v3026
        %v3087 = vpack.c.b16 %v3057, %v3055
        %v3088 = vpack.c.b16 %v3058, %v3056
        %v3089 = vpack.c.b16 %v3061, %v3059
        %v3090 = vpack.c.b16 %v3062, %v3060
        %v3091 = vpack.c.b16 %v3065, %v3063
        %v3092 = vpack.c.b16 %v3066, %v3064
        %v3093 = vpack.c.b16 %v3069, %v3067
        %v3094 = vpack.c.b16 %v3070, %v3068
        %v3095 = vpack.c.b16 %v3073, %v3071
        %v3096 = vpack.c.b16 %v3074, %v3072
        %v3097 = vpack.c.b16 %v3077, %v3075
        %v3098 = vpack.c.b16 %v3078, %v3076
        %v3099 = vpack.c.b16 %v3081, %v3079
        %v3100 = vpack.c.b16 %v3082, %v3080
        %v3101 = vpack.c.b16 %v3085, %v3083
        %v3102 = vpack.c.b16 %v3086, %v3084
        %3119 = vmatprep.subr.bf16.mxu0 %v3102
        %3120 = vmatpush1.bf16.msra.mxu0 %v3101
        %3121 = vmatprep.subr.bf16.mxu0 %v3100
        %3122 = vmatpush1.bf16.msra.mxu0 %v3099
        %3123 = vmatprep.subr.bf16.mxu0 %v3098
        %3124 = vmatpush1.bf16.msra.mxu0 %v3097
        %3125 = vmatprep.subr.bf16.mxu0 %v3096
        %3126 = vmatpush1.bf16.msra.mxu0 %v3095
        %3127 = vmatprep.subr.bf16.mxu0 %v3094
        %3128 = vmatpush1.bf16.msra.mxu0 %v3093
        %3129 = vmatprep.subr.bf16.mxu0 %v3092
        %3130 = vmatpush1.bf16.msra.mxu0 %v3091
        %3131 = vmatprep.subr.bf16.mxu0 %v3090
        %3132 = vmatpush1.bf16.msra.mxu0 %v3089
        %3133 = vmatprep.subr.bf16.mxu0 %v3088
        %3134 = vmatpush1.bf16.msra.mxu0 %v3087
        %3135 = vmatprep.subr.bf16.mxu0 0
        %3136 = vmatpush2.bf16.msra.mxu0 0
        %3137 = vmatprep.subr.bf16.mxu0 0
        %3138 = vmatpush2.bf16.msra.mxu0 0
        %3139 = vmatprep.subr.bf16.mxu0 0
        %3140 = vmatpush2.bf16.msra.mxu0 0
        %3141 = vmatprep.subr.bf16.mxu0 0
        %3142 = vmatpush2.bf16.msra.mxu0 0
        %3143 = vmatprep.subr.bf16.mxu0 0
        %3144 = vmatpush2.bf16.msra.mxu0 0
        %3145 = vmatprep.subr.bf16.mxu0 0
        %3146 = vmatpush2.bf16.msra.mxu0 0
        %3147 = vmatprep.subr.bf16.mxu0 0
        %3148 = vmatpush2.bf16.msra.mxu0 0
        %3149 = vmatprep.subr.bf16.mxu0 0
        %3150 = vmatpush2.bf16.msra.mxu0 0
        %3151 = vmatprep.mubr.bf16.mxu0 0
        %3152 = vmatmul.mubr.bf16.gmra.mxu0 %v3003
        %v3153 = vpop.f32.mrf.mxu0
        %v3154 = vadd.f32 %v3032, %v3153
        %v3155 = vpop.f32.mrf.mxu0
        %v3156 = vadd.f32 %v3036, %v3155
        %v3157 = vpop.f32.mrf.mxu0
        %v3158 = vadd.f32 %v3032, %v3157
        %v3159 = vpop.f32.mrf.mxu0
        %v3160 = vadd.f32 %v3036, %v3159
        %3161 = vmatprep.mubr.bf16.mxu0 0
        %3162 = vmatmul.mubr.bf16.gmra.mxu0 %v3004
        %v3163 = vpop.f32.mrf.mxu0
        %v3164 = vadd.f32 %v3032, %v3163
        %v3165 = vpop.f32.mrf.mxu0
        %v3166 = vadd.f32 %v3036, %v3165
        %v3167 = vpop.f32.mrf.mxu0
        %v3168 = vadd.f32 %v3032, %v3167
        %v3169 = vpop.f32.mrf.mxu0
        %v3170 = vadd.f32 %v3036, %v3169
        %3171 = vmatprep.mubr.bf16.mxu0 0
        %3172 = vmatmul.mubr.bf16.gmra.mxu0 %v3005
        %v3173 = vpop.f32.mrf.mxu0
        %v3174 = vadd.f32 %v3032, %v3173
        %v3175 = vpop.f32.mrf.mxu0
        %v3176 = vadd.f32 %v3036, %v3175
        %v3177 = vpop.f32.mrf.mxu0
        %v3178 = vadd.f32 %v3032, %v3177
        %v3179 = vpop.f32.mrf.mxu0
        %v3180 = vadd.f32 %v3036, %v3179
        %3181 = vmatprep.mubr.bf16.mxu0 0
        %3182 = vmatmul.mubr.bf16.gmra.mxu0 %v3006
        %v3183 = vpop.f32.mrf.mxu0
        %v3184 = vadd.f32 %v3032, %v3183
        %v3185 = vpop.f32.mrf.mxu0
        %v3186 = vadd.f32 %v3036, %v3185
        %v3187 = vpop.f32.mrf.mxu0
        %v3188 = vadd.f32 %v3032, %v3187
        %v3189 = vpop.f32.mrf.mxu0
        %v3190 = vadd.f32 %v3036, %v3189
        %3191 = vmatprep.mubr.bf16.mxu0 0
        %3192 = vmatmul.mubr.bf16.gmra.mxu0 %v3007
        %v3193 = vpop.f32.mrf.mxu0
        %v3194 = vadd.f32 %v3032, %v3193
        %v3195 = vpop.f32.mrf.mxu0
        %v3196 = vadd.f32 %v3036, %v3195
        %v3197 = vpop.f32.mrf.mxu0
        %v3198 = vadd.f32 %v3032, %v3197
        %v3199 = vpop.f32.mrf.mxu0
        %v3200 = vadd.f32 %v3036, %v3199
        %3201 = vmatprep.mubr.bf16.mxu0 0
        %3202 = vmatmul.mubr.bf16.gmra.mxu0 %v3008
        %v3203 = vpop.f32.mrf.mxu0
        %v3204 = vadd.f32 %v3032, %v3203
        %v3205 = vpop.f32.mrf.mxu0
        %v3206 = vadd.f32 %v3036, %v3205
        %v3207 = vpop.f32.mrf.mxu0
        %v3208 = vadd.f32 %v3032, %v3207
        %v3209 = vpop.f32.mrf.mxu0
        %v3210 = vadd.f32 %v3036, %v3209
        %3211 = vmatprep.mubr.bf16.mxu0 0
        %3212 = vmatmul.mubr.bf16.gmra.mxu0 %v3009
        %v3213 = vpop.f32.mrf.mxu0
        %v3214 = vadd.f32 %v3032, %v3213
        %v3215 = vpop.f32.mrf.mxu0
        %v3216 = vadd.f32 %v3036, %v3215
        %v3217 = vpop.f32.mrf.mxu0
        %v3218 = vadd.f32 %v3032, %v3217
        %v3219 = vpop.f32.mrf.mxu0
        %v3220 = vadd.f32 %v3036, %v3219
        %3221 = vmatprep.mubr.bf16.mxu0 0
        %3222 = vmatmul.mubr.bf16.gmra.mxu0 %v3010
        %v3223 = vpop.f32.mrf.mxu0
        %v3224 = vadd.f32 %v3032, %v3223
        %v3225 = vpop.f32.mrf.mxu0
        %v3226 = vadd.f32 %v3036, %v3225
        %v3227 = vpop.f32.mrf.mxu0
        %v3228 = vadd.f32 %v3032, %v3227
        %v3229 = vpop.f32.mrf.mxu0
        %v3230 = vadd.f32 %v3036, %v3229
        %3231 = vdwg.mxu0
        %v3232 = vmax.f32 %v3154, 0.0
        %v3233 = vmax.f32 %v3156, 0.0
        %v3234 = vmax.f32 %v3158, 0.0
        %v3235 = vmax.f32 %v3160, 0.0
        %v3236 = vmax.f32 %v3164, 0.0
        %v3237 = vmax.f32 %v3166, 0.0
        %v3238 = vmax.f32 %v3168, 0.0
        %v3239 = vmax.f32 %v3170, 0.0
        %v3240 = vmax.f32 %v3174, 0.0
        %v3241 = vmax.f32 %v3176, 0.0
        %v3242 = vmax.f32 %v3178, 0.0
        %v3243 = vmax.f32 %v3180, 0.0
        %v3244 = vmax.f32 %v3184, 0.0
        %v3245 = vmax.f32 %v3186, 0.0
        %v3246 = vmax.f32 %v3188, 0.0
        %v3247 = vmax.f32 %v3190, 0.0
        %v3248 = vmax.f32 %v3194, 0.0
        %v3249 = vmax.f32 %v3196, 0.0
        %v3250 = vmax.f32 %v3198, 0.0
        %v3251 = vmax.f32 %v3200, 0.0
        %v3252 = vmax.f32 %v3204, 0.0
        %v3253 = vmax.f32 %v3206, 0.0
        %v3254 = vmax.f32 %v3208, 0.0
        %v3255 = vmax.f32 %v3210, 0.0
        %v3256 = vmax.f32 %v3214, 0.0
        %v3257 = vmax.f32 %v3216, 0.0
        %v3258 = vmax.f32 %v3218, 0.0
        %v3259 = vmax.f32 %v3220, 0.0
        %v3260 = vmax.f32 %v3224, 0.0
        %v3261 = vmax.f32 %v3226, 0.0
        %v3262 = vmax.f32 %v3228, 0.0
        %v3263 = vmax.f32 %v3230, 0.0
        %v3264 = vpack.c.bf16 %v3234, %v3232
        %v3265 = vpack.c.bf16 %v3235, %v3233
        %v3266 = vpack.c.bf16 %v3238, %v3236
        %v3267 = vpack.c.bf16 %v3239, %v3237
        %v3268 = vpack.c.bf16 %v3242, %v3240
        %v3269 = vpack.c.bf16 %v3243, %v3241
        %v3270 = vpack.c.bf16 %v3246, %v3244
        %v3271 = vpack.c.bf16 %v3247, %v3245
        %v3272 = vpack.c.bf16 %v3250, %v3248
        %v3273 = vpack.c.bf16 %v3251, %v3249
        %v3274 = vpack.c.bf16 %v3254, %v3252
        %v3275 = vpack.c.bf16 %v3255, %v3253
        %v3276 = vpack.c.bf16 %v3258, %v3256
        %v3277 = vpack.c.bf16 %v3259, %v3257
        %v3278 = vpack.c.bf16 %v3262, %v3260
        %v3279 = vpack.c.bf16 %v3263, %v3261
        %v3280 = vld [vmem:[%s835] sm:$0xf]
        %v3281 = vld [vmem:[%s835 + $0x4] sm:$0xf]
        %v3282 = vld [vmem:[%s835 + $0x8] sm:$0xf]
        %v3283 = vld [vmem:[%s835 + $0xc] sm:$0xf]
        %v3284 = vld [vmem:[%s835 + $0x10] sm:$0xf]
        %v3285 = vld [vmem:[%s835 + $0x14] sm:$0xf]
        %v3286 = vld [vmem:[%s835 + $0x18] sm:$0xf]
        %v3287 = vld [vmem:[%s835 + $0x1c] sm:$0xf]
        %v3288 = vld [vmem:[%s835 + $0x20] sm:$0xf]
        %v3289 = vld [vmem:[%s835 + $0x24] sm:$0xf]
        %v3290 = vld [vmem:[%s835 + $0x28] sm:$0xf]
        %v3291 = vld [vmem:[%s835 + $0x2c] sm:$0xf]
        %v3292 = vld [vmem:[%s835 + $0x30] sm:$0xf]
        %v3293 = vld [vmem:[%s835 + $0x34] sm:$0xf]
        %v3294 = vld [vmem:[%s835 + $0x38] sm:$0xf]
        %v3295 = vld [vmem:[%s835 + $0x3c] sm:$0xf]
        %v3296 = vld [vmem:[%s835 + $0x40] sm:$0xf]
        %v3297 = vld [vmem:[%s835 + $0x44] sm:$0xf]
        %v3298 = vld [vmem:[%s835 + $0x48] sm:$0xf]
        %v3299 = vld [vmem:[%s835 + $0x4c] sm:$0xf]
        %v3300 = vld [vmem:[%s835 + $0x50] sm:$0xf]
        %v3301 = vld [vmem:[%s835 + $0x54] sm:$0xf]
        %v3302 = vld [vmem:[%s835 + $0x58] sm:$0xf]
        %v3303 = vld [vmem:[%s835 + $0x5c] sm:$0xf]
        %v3304 = vld [vmem:[%s835 + $0x60] sm:$0xf]
        %v3305 = vld [vmem:[%s835 + $0x64] sm:$0xf]
        %v3306 = vld [vmem:[%s835 + $0x68] sm:$0xf]
        %v3307 = vld [vmem:[%s835 + $0x6c] sm:$0xf]
        %v3308 = vld [vmem:[%s835 + $0x70] sm:$0xf]
        %v3309 = vld [vmem:[%s835 + $0x74] sm:$0xf]
        %v3310 = vld [vmem:[%s835 + $0x78] sm:$0xf]
        %v3311 = vld [vmem:[%s835 + $0x7c] sm:$0xf]
        %v3312 = vld [vmem:[%s963] sm:$0x1]
        %v3314 = vlaneseq
        %v3315 = vshrl.u32 %v3314, 7
        %v3316 = vsub.s32 0, %v3315
        %v3317 = vrot.slane %v3312, %v3316
        %v3351 = vunpack.c.l.b16 %v3280
        %v3352 = vunpack.c.l.b16 %v3281
        %v3353 = vunpack.c.l.b16 %v3282
        %v3354 = vunpack.c.l.b16 %v3283
        %v3355 = vunpack.c.l.b16 %v3284
        %v3356 = vunpack.c.l.b16 %v3285
        %v3357 = vunpack.c.l.b16 %v3286
        %v3358 = vunpack.c.l.b16 %v3287
        %v3359 = vunpack.c.l.b16 %v3288
        %v3360 = vunpack.c.l.b16 %v3289
        %v3361 = vunpack.c.l.b16 %v3290
        %v3362 = vunpack.c.l.b16 %v3291
        %v3363 = vunpack.c.l.b16 %v3292
        %v3364 = vunpack.c.l.b16 %v3293
        %v3365 = vunpack.c.l.b16 %v3294
        %v3366 = vunpack.c.l.b16 %v3295
        %v3367 = vunpack.c.l.b16 %v3296
        %v3368 = vunpack.c.l.b16 %v3297
        %v3369 = vunpack.c.l.b16 %v3298
        %v3370 = vunpack.c.l.b16 %v3299
        %v3371 = vunpack.c.l.b16 %v3300
        %v3372 = vunpack.c.l.b16 %v3301
        %v3373 = vunpack.c.l.b16 %v3302
        %v3374 = vunpack.c.l.b16 %v3303
        %v3375 = vunpack.c.l.b16 %v3304
        %v3376 = vunpack.c.l.b16 %v3305
        %v3377 = vunpack.c.l.b16 %v3306
        %v3378 = vunpack.c.l.b16 %v3307
        %v3379 = vunpack.c.l.b16 %v3308
        %v3380 = vunpack.c.l.b16 %v3309
        %v3381 = vunpack.c.l.b16 %v3310
        %v3382 = vunpack.c.l.b16 %v3311
        %v3383 = vpack.c.b16 %v3352, %v3351
        %v3384 = vpack.c.b16 %v3354, %v3353
        %v3385 = vpack.c.b16 %v3356, %v3355
        %v3386 = vpack.c.b16 %v3358, %v3357
        %v3387 = vpack.c.b16 %v3360, %v3359
        %v3388 = vpack.c.b16 %v3362, %v3361
        %v3389 = vpack.c.b16 %v3364, %v3363
        %v3390 = vpack.c.b16 %v3366, %v3365
        %v3391 = vpack.c.b16 %v3368, %v3367
        %v3392 = vpack.c.b16 %v3370, %v3369
        %v3393 = vpack.c.b16 %v3372, %v3371
        %v3394 = vpack.c.b16 %v3374, %v3373
        %v3395 = vpack.c.b16 %v3376, %v3375
        %v3396 = vpack.c.b16 %v3378, %v3377
        %v3397 = vpack.c.b16 %v3380, %v3379
        %v3398 = vpack.c.b16 %v3382, %v3381
        %3415 = vmatprep.subr.bf16.mxu0 0
        %3416 = vmatpush1.bf16.msra.mxu0 %v3390
        %3417 = vmatprep.subr.bf16.mxu0 0
        %3418 = vmatpush1.bf16.msra.mxu0 %v3389
        %3419 = vmatprep.subr.bf16.mxu0 0
        %3420 = vmatpush1.bf16.msra.mxu0 %v3388
        %3421 = vmatprep.subr.bf16.mxu0 0
        %3422 = vmatpush1.bf16.msra.mxu0 %v3387
        %3423 = vmatprep.subr.bf16.mxu0 0
        %3424 = vmatpush1.bf16.msra.mxu0 %v3386
        %3425 = vmatprep.subr.bf16.mxu0 0
        %3426 = vmatpush1.bf16.msra.mxu0 %v3385
        %3427 = vmatprep.subr.bf16.mxu0 0
        %3428 = vmatpush1.bf16.msra.mxu0 %v3384
        %3429 = vmatprep.subr.bf16.mxu0 0
        %3430 = vmatpush1.bf16.msra.mxu0 %v3383
        %3431 = vmatprep.subr.bf16.mxu0 0
        %3432 = vmatpush2.bf16.msra.mxu0 %v3398
        %3433 = vmatprep.subr.bf16.mxu0 0
        %3434 = vmatpush2.bf16.msra.mxu0 %v3397
        %3435 = vmatprep.subr.bf16.mxu0 0
        %3436 = vmatpush2.bf16.msra.mxu0 %v3396
        %3437 = vmatprep.subr.bf16.mxu0 0
        %3438 = vmatpush2.bf16.msra.mxu0 %v3395
        %3439 = vmatprep.subr.bf16.mxu0 0
        %3440 = vmatpush2.bf16.msra.mxu0 %v3394
        %3441 = vmatprep.subr.bf16.mxu0 0
        %3442 = vmatpush2.bf16.msra.mxu0 %v3393
        %3443 = vmatprep.subr.bf16.mxu0 0
        %3444 = vmatpush2.bf16.msra.mxu0 %v3392
        %3445 = vmatprep.subr.bf16.mxu0 0
        %3446 = vmatpush2.bf16.msra.mxu0 %v3391
        %3447 = vmatprep.mubr.bf16.mxu0 %v3265
        %3448 = vmatmul.mubr.bf16.gmra.mxu0 %v3264
        %v3449 = vpop.f32.mrf.mxu0
        %v3450 = vadd.f32 %v3317, %v3449
        %v3451 = vpop.f32.mrf.mxu0
        %v3452 = vpop.f32.mrf.mxu0
        %v3453 = vadd.f32 %v3317, %v3452
        %v3454 = vpop.f32.mrf.mxu0
        %3455 = vmatprep.mubr.bf16.mxu0 %v3267
        %3456 = vmatmul.mubr.bf16.gmra.mxu0 %v3266
        %v3457 = vpop.f32.mrf.mxu0
        %v3458 = vadd.f32 %v3317, %v3457
        %v3459 = vpop.f32.mrf.mxu0
        %v3460 = vpop.f32.mrf.mxu0
        %v3461 = vadd.f32 %v3317, %v3460
        %v3462 = vpop.f32.mrf.mxu0
        %3463 = vmatprep.mubr.bf16.mxu0 %v3269
        %3464 = vmatmul.mubr.bf16.gmra.mxu0 %v3268
        %v3465 = vpop.f32.mrf.mxu0
        %v3466 = vadd.f32 %v3317, %v3465
        %v3467 = vpop.f32.mrf.mxu0
        %v3468 = vpop.f32.mrf.mxu0
        %v3469 = vadd.f32 %v3317, %v3468
        %v3470 = vpop.f32.mrf.mxu0
        %3471 = vmatprep.mubr.bf16.mxu0 %v3271
        %3472 = vmatmul.mubr.bf16.gmra.mxu0 %v3270
        %v3473 = vpop.f32.mrf.mxu0
        %v3474 = vadd.f32 %v3317, %v3473
        %v3475 = vpop.f32.mrf.mxu0
        %v3476 = vpop.f32.mrf.mxu0
        %v3477 = vadd.f32 %v3317, %v3476
        %v3478 = vpop.f32.mrf.mxu0
        %3479 = vmatprep.mubr.bf16.mxu0 %v3273
        %3480 = vmatmul.mubr.bf16.gmra.mxu0 %v3272
        %v3481 = vpop.f32.mrf.mxu0
        %v3482 = vadd.f32 %v3317, %v3481
        %v3483 = vpop.f32.mrf.mxu0
        %v3484 = vpop.f32.mrf.mxu0
        %v3485 = vadd.f32 %v3317, %v3484
        %v3486 = vpop.f32.mrf.mxu0
        %3487 = vmatprep.mubr.bf16.mxu0 %v3275
        %3488 = vmatmul.mubr.bf16.gmra.mxu0 %v3274
        %v3489 = vpop.f32.mrf.mxu0
        %v3490 = vadd.f32 %v3317, %v3489
        %v3491 = vpop.f32.mrf.mxu0
        %v3492 = vpop.f32.mrf.mxu0
        %v3493 = vadd.f32 %v3317, %v3492
        %v3494 = vpop.f32.mrf.mxu0
        %3495 = vmatprep.mubr.bf16.mxu0 %v3277
        %3496 = vmatmul.mubr.bf16.gmra.mxu0 %v3276
        %v3497 = vpop.f32.mrf.mxu0
        %v3498 = vadd.f32 %v3317, %v3497
        %v3499 = vpop.f32.mrf.mxu0
        %v3500 = vpop.f32.mrf.mxu0
        %v3501 = vadd.f32 %v3317, %v3500
        %v3502 = vpop.f32.mrf.mxu0
        %3503 = vmatprep.mubr.bf16.mxu0 %v3279
        %3504 = vmatmul.mubr.bf16.gmra.mxu0 %v3278
        %v3505 = vpop.f32.mrf.mxu0
        %v3506 = vadd.f32 %v3317, %v3505
        %v3507 = vpop.f32.mrf.mxu0
        %v3508 = vpop.f32.mrf.mxu0
        %v3509 = vadd.f32 %v3317, %v3508
        %v3510 = vpop.f32.mrf.mxu0
        %3511 = vdwg.mxu0
        %v3512 = vadd.f32 %v3450, %v2987
        %v3513 = vadd.f32 %v3453, %v2988
        %v3514 = vadd.f32 %v3458, %v2989
        %v3515 = vadd.f32 %v3461, %v2990
        %v3516 = vadd.f32 %v3466, %v2991
        %v3517 = vadd.f32 %v3469, %v2992
        %v3518 = vadd.f32 %v3474, %v2993
        %v3519 = vadd.f32 %v3477, %v2994
        %v3520 = vadd.f32 %v3482, %v2995
        %v3521 = vadd.f32 %v3485, %v2996
        %v3522 = vadd.f32 %v3490, %v2997
        %v3523 = vadd.f32 %v3493, %v2998
        %v3524 = vadd.f32 %v3498, %v2999
        %v3525 = vadd.f32 %v3501, %v3000
        %v3526 = vadd.f32 %v3506, %v3001
        %v3527 = vadd.f32 %v3509, %v3002
        %3528 = vadd.xlane.f32.xlu0 %v3512
        %v3529 = vpop.xlane.xlu0 %3528
        %3530 = vadd.xlane.f32.xlu0 %v3513
        %v3531 = vpop.xlane.xlu0 %3530
        %3532 = vadd.xlane.f32.xlu0 %v3514
        %v3533 = vpop.xlane.xlu0 %3532
        %3534 = vadd.xlane.f32.xlu0 %v3515
        %v3535 = vpop.xlane.xlu0 %3534
        %3536 = vadd.xlane.f32.xlu0 %v3516
        %v3537 = vpop.xlane.xlu0 %3536
        %3538 = vadd.xlane.f32.xlu0 %v3517
        %v3539 = vpop.xlane.xlu0 %3538
        %3540 = vadd.xlane.f32.xlu0 %v3518
        %v3541 = vpop.xlane.xlu0 %3540
        %3542 = vadd.xlane.f32.xlu0 %v3519
        %v3543 = vpop.xlane.xlu0 %3542
        %3544 = vadd.xlane.f32.xlu0 %v3520
        %v3545 = vpop.xlane.xlu0 %3544
        %3546 = vadd.xlane.f32.xlu0 %v3521
        %v3547 = vpop.xlane.xlu0 %3546
        %3548 = vadd.xlane.f32.xlu0 %v3522
        %v3549 = vpop.xlane.xlu0 %3548
        %3550 = vadd.xlane.f32.xlu0 %v3523
        %v3551 = vpop.xlane.xlu0 %3550
        %3552 = vadd.xlane.f32.xlu0 %v3524
        %v3553 = vpop.xlane.xlu0 %3552
        %3554 = vadd.xlane.f32.xlu0 %v3525
        %v3555 = vpop.xlane.xlu0 %3554
        %3556 = vadd.xlane.f32.xlu0 %v3526
        %v3557 = vpop.xlane.xlu0 %3556
        %3558 = vadd.xlane.f32.xlu0 %v3527
        %v3559 = vpop.xlane.xlu0 %3558
        %v3560 = vmul.f32 %v3529, %v2812
        %v3561 = vmul.f32 %v3531, %v2812
        %v3562 = vmul.f32 %v3533, %v2812
        %v3563 = vmul.f32 %v3535, %v2812
        %v3564 = vmul.f32 %v3537, %v2812
        %v3565 = vmul.f32 %v3539, %v2812
        %v3566 = vmul.f32 %v3541, %v2812
        %v3567 = vmul.f32 %v3543, %v2812
        %v3568 = vmul.f32 %v3545, %v2812
        %v3569 = vmul.f32 %v3547, %v2812
        %v3570 = vmul.f32 %v3549, %v2812
        %v3571 = vmul.f32 %v3551, %v2812
        %v3572 = vmul.f32 %v3553, %v2812
        %v3573 = vmul.f32 %v3555, %v2812
        %v3574 = vmul.f32 %v3557, %v2812
        %v3575 = vmul.f32 %v3559, %v2812
        %v3576 = vsub.f32 %v3512, %v3560
        %v3577 = vsub.f32 %v3513, %v3561
        %v3578 = vsub.f32 %v3514, %v3562
        %v3579 = vsub.f32 %v3515, %v3563
        %v3580 = vsub.f32 %v3516, %v3564
        %v3581 = vsub.f32 %v3517, %v3565
        %v3582 = vsub.f32 %v3518, %v3566
        %v3583 = vsub.f32 %v3519, %v3567
        %v3584 = vsub.f32 %v3520, %v3568
        %v3585 = vsub.f32 %v3521, %v3569
        %v3586 = vsub.f32 %v3522, %v3570
        %v3587 = vsub.f32 %v3523, %v3571
        %v3588 = vsub.f32 %v3524, %v3572
        %v3589 = vsub.f32 %v3525, %v3573
        %v3590 = vsub.f32 %v3526, %v3574
        %v3591 = vsub.f32 %v3527, %v3575
        %v3592 = vmul.f32 %v3576, %v3576
        %v3593 = vmul.f32 %v3577, %v3577
        %v3594 = vmul.f32 %v3578, %v3578
        %v3595 = vmul.f32 %v3579, %v3579
        %v3596 = vmul.f32 %v3580, %v3580
        %v3597 = vmul.f32 %v3581, %v3581
        %v3598 = vmul.f32 %v3582, %v3582
        %v3599 = vmul.f32 %v3583, %v3583
        %v3600 = vmul.f32 %v3584, %v3584
        %v3601 = vmul.f32 %v3585, %v3585
        %v3602 = vmul.f32 %v3586, %v3586
        %v3603 = vmul.f32 %v3587, %v3587
        %v3604 = vmul.f32 %v3588, %v3588
        %v3605 = vmul.f32 %v3589, %v3589
        %v3606 = vmul.f32 %v3590, %v3590
        %v3607 = vmul.f32 %v3591, %v3591
        %3608 = vadd.xlane.f32.xlu0 %v3592
        %v3609 = vpop.xlane.xlu0 %3608
        %3610 = vadd.xlane.f32.xlu0 %v3593
        %v3611 = vpop.xlane.xlu0 %3610
        %3612 = vadd.xlane.f32.xlu0 %v3594
        %v3613 = vpop.xlane.xlu0 %3612
        %3614 = vadd.xlane.f32.xlu0 %v3595
        %v3615 = vpop.xlane.xlu0 %3614
        %3616 = vadd.xlane.f32.xlu0 %v3596
        %v3617 = vpop.xlane.xlu0 %3616
        %3618 = vadd.xlane.f32.xlu0 %v3597
        %v3619 = vpop.xlane.xlu0 %3618
        %3620 = vadd.xlane.f32.xlu0 %v3598
        %v3621 = vpop.xlane.xlu0 %3620
        %3622 = vadd.xlane.f32.xlu0 %v3599
        %v3623 = vpop.xlane.xlu0 %3622
        %3624 = vadd.xlane.f32.xlu0 %v3600
        %v3625 = vpop.xlane.xlu0 %3624
        %3626 = vadd.xlane.f32.xlu0 %v3601
        %v3627 = vpop.xlane.xlu0 %3626
        %3628 = vadd.xlane.f32.xlu0 %v3602
        %v3629 = vpop.xlane.xlu0 %3628
        %3630 = vadd.xlane.f32.xlu0 %v3603
        %v3631 = vpop.xlane.xlu0 %3630
        %3632 = vadd.xlane.f32.xlu0 %v3604
        %v3633 = vpop.xlane.xlu0 %3632
        %3634 = vadd.xlane.f32.xlu0 %v3605
        %v3635 = vpop.xlane.xlu0 %3634
        %3636 = vadd.xlane.f32.xlu0 %v3606
        %v3637 = vpop.xlane.xlu0 %3636
        %3638 = vadd.xlane.f32.xlu0 %v3607
        %v3639 = vpop.xlane.xlu0 %3638
        %v3640 = vmul.f32 %v3609, %v2812
        %v3641 = vmul.f32 %v3611, %v2812
        %v3642 = vmul.f32 %v3613, %v2812
        %v3643 = vmul.f32 %v3615, %v2812
        %v3644 = vmul.f32 %v3617, %v2812
        %v3645 = vmul.f32 %v3619, %v2812
        %v3646 = vmul.f32 %v3621, %v2812
        %v3647 = vmul.f32 %v3623, %v2812
        %v3648 = vmul.f32 %v3625, %v2812
        %v3649 = vmul.f32 %v3627, %v2812
        %v3650 = vmul.f32 %v3629, %v2812
        %v3651 = vmul.f32 %v3631, %v2812
        %v3652 = vmul.f32 %v3633, %v2812
        %v3653 = vmul.f32 %v3635, %v2812
        %v3654 = vmul.f32 %v3637, %v2812
        %v3655 = vmul.f32 %v3639, %v2812
        %v3656 = vadd.f32 %v3640, 1e-05
        %v3657 = vadd.f32 %v3641, 1e-05
        %v3658 = vadd.f32 %v3642, 1e-05
        %v3659 = vadd.f32 %v3643, 1e-05
        %v3660 = vadd.f32 %v3644, 1e-05
        %v3661 = vadd.f32 %v3645, 1e-05
        %v3662 = vadd.f32 %v3646, 1e-05
        %v3663 = vadd.f32 %v3647, 1e-05
        %v3664 = vadd.f32 %v3648, 1e-05
        %v3665 = vadd.f32 %v3649, 1e-05
        %v3666 = vadd.f32 %v3650, 1e-05
        %v3667 = vadd.f32 %v3651, 1e-05
        %v3668 = vadd.f32 %v3652, 1e-05
        %v3669 = vadd.f32 %v3653, 1e-05
        %v3670 = vadd.f32 %v3654, 1e-05
        %v3671 = vadd.f32 %v3655, 1e-05
        %v3672 = vrsqrt.pop %v3656
        %v3673 = vrsqrt.pop %v3657
        %v3674 = vrsqrt.pop %v3658
        %v3675 = vrsqrt.pop %v3659
        %v3676 = vrsqrt.pop %v3660
        %v3677 = vrsqrt.pop %v3661
        %v3678 = vrsqrt.pop %v3662
        %v3679 = vrsqrt.pop %v3663
        %v3680 = vrsqrt.pop %v3664
        %v3681 = vrsqrt.pop %v3665
        %v3682 = vrsqrt.pop %v3666
        %v3683 = vrsqrt.pop %v3667
        %v3684 = vrsqrt.pop %v3668
        %v3685 = vrsqrt.pop %v3669
        %v3686 = vrsqrt.pop %v3670
        %v3687 = vrsqrt.pop %v3671
        %v3688 = vmul.f32 %v3576, %v3672
        %v3689 = vmul.f32 %v3577, %v3673
        %v3690 = vmul.f32 %v3578, %v3674
        %v3691 = vmul.f32 %v3579, %v3675
        %v3692 = vmul.f32 %v3580, %v3676
        %v3693 = vmul.f32 %v3581, %v3677
        %v3694 = vmul.f32 %v3582, %v3678
        %v3695 = vmul.f32 %v3583, %v3679
        %v3696 = vmul.f32 %v3584, %v3680
        %v3697 = vmul.f32 %v3585, %v3681
        %v3698 = vmul.f32 %v3586, %v3682
        %v3699 = vmul.f32 %v3587, %v3683
        %v3700 = vmul.f32 %v3588, %v3684
        %v3701 = vmul.f32 %v3589, %v3685
        %v3702 = vmul.f32 %v3590, %v3686
        %v3703 = vmul.f32 %v3591, %v3687
        %v3704 = vld [vmem:[%s966] sm:$0x1]
        %v3706 = vlaneseq
        %v3707 = vshrl.u32 %v3706, 7
        %v3708 = vsub.s32 0, %v3707
        %v3709 = vrot.slane %v3704, %v3708
        %v3711 = vmul.f32 %v3688, %v3709
        %v3712 = vmul.f32 %v3689, %v3709
        %v3713 = vmul.f32 %v3690, %v3709
        %v3714 = vmul.f32 %v3691, %v3709
        %v3715 = vmul.f32 %v3692, %v3709
        %v3716 = vmul.f32 %v3693, %v3709
        %v3717 = vmul.f32 %v3694, %v3709
        %v3718 = vmul.f32 %v3695, %v3709
        %v3719 = vmul.f32 %v3696, %v3709
        %v3720 = vmul.f32 %v3697, %v3709
        %v3721 = vmul.f32 %v3698, %v3709
        %v3722 = vmul.f32 %v3699, %v3709
        %v3723 = vmul.f32 %v3700, %v3709
        %v3724 = vmul.f32 %v3701, %v3709
        %v3725 = vmul.f32 %v3702, %v3709
        %v3726 = vmul.f32 %v3703, %v3709
        %v3727 = vld [vmem:[%s969] sm:$0x1]
        %v3729 = vlaneseq
        %v3730 = vshrl.u32 %v3729, 7
        %v3731 = vsub.s32 0, %v3730
        %v3732 = vrot.slane %v3727, %v3731
        %v3734 = vadd.f32 %v3711, %v3732
        %v3735 = vadd.f32 %v3712, %v3732
        %v3736 = vadd.f32 %v3713, %v3732
        %v3737 = vadd.f32 %v3714, %v3732
        %v3738 = vadd.f32 %v3715, %v3732
        %v3739 = vadd.f32 %v3716, %v3732
        %v3740 = vadd.f32 %v3717, %v3732
        %v3741 = vadd.f32 %v3718, %v3732
        %v3742 = vadd.f32 %v3719, %v3732
        %v3743 = vadd.f32 %v3720, %v3732
        %v3744 = vadd.f32 %v3721, %v3732
        %v3745 = vadd.f32 %v3722, %v3732
        %v3746 = vadd.f32 %v3723, %v3732
        %v3747 = vadd.f32 %v3724, %v3732
        %v3748 = vadd.f32 %v3725, %v3732
        %v3749 = vadd.f32 %v3726, %v3732
        %v3750 = vpack.c.bf16 %v3735, %v3734
        %v3751 = vpack.c.bf16 %v3737, %v3736
        %v3752 = vpack.c.bf16 %v3739, %v3738
        %v3753 = vpack.c.bf16 %v3741, %v3740
        %v3754 = vpack.c.bf16 %v3743, %v3742
        %v3755 = vpack.c.bf16 %v3745, %v3744
        %v3756 = vpack.c.bf16 %v3747, %v3746
        %v3757 = vpack.c.bf16 %v3749, %v3748
        %v3766 = vunpack.c.l.b16 %v3750
        %v3767 = vunpack.c.h.b16 %v3750
        %v3768 = vunpack.c.l.b16 %v3751
        %v3769 = vunpack.c.h.b16 %v3751
        %v3770 = vunpack.c.l.b16 %v3752
        %v3771 = vunpack.c.h.b16 %v3752
        %v3772 = vunpack.c.l.b16 %v3753
        %v3773 = vunpack.c.h.b16 %v3753
        %v3774 = vunpack.c.l.b16 %v3754
        %v3775 = vunpack.c.h.b16 %v3754
        %v3776 = vunpack.c.l.b16 %v3755
        %v3777 = vunpack.c.h.b16 %v3755
        %v3778 = vunpack.c.l.b16 %v3756
        %v3779 = vunpack.c.h.b16 %v3756
        %v3780 = vunpack.c.l.b16 %v3757
        %v3781 = vunpack.c.h.b16 %v3757
        %v3782 = vpack.c.b16 %v3766, %v3766
        %v3783 = vpack.c.b16 %v3767, %v3767
        %v3784 = vpack.c.b16 %v3768, %v3768
        %v3785 = vpack.c.b16 %v3769, %v3769
        %v3786 = vpack.c.b16 %v3770, %v3770
        %v3787 = vpack.c.b16 %v3771, %v3771
        %v3788 = vpack.c.b16 %v3772, %v3772
        %v3789 = vpack.c.b16 %v3773, %v3773
        %v3790 = vpack.c.b16 %v3774, %v3774
        %v3791 = vpack.c.b16 %v3775, %v3775
        %v3792 = vpack.c.b16 %v3776, %v3776
        %v3793 = vpack.c.b16 %v3777, %v3777
        %v3794 = vpack.c.b16 %v3778, %v3778
        %v3795 = vpack.c.b16 %v3779, %v3779
        %v3796 = vpack.c.b16 %v3780, %v3780
        %v3797 = vpack.c.b16 %v3781, %v3781
        %3814 = vst [vmem:[%s945] sm:$0xf] %v3782
        %3815 = vst [vmem:[%s945 + $0x4] sm:$0xf] %v3783
        %3816 = vst [vmem:[%s945 + $0x8] sm:$0xf] %v3784
        %3817 = vst [vmem:[%s945 + $0xc] sm:$0xf] %v3785
        %3818 = vst [vmem:[%s945 + $0x10] sm:$0xf] %v3786
        %3819 = vst [vmem:[%s945 + $0x14] sm:$0xf] %v3787
        %3820 = vst [vmem:[%s945 + $0x18] sm:$0xf] %v3788
        %3821 = vst [vmem:[%s945 + $0x1c] sm:$0xf] %v3789
        %3822 = vst [vmem:[%s945 + $0x20] sm:$0xf] %v3790
        %3823 = vst [vmem:[%s945 + $0x24] sm:$0xf] %v3791
        %3824 = vst [vmem:[%s945 + $0x28] sm:$0xf] %v3792
        %3825 = vst [vmem:[%s945 + $0x2c] sm:$0xf] %v3793
        %3826 = vst [vmem:[%s945 + $0x30] sm:$0xf] %v3794
        %3827 = vst [vmem:[%s945 + $0x34] sm:$0xf] %v3795
        %3828 = vst [vmem:[%s945 + $0x38] sm:$0xf] %v3796
        %3829 = vst [vmem:[%s945 + $0x3c] sm:$0xf] %v3797
        %s3830 = sand.u32 %s489, 1
        %s3831 = scalar_lea.sflag [#allocation4], %s3830
        %s3832 = sand.u32 %s489, 1
        %s3833 = smul.addr %s3832, 64
        %s3834 = scalar_lea.vmem [#allocation17], %s3833
        // Predicated region
        $region121: #{tpu_custom_call.1} parent=83 // pred_check
          %p3835 = pneg %p499
        $region122: #{tpu_custom_call.1} parent=83 // pred_check_branch
          %3837 = sbr.rel (%p3835) target = $region124
        $region123: #{tpu_custom_call.1} parent=83 // pred_region
          %s3839 = ssub.s32 1024, 1024
          %3840 = vsyncadd %s3831, %s3839
          %s3841 = smul.addr %s50, 16
          %s3842 = smul.addr %s49, 32
          %s3843 = sadd.s32 %s3841, %s3842
          %s3844 = smul.addr %s3843, 64
          %s3845 = scalar_lea.hbm %s16, %s3844
          %s3846 = sshll.u32 %s3834, 4
          %s3847 = int_to_ptr.vmem [resolvable:$true] %s3846
          %3852 = dma.vmem_to_hbm [thread:$0]  %s3847, 1024, %s3845, %s3831, 64, 64, 4
        $region124: #{tpu_custom_call.1} parent=83 // pred_fallthru
          _
      $region84: #{tpu_custom_call.1} parent=5 // pred_fallthru
        _
      %p3853 = scmp.le.s32.totalorder 2, %s40
      // Predicated region
      $region125: #{tpu_custom_call.1} parent=5 // pred_check
        %p3854 = pneg %p3853
      $region126: #{tpu_custom_call.1} parent=5 // pred_check_branch
        %3856 = sbr.rel (%p3854) target = $region128
      $region127: #{tpu_custom_call.1} parent=5 // pred_region
        %s3857 = ssub.s32 %s40, 2
        // Predicated region
        $region129: #{tpu_custom_call.1} parent=127 // pred_check
          %p3858 = pneg %p505
        $region130: #{tpu_custom_call.1} parent=127 // pred_check_branch
          %3860 = sbr.rel (%p3858) target = $region132
        $region131: #{tpu_custom_call.1} parent=127 // pred_region
          %s3861 = sand.u32 %s490, 1
          %s3862 = scalar_lea.sflag [#allocation4], %s3861
          %s3863 = sand.u32 %s490, 1
          %s3864 = smul.addr %s3863, 64
          %s3865 = scalar_lea.vmem [#allocation17], %s3864
          %3866 = dma.done %s3862, 1024
        $region132: #{tpu_custom_call.1} parent=127 // pred_fallthru
          _
      $region128: #{tpu_custom_call.1} parent=5 // pred_fallthru
        _
    $region6: #{tpu_custom_call.1} parent=1 // loop_footer
      %s44 = sadd.s32 1, %s40
    $region7: #{tpu_custom_call.1} parent=1 // loop_footer_branch
      %39 = sbr.rel target = $region3
    $region8: #{tpu_custom_call.1} parent=1 // loop_exit
      _
    %3867 = vsyncpa [#allocation3], 1
    %s3868 = scalar_lea.sflag [#allocation3], 1
    %3869 = vsyncpa %s3868, 1
    %3870 = vsyncpa [#allocation6], 1
    %s3871 = scalar_lea.sflag [#allocation6], 1
    %3872 = vsyncpa %s3871, 1
    %3873 = vsyncpa [#allocation9], 1
    %s3874 = scalar_lea.sflag [#allocation9], 1
    %3875 = vsyncpa %s3874, 1
    %3876 = vsyncpa [#allocation12], 1
    %s3877 = scalar_lea.sflag [#allocation12], 1
    %3878 = vsyncpa %s3877, 1
    %3879 = vsyncpa [#allocation15], 1
    %s3880 = scalar_lea.sflag [#allocation15], 1
    %3881 = vsyncpa %s3880, 1
    %3882 = vsyncpa [#allocation4], 1
    %s3883 = scalar_lea.sflag [#allocation4], 1
    %3884 = vsyncpa %s3883, 1

</llo_original>
